<compile_context>
chip_gen: v7x
topology: tpu7x:2x2x1
jax: 0.10.0
libtpu: 0.0.40
codegen_flags: <defaults>
</compile_context>

<pallas_src>
import jax
import jax.numpy as jnp
from jax import lax
from jax.experimental import pallas as pl
from jax.experimental.pallas import tpu as pltpu

# ---- problem sizes (scaled-down, structure identical to the module) --------
B, CIN, H, W = 2, 1, 16, 16
KH = KW = 3
NTAP = KH * KW + 1                       # 9 conv taps + 1 bias ("ones") tap
COUT = 32
HO, WO = H - KH + 1, W - KW + 1          # 14, 14
P = HO * WO                              # 196
FC1_IN = COUT * P                        # 6272  (analogue of 32*126*126)
FC1_OUT = 128
FC2_OUT = 1


# ---- Pallas kernels ---------------------------------------------------------
def _conv_relu_kernel(p_ref, w_ref, o_ref):
    # p_ref: (B*P, NTAP) f32   w_ref: (NTAP, COUT) f32 (last row = conv bias)
    # o_ref: (B*P, COUT) bf16
    acc = jnp.dot(p_ref[...], w_ref[...], preferred_element_type=jnp.float32)
    o_ref[...] = jnp.maximum(acc, 0.0).astype(o_ref.dtype)


def _fc_kernel(x_ref, w1_ref, b1_ref, w2_ref, b2_ref, o_ref):
    # x_ref: (B, FC1_IN) bf16   w1_ref: (FC1_IN, 128) bf16
    # b1_ref: (1, 128) f32      w2_ref: (128, 1) f32   b2_ref: (1, 1) f32
    # o_ref: (B, 1) f32
    h = jnp.dot(x_ref[...], w1_ref[...], preferred_element_type=jnp.float32)
    h = jnp.maximum(h + b1_ref[...], 0.0)
    z = jnp.dot(h, w2_ref[...], preferred_element_type=jnp.float32) + b2_ref[...]
    # numerically stable sigmoid (no exp overflow -> inf intermediates)
    o_ref[...] = 0.5 * (jnp.tanh(0.5 * z) + 1.0)


def _full_spec(shape):
    n = len(shape)
    return pl.BlockSpec(shape, lambda i: (0,) * n)


_conv_relu = pl.pallas_call(
    _conv_relu_kernel,
    out_shape=jax.ShapeDtypeStruct((B * P, COUT), jnp.bfloat16),
    grid=(1,),
    in_specs=[_full_spec((B * P, NTAP)),
              _full_spec((NTAP, COUT))],
    out_specs=_full_spec((B * P, COUT)),
    compiler_params=pltpu.CompilerParams(dimension_semantics=("arbitrary",)),
)

_fc_forward = pl.pallas_call(
    _fc_kernel,
    out_shape=jax.ShapeDtypeStruct((B, FC2_OUT), jnp.float32),
    grid=(1,),
    in_specs=[_full_spec((B, FC1_IN)),
              _full_spec((FC1_IN, FC1_OUT)),
              _full_spec((1, FC1_OUT)),
              _full_spec((FC1_OUT, FC2_OUT)),
              _full_spec((1, FC2_OUT))],
    out_specs=_full_spec((B, FC2_OUT)),
    compiler_params=pltpu.CompilerParams(dimension_semantics=("arbitrary",)),
)


# ---- one-time parameter preparation (NOT in the per-call path) --------------
def prepare_params(params):
    """Permute / cast PyTorch-layout weights once, outside the jitted forward."""
    conv_w, conv_b, fc1_w, fc1_b, fc2_w, fc2_b = params

    # conv weights (32,1,3,3) -> (9, 32), tap order dy*KW + dx; append bias row
    wc = conv_w.reshape(COUT, KH * KW).T                          # (9, 32)
    wc_aug = jnp.concatenate([wc, conv_b.reshape(1, COUT)], 0)    # (10, 32) f32

    # fc1 weight: PyTorch CHW-flatten rows (c*P + p) -> kernel order (p*COUT + c),
    # cast to bf16 once (halves the dominant HBM stream).
    w1 = (fc1_w.reshape(FC1_OUT, COUT, P)
                .transpose(2, 1, 0)
                .reshape(FC1_IN, FC1_OUT)
                .astype(jnp.bfloat16))                            # (6272, 128) bf16
    b1 = fc1_b.reshape(1, FC1_OUT).astype(jnp.float32)
    w2 = fc2_w.T.astype(jnp.float32)                              # (128, 1)
    b2 = fc2_b.reshape(1, FC2_OUT).astype(jnp.float32)
    return (wc_aug, w1, b1, w2, b2)


# ---- forward (glue is only: tiny im2col + a contiguous 50 KB reshape) -------
def temp_speech_classifier(x, prepped):
    wc_aug, w1, b1, w2, b2 = prepped

    # im2col: (B, 1, H, W) -> (B*P, 10); tap order dy*KW + dx, last tap = 1.0
    x2 = x[:, 0]  # (B, H, W)
    cols = [x2[:, dy:dy + HO, dx:dx + WO] for dy in range(KH) for dx in range(KW)]
    cols.append(jnp.ones((B, HO, WO), jnp.float32))               # bias tap
    patches = jnp.stack(cols, axis=-1).reshape(B * P, NTAP)

    conv_out = _conv_relu(patches, wc_aug)                        # (B*P, 32) bf16

    # contiguous reshape -> kernel flatten order p*COUT + c (matches prepped w1)
    flat = conv_out.reshape(B, FC1_IN)

    return _fc_forward(flat, w1, b1, w2, b2)                      # (B, 1) f32


# ---- pure-JAX reference (matches PyTorch forward exactly, f32) --------------
def reference(x, params):
    conv_w, conv_b, fc1_w, fc1_b, fc2_w, fc2_b = params
    y = lax.conv_general_dilated(x, conv_w, (1, 1), "VALID",
                                 dimension_numbers=("NCHW", "OIHW", "NCHW"))
    y = jax.nn.relu(y + conv_b.reshape(1, COUT, 1, 1))
    flat = y.reshape(B, -1)                         # CHW flatten (PyTorch .view)
    h = jax.nn.relu(flat @ fc1_w.T + fc1_b)
    z = h @ fc2_w.T + fc2_b
    return jax.nn.sigmoid(z)


if __name__ == "__main__":
    # deterministic example input
    x = jax.random.normal(jax.random.PRNGKey(0), (B, CIN, H, W), jnp.float32)

    # deterministic synthetic parameters (shapes from the module __init__)
    pk = jax.random.PRNGKey(42)
    k1, k2, k3, k4, k5, k6 = jax.random.split(pk, 6)
    conv_w = 0.1 * jax.random.normal(k1, (COUT, CIN, KH, KW), jnp.float32)
    conv_b = 0.1 * jax.random.normal(k2, (COUT,), jnp.float32)
    fc1_w = 0.02 * jax.random.normal(k3, (FC1_OUT, FC1_IN), jnp.float32)
    fc1_b = 0.02 * jax.random.normal(k4, (FC1_OUT,), jnp.float32)
    fc2_w = 0.1 * jax.random.normal(k5, (FC2_OUT, FC1_OUT), jnp.float32)
    fc2_b = 0.1 * jax.random.normal(k6, (FC2_OUT,), jnp.float32)
    params = (conv_w, conv_b, fc1_w, fc1_b, fc2_w, fc2_b)

    # one-time weight preparation (permutation + bf16 cast happens here, once)
    prepped = prepare_params(params)
    prepped = jax.block_until_ready(prepped)

    fwd = jax.jit(temp_speech_classifier)
    out = jax.block_until_ready(fwd(x, prepped))
    assert out.shape == (B, FC2_OUT), out.shape

    ref = jax.block_until_ready(reference(x, params))
    assert jnp.allclose(out, ref, atol=1e-2), (out, ref)

    print("KERNEL_OK")
</pallas_src>

<mosaic_0001>
module attributes {stable_mosaic.version = 11 : i64} {
  func.func @_conv_relu_kernel(%arg0: i32, %arg1: memref<392x10xf32, #tpu.memory_space<vmem>>, %arg2: memref<10x32xf32, #tpu.memory_space<vmem>>, %arg3: memref<392x32xbf16, #tpu.memory_space<vmem>>) attributes {dimension_semantics = [#tpu.dimension_semantics<arbitrary>], iteration_bounds = array<i64: 1>, scalar_prefetch = 0 : i64, scratch_operands = 0 : i64, tpu.core_type = #tpu.core_type<tc>, window_params = [{pipeline_mode = #tpu.pipeline_mode<synchronous>, transform_indices = @transform_0, window_bounds = array<i64: 392, 10>}, {pipeline_mode = #tpu.pipeline_mode<synchronous>, transform_indices = @transform_1, window_bounds = array<i64: 10, 32>}, {pipeline_mode = #tpu.pipeline_mode<synchronous>, transform_indices = @transform_2, window_bounds = array<i64: 392, 32>}]} {
    %c0 = arith.constant 0 : index
    %c0_0 = arith.constant 0 : index
    %0 = vector.load %arg1[%c0, %c0_0] : memref<392x10xf32, #tpu.memory_space<vmem>>, vector<392x10xf32>
    %c0_1 = arith.constant 0 : index
    %c0_2 = arith.constant 0 : index
    %1 = vector.load %arg2[%c0_1, %c0_2] : memref<10x32xf32, #tpu.memory_space<vmem>>, vector<10x32xf32>
    %cst = arith.constant dense<0.000000e+00> : vector<392x32xf32>
    %2 = tpu.matmul %0, %1, %cst {dimension_numbers = #tpu.dot_dimension_numbers<[1], [0], [0], [1], [0, 0, 1, 1], [], []>} : vector<392x10xf32>, vector<10x32xf32>, vector<392x32xf32> -> vector<392x32xf32>
    %cst_3 = arith.constant 0.000000e+00 : f32
    %3 = vector.broadcast %cst_3 : f32 to vector<392x32xf32>
    %4 = arith.maximumf %2, %3 : vector<392x32xf32>
    %5 = arith.truncf %4 : vector<392x32xf32> to vector<392x32xbf16>
    %c0_4 = arith.constant 0 : index
    %c0_5 = arith.constant 0 : index
    %6 = vector.load %arg3[%c0_4, %c0_5] : memref<392x32xbf16, #tpu.memory_space<vmem>>, vector<392x32xbf16>
    tpu.vector_store %arg3[%c0_4, %c0_5], %5 {strides = array<i32>} : memref<392x32xbf16, #tpu.memory_space<vmem>>, vector<392x32xbf16>,
    return
  }
  func.func @transform_0(%arg0: i32) -> (i32, i32) {
    %c0_i32 = arith.constant 0 : i32
    %c0_i32_0 = arith.constant 0 : i32
    %c0_i32_1 = arith.constant 0 : i32
    return %c0_i32, %c0_i32_0 : i32, i32
  }
  func.func @transform_1(%arg0: i32) -> (i32, i32) {
    %c0_i32 = arith.constant 0 : i32
    %c0_i32_0 = arith.constant 0 : i32
    %c0_i32_1 = arith.constant 0 : i32
    return %c0_i32, %c0_i32_0 : i32, i32
  }
  func.func @transform_2(%arg0: i32) -> (i32, i32) {
    %c0_i32 = arith.constant 0 : i32
    %c0_i32_0 = arith.constant 0 : i32
    %c0_i32_1 = arith.constant 0 : i32
    return %c0_i32, %c0_i32_0 : i32, i32
  }
}

module attributes {stable_mosaic.version = 11 : i64} {
  func.func @_fc_kernel(%arg0: i32, %arg1: memref<2x6272xbf16, #tpu.memory_space<vmem>>, %arg2: memref<6272x128xbf16, #tpu.memory_space<vmem>>, %arg3: memref<1x128xf32, #tpu.memory_space<vmem>>, %arg4: memref<128x1xf32, #tpu.memory_space<vmem>>, %arg5: memref<1x1xf32, #tpu.memory_space<vmem>>, %arg6: memref<2x1xf32, #tpu.memory_space<vmem>>) attributes {dimension_semantics = [#tpu.dimension_semantics<arbitrary>], iteration_bounds = array<i64: 1>, scalar_prefetch = 0 : i64, scratch_operands = 0 : i64, tpu.core_type = #tpu.core_type<tc>, window_params = [{pipeline_mode = #tpu.pipeline_mode<synchronous>, transform_indices = @transform_0, window_bounds = array<i64: 2, 6272>}, {pipeline_mode = #tpu.pipeline_mode<synchronous>, transform_indices = @transform_1, window_bounds = array<i64: 6272, 128>}, {pipeline_mode = #tpu.pipeline_mode<synchronous>, transform_indices = @transform_2, window_bounds = array<i64: 1, 128>}, {pipeline_mode = #tpu.pipeline_mode<synchronous>, transform_indices = @transform_3, window_bounds = array<i64: 128, 1>}, {pipeline_mode = #tpu.pipeline_mode<synchronous>, transform_indices = @transform_4, window_bounds = array<i64: 1, 1>}, {pipeline_mode = #tpu.pipeline_mode<synchronous>, transform_indices = @transform_5, window_bounds = array<i64: 2, 1>}]} {
    %c0 = arith.constant 0 : index
    %c0_0 = arith.constant 0 : index
    %0 = vector.load %arg1[%c0, %c0_0] : memref<2x6272xbf16, #tpu.memory_space<vmem>>, vector<2x6272xbf16>
    %c0_1 = arith.constant 0 : index
    %c0_2 = arith.constant 0 : index
    %1 = vector.load %arg2[%c0_1, %c0_2] : memref<6272x128xbf16, #tpu.memory_space<vmem>>, vector<6272x128xbf16>
    %cst = arith.constant dense<0.000000e+00> : vector<2x128xf32>
    %2 = tpu.matmul %0, %1, %cst {dimension_numbers = #tpu.dot_dimension_numbers<[1], [0], [0], [1], [0, 0, 1, 1], [], []>} : vector<2x6272xbf16>, vector<6272x128xbf16>, vector<2x128xf32> -> vector<2x128xf32>
    %c0_3 = arith.constant 0 : index
    %c0_4 = arith.constant 0 : index
    %3 = vector.load %arg3[%c0_3, %c0_4] : memref<1x128xf32, #tpu.memory_space<vmem>>, vector<1x128xf32>
    %4 = vector.broadcast %3 : vector<1x128xf32> to vector<2x128xf32>
    %5 = arith.addf %2, %4 : vector<2x128xf32>
    %cst_5 = arith.constant 0.000000e+00 : f32
    %6 = vector.broadcast %cst_5 : f32 to vector<2x128xf32>
    %7 = arith.maximumf %5, %6 : vector<2x128xf32>
    %c0_6 = arith.constant 0 : index
    %c0_7 = arith.constant 0 : index
    %8 = vector.load %arg4[%c0_6, %c0_7] : memref<128x1xf32, #tpu.memory_space<vmem>>, vector<128x1xf32>
    %cst_8 = arith.constant dense<0.000000e+00> : vector<2x1xf32>
    %9 = tpu.matmul %7, %8, %cst_8 {dimension_numbers = #tpu.dot_dimension_numbers<[1], [0], [0], [1], [0, 0, 1, 1], [], []>} : vector<2x128xf32>, vector<128x1xf32>, vector<2x1xf32> -> vector<2x1xf32>
    %c0_9 = arith.constant 0 : index
    %c0_10 = arith.constant 0 : index
    %10 = vector.load %arg5[%c0_9, %c0_10] : memref<1x1xf32, #tpu.memory_space<vmem>>, vector<1x1xf32>
    %11 = vector.broadcast %10 : vector<1x1xf32> to vector<2x1xf32>
    %12 = arith.addf %9, %11 : vector<2x1xf32>
    %cst_11 = arith.constant 5.000000e-01 : f32
    %13 = vector.broadcast %cst_11 : f32 to vector<2x1xf32>
    %14 = arith.mulf %13, %12 : vector<2x1xf32>
    %15 = math.tanh %14 : vector<2x1xf32>
    %cst_12 = arith.constant 1.000000e+00 : f32
    %16 = vector.broadcast %cst_12 : f32 to vector<2x1xf32>
    %17 = arith.addf %15, %16 : vector<2x1xf32>
    %cst_13 = arith.constant 5.000000e-01 : f32
    %18 = vector.broadcast %cst_13 : f32 to vector<2x1xf32>
    %19 = arith.mulf %18, %17 : vector<2x1xf32>
    %c0_14 = arith.constant 0 : index
    %c0_15 = arith.constant 0 : index
    %20 = vector.load %arg6[%c0_14, %c0_15] : memref<2x1xf32, #tpu.memory_space<vmem>>, vector<2x1xf32>
    tpu.vector_store %arg6[%c0_14, %c0_15], %19 {strides = array<i32>} : memref<2x1xf32, #tpu.memory_space<vmem>>, vector<2x1xf32>,
    return
  }
  func.func @transform_0(%arg0: i32) -> (i32, i32) {
    %c0_i32 = arith.constant 0 : i32
    %c0_i32_0 = arith.constant 0 : i32
    %c0_i32_1 = arith.constant 0 : i32
    return %c0_i32, %c0_i32_0 : i32, i32
  }
  func.func @transform_1(%arg0: i32) -> (i32, i32) {
    %c0_i32 = arith.constant 0 : i32
    %c0_i32_0 = arith.constant 0 : i32
    %c0_i32_1 = arith.constant 0 : i32
    return %c0_i32, %c0_i32_0 : i32, i32
  }
  func.func @transform_2(%arg0: i32) -> (i32, i32) {
    %c0_i32 = arith.constant 0 : i32
    %c0_i32_0 = arith.constant 0 : i32
    %c0_i32_1 = arith.constant 0 : i32
    return %c0_i32, %c0_i32_0 : i32, i32
  }
  func.func @transform_3(%arg0: i32) -> (i32, i32) {
    %c0_i32 = arith.constant 0 : i32
    %c0_i32_0 = arith.constant 0 : i32
    %c0_i32_1 = arith.constant 0 : i32
    return %c0_i32, %c0_i32_0 : i32, i32
  }
  func.func @transform_4(%arg0: i32) -> (i32, i32) {
    %c0_i32 = arith.constant 0 : i32
    %c0_i32_0 = arith.constant 0 : i32
    %c0_i32_1 = arith.constant 0 : i32
    return %c0_i32, %c0_i32_0 : i32, i32
  }
  func.func @transform_5(%arg0: i32) -> (i32, i32) {
    %c0_i32 = arith.constant 0 : i32
    %c0_i32_0 = arith.constant 0 : i32
    %c0_i32_1 = arith.constant 0 : i32
    return %c0_i32, %c0_i32_0 : i32, i32
  }
}

</mosaic_0001>

<llo_original>
// kernel: temp_speech_classifier.2
$region0: #{temp_speech_classifier.2}
  #allocation0 [shape = 'u32[]', space=smem, size = 0x4, offset = 0x4, fixed_abs, tag = 'smem constant byte address 0x4 - core index']
  #allocation1 [shape = 'u32[144,128]{1,0:T(1,128)}', space=vmem, size = 0x12000, scoped, tag = 'internal scratch']
  %s0 = inlined_call_operand.vmem [shape: f32[392,10], index: 0, kind: input, shape index: {}]
  %s1 = inlined_call_operand.hbm [shape: f32[10,32], index: 1, kind: input, shape index: {}]
  %s2 = inlined_call_operand.vmem [shape: bf16[392,32], index: 2, kind: output, shape index: {}]
  %s3 = sld [smem:[#allocation0]]
  $region22: #{temp_speech_classifier.2} parent=0
    _
  %s5 = ssub.s32 1, %s3
  %s6 = scalar_select 0, %s5, %s3
  $region1: #{temp_speech_classifier.2} parent=0
    #allocation2 [shape = 'u8[8192]{0}', space=vmem, size = 0x2000, scoped, tag = 'input window, operand 1, single buffered']
    #allocation3 [shape = 's32[1]{0}', space=sflag, size = 0x4, scoped, tag = 'scoped memory for temp_speech_classifier.2']
    %7 = vsyncpa [#allocation3], 0
    // Predicated region
    $region2: #{temp_speech_classifier.2} parent=1 // pred_check
      _
    $region3: #{temp_speech_classifier.2} parent=1 // pred_check_branch
      %9 = sbr.rel (0) target = $region5
    $region4: #{temp_speech_classifier.2} parent=1 // pred_region
      _
    $region5: #{temp_speech_classifier.2} parent=1 // pred_fallthru
      _
    // Predicated region
    $region6: #{temp_speech_classifier.2} parent=1 // pred_check
      _
    $region7: #{temp_speech_classifier.2} parent=1 // pred_check_branch
      %11 = sbr.rel (0) target = $region9
    $region8: #{temp_speech_classifier.2} parent=1 // pred_region
      %s13 = ssub.s32 256, 256
      %14 = vsyncadd [#allocation3], %s13
      %s15 = sshll.u32 [#allocation2], 4
      %s16 = int_to_ptr.vmem [resolvable:$true] %s15
      %21 = dma.hbm_to_vmem [thread:$0]  %s1, 256, %s16, [#allocation3], 128, 128, 8
    $region9: #{temp_speech_classifier.2} parent=1 // pred_fallthru
      _
    // Predicated region
    $region10: #{temp_speech_classifier.2} parent=1 // pred_check
      _
    $region11: #{temp_speech_classifier.2} parent=1 // pred_check_branch
      %23 = sbr.rel (0) target = $region13
    $region12: #{temp_speech_classifier.2} parent=1 // pred_region
      %24 = dma.done [#allocation3], 256
    $region13: #{temp_speech_classifier.2} parent=1 // pred_fallthru
      _
    %v25 = vld [vmem:[%s0] sm:$0xff]
    %v26 = vld [vmem:[%s0 + $0x8] sm:$0xff]
    %v27 = vld [vmem:[%s0 + $0x10] sm:$0xff]
    %v28 = vld [vmem:[%s0 + $0x18] sm:$0xff]
    %v29 = vld [vmem:[%s0 + $0x20] sm:$0xff]
    %v30 = vld [vmem:[%s0 + $0x28] sm:$0xff]
    %v31 = vld [vmem:[%s0 + $0x30] sm:$0xff]
    %v32 = vld [vmem:[%s0 + $0x38] sm:$0xff]
    %v33 = vld [vmem:[%s0 + $0x40] sm:$0xff]
    %v34 = vld [vmem:[%s0 + $0x48] sm:$0xff]
    %v35 = vld [vmem:[%s0 + $0x50] sm:$0xff]
    %v36 = vld [vmem:[%s0 + $0x58] sm:$0xff]
    %v37 = vld [vmem:[%s0 + $0x60] sm:$0xff]
    %v38 = vld [vmem:[%s0 + $0x68] sm:$0xff]
    %v39 = vld [vmem:[%s0 + $0x70] sm:$0xff]
    %v40 = vld [vmem:[%s0 + $0x78] sm:$0xff]
    %v41 = vld [vmem:[%s0 + $0x80] sm:$0xff]
    %v42 = vld [vmem:[%s0 + $0x88] sm:$0xff]
    %v43 = vld [vmem:[%s0 + $0x90] sm:$0xff]
    %v44 = vld [vmem:[%s0 + $0x98] sm:$0xff]
    %v45 = vld [vmem:[%s0 + $0xa0] sm:$0xff]
    %v46 = vld [vmem:[%s0 + $0xa8] sm:$0xff]
    %v47 = vld [vmem:[%s0 + $0xb0] sm:$0xff]
    %v48 = vld [vmem:[%s0 + $0xb8] sm:$0xff]
    %v49 = vld [vmem:[%s0 + $0xc0] sm:$0xff]
    %v50 = vld [vmem:[%s0 + $0xc8] sm:$0xff]
    %v51 = vld [vmem:[%s0 + $0xd0] sm:$0xff]
    %v52 = vld [vmem:[%s0 + $0xd8] sm:$0xff]
    %v53 = vld [vmem:[%s0 + $0xe0] sm:$0xff]
    %v54 = vld [vmem:[%s0 + $0xe8] sm:$0xff]
    %v55 = vld [vmem:[%s0 + $0xf0] sm:$0xff]
    %v56 = vld [vmem:[%s0 + $0xf8] sm:$0xff]
    %v57 = vld [vmem:[%s0 + $0x100] sm:$0xff]
    %v58 = vld [vmem:[%s0 + $0x108] sm:$0xff]
    %v59 = vld [vmem:[%s0 + $0x110] sm:$0xff]
    %v60 = vld [vmem:[%s0 + $0x118] sm:$0xff]
    %v61 = vld [vmem:[%s0 + $0x120] sm:$0xff]
    %v62 = vld [vmem:[%s0 + $0x128] sm:$0xff]
    %v63 = vld [vmem:[%s0 + $0x130] sm:$0xff]
    %v64 = vld [vmem:[%s0 + $0x138] sm:$0xff]
    %v65 = vld [vmem:[%s0 + $0x140] sm:$0xff]
    %v66 = vld [vmem:[%s0 + $0x148] sm:$0xff]
    %v67 = vld [vmem:[%s0 + $0x150] sm:$0xff]
    %v68 = vld [vmem:[%s0 + $0x158] sm:$0xff]
    %v69 = vld [vmem:[%s0 + $0x160] sm:$0xff]
    %v70 = vld [vmem:[%s0 + $0x168] sm:$0xff]
    %v71 = vld [vmem:[%s0 + $0x170] sm:$0xff]
    %v72 = vld [vmem:[%s0 + $0x178] sm:$0xff]
    %v73 = vld [vmem:[%s0 + $0x180] sm:$0xff]
    %v74 = vld [vmem:[#allocation2] sm:$0xff]
    %v75 = vld [vmem:[#allocation2 + $0x8] sm:$0x3]
    %vm76 = vcmask 80896
    %v78 = vsel %vm76, %v25, 0
    %v81 = vsel %vm76, %v26, 0
    %v84 = vsel %vm76, %v27, 0
    %v87 = vsel %vm76, %v28, 0
    %v90 = vsel %vm76, %v29, 0
    %v93 = vsel %vm76, %v30, 0
    %v96 = vsel %vm76, %v31, 0
    %v99 = vsel %vm76, %v32, 0
    %v102 = vsel %vm76, %v33, 0
    %v105 = vsel %vm76, %v34, 0
    %v108 = vsel %vm76, %v35, 0
    %v111 = vsel %vm76, %v36, 0
    %v114 = vsel %vm76, %v37, 0
    %v117 = vsel %vm76, %v38, 0
    %v120 = vsel %vm76, %v39, 0
    %v123 = vsel %vm76, %v40, 0
    %v126 = vsel %vm76, %v41, 0
    %v129 = vsel %vm76, %v42, 0
    %v132 = vsel %vm76, %v43, 0
    %v135 = vsel %vm76, %v44, 0
    %v138 = vsel %vm76, %v45, 0
    %v141 = vsel %vm76, %v46, 0
    %v144 = vsel %vm76, %v47, 0
    %v147 = vsel %vm76, %v48, 0
    %v150 = vsel %vm76, %v49, 0
    %v153 = vsel %vm76, %v50, 0
    %v156 = vsel %vm76, %v51, 0
    %v159 = vsel %vm76, %v52, 0
    %v162 = vsel %vm76, %v53, 0
    %v165 = vsel %vm76, %v54, 0
    %v168 = vsel %vm76, %v55, 0
    %v171 = vsel %vm76, %v56, 0
    %v174 = vsel %vm76, %v57, 0
    %v177 = vsel %vm76, %v58, 0
    %v180 = vsel %vm76, %v59, 0
    %v183 = vsel %vm76, %v60, 0
    %v186 = vsel %vm76, %v61, 0
    %v189 = vsel %vm76, %v62, 0
    %v192 = vsel %vm76, %v63, 0
    %v195 = vsel %vm76, %v64, 0
    %v198 = vsel %vm76, %v65, 0
    %v201 = vsel %vm76, %v66, 0
    %v204 = vsel %vm76, %v67, 0
    %v207 = vsel %vm76, %v68, 0
    %v210 = vsel %vm76, %v69, 0
    %v213 = vsel %vm76, %v70, 0
    %v216 = vsel %vm76, %v71, 0
    %v219 = vsel %vm76, %v72, 0
    %v222 = vsel %vm76, %v73, 0
    %vm224 = vcmask 1041408
    %v226 = vsel %vm224, %v75, 0
    %228 = vmatprep.subr.mxu0 0.0
    %229 = vmatpush1.msra.mxu0 %v74
    %230 = vmatprep.subr.mxu0 0.0
    %231 = vmatpush1.msra.mxu0 %v226
    %232 = vmatprep.subr.mxu0 0.0
    %233 = vmatpush1.msra.mxu0 0.0
    %234 = vmatprep.subr.mxu0 0.0
    %235 = vmatpush1.msra.mxu0 0.0
    %236 = vmatprep.subr.mxu0 0.0
    %237 = vmatpush1.msra.mxu0 0.0
    %238 = vmatprep.subr.mxu0 0.0
    %239 = vmatpush1.msra.mxu0 0.0
    %240 = vmatprep.subr.mxu0 0.0
    %241 = vmatpush1.msra.mxu0 0.0
    %242 = vmatprep.subr.mxu0 0.0
    %243 = vmatpush1.msra.mxu0 0.0
    %244 = vmatprep.subr.mxu0 0.0
    %245 = vmatpush1.msra.mxu0 0.0
    %246 = vmatprep.subr.mxu0 0.0
    %247 = vmatpush1.msra.mxu0 0.0
    %248 = vmatprep.subr.mxu0 0.0
    %249 = vmatpush1.msra.mxu0 0.0
    %250 = vmatprep.subr.mxu0 0.0
    %251 = vmatpush1.msra.mxu0 0.0
    %252 = vmatprep.subr.mxu0 0.0
    %253 = vmatpush1.msra.mxu0 0.0
    %254 = vmatprep.subr.mxu0 0.0
    %255 = vmatpush1.msra.mxu0 0.0
    %256 = vmatprep.subr.mxu0 0.0
    %257 = vmatpush1.msra.mxu0 0.0
    %258 = vmatprep.subr.mxu0 0.0
    %259 = vmatpush1.msra.mxu0 0.0
    %260 = vmatprep.subr.mxu0 0.0
    %261 = vmatpush1.msra.mxu0 0.0
    %262 = vmatprep.subr.mxu0 0.0
    %263 = vmatpush1.msra.mxu0 0.0
    %264 = vmatprep.subr.mxu0 0.0
    %265 = vmatpush1.msra.mxu0 0.0
    %266 = vmatprep.subr.mxu0 0.0
    %267 = vmatpush1.msra.mxu0 0.0
    %268 = vmatprep.subr.mxu0 0.0
    %269 = vmatpush1.msra.mxu0 0.0
    %270 = vmatprep.subr.mxu0 0.0
    %271 = vmatpush1.msra.mxu0 0.0
    %272 = vmatprep.subr.mxu0 0.0
    %273 = vmatpush1.msra.mxu0 0.0
    %274 = vmatprep.subr.mxu0 0.0
    %275 = vmatpush1.msra.mxu0 0.0
    %276 = vmatprep.subr.mxu0 0.0
    %277 = vmatpush1.msra.mxu0 0.0
    %278 = vmatprep.subr.mxu0 0.0
    %279 = vmatpush1.msra.mxu0 0.0
    %280 = vmatprep.subr.mxu0 0.0
    %281 = vmatpush1.msra.mxu0 0.0
    %282 = vmatprep.subr.mxu0 0.0
    %283 = vmatpush1.msra.mxu0 0.0
    %284 = vmatprep.subr.mxu0 0.0
    %285 = vmatpush1.msra.mxu0 0.0
    %286 = vmatprep.subr.mxu0 0.0
    %287 = vmatpush1.msra.mxu0 0.0
    %288 = vmatprep.subr.mxu0 0.0
    %289 = vmatpush1.msra.mxu0 0.0
    %290 = vmatprep.subr.mxu0 0.0
    %291 = vmatpush1.msra.mxu0 0.0
    %292 = vmatprep.mubr.f32.mxu0 0.0
    %293 = vmatmul.mubr.f32.gmra.mrb[0].mxu0 %v78
    %v294 = vpop.f32.mrb[0].mxu0
    %v295 = vadd.f32 0.0, %v294
    %v296 = vpop.f32.mrb[0].mxu0
    %297 = vmatprep.mubr.f32.mxu0 0.0
    %298 = vmatmul.mubr.f32.gmra.mrb[0].mxu0 %v81
    %v299 = vpop.f32.mrb[0].mxu0
    %v300 = vadd.f32 0.0, %v299
    %v301 = vpop.f32.mrb[0].mxu0
    %302 = vmatprep.mubr.f32.mxu0 0.0
    %303 = vmatmul.mubr.f32.gmra.mrb[0].mxu0 %v84
    %v304 = vpop.f32.mrb[0].mxu0
    %v305 = vadd.f32 0.0, %v304
    %v306 = vpop.f32.mrb[0].mxu0
    %307 = vmatprep.mubr.f32.mxu0 0.0
    %308 = vmatmul.mubr.f32.gmra.mrb[0].mxu0 %v87
    %v309 = vpop.f32.mrb[0].mxu0
    %v310 = vadd.f32 0.0, %v309
    %v311 = vpop.f32.mrb[0].mxu0
    %312 = vmatprep.mubr.f32.mxu0 0.0
    %313 = vmatmul.mubr.f32.gmra.mrb[0].mxu0 %v90
    %v314 = vpop.f32.mrb[0].mxu0
    %v315 = vadd.f32 0.0, %v314
    %v316 = vpop.f32.mrb[0].mxu0
    %317 = vmatprep.mubr.f32.mxu0 0.0
    %318 = vmatmul.mubr.f32.gmra.mrb[0].mxu0 %v93
    %v319 = vpop.f32.mrb[0].mxu0
    %v320 = vadd.f32 0.0, %v319
    %v321 = vpop.f32.mrb[0].mxu0
    %322 = vmatprep.mubr.f32.mxu0 0.0
    %323 = vmatmul.mubr.f32.gmra.mrb[0].mxu0 %v96
    %v324 = vpop.f32.mrb[0].mxu0
    %v325 = vadd.f32 0.0, %v324
    %v326 = vpop.f32.mrb[0].mxu0
    %327 = vmatprep.mubr.f32.mxu0 0.0
    %328 = vmatmul.mubr.f32.gmra.mrb[0].mxu0 %v99
    %v329 = vpop.f32.mrb[0].mxu0
    %v330 = vadd.f32 0.0, %v329
    %v331 = vpop.f32.mrb[0].mxu0
    %332 = vmatprep.mubr.f32.mxu0 0.0
    %333 = vmatmul.mubr.f32.gmra.mrb[0].mxu0 %v102
    %v334 = vpop.f32.mrb[0].mxu0
    %v335 = vadd.f32 0.0, %v334
    %v336 = vpop.f32.mrb[0].mxu0
    %337 = vmatprep.mubr.f32.mxu0 0.0
    %338 = vmatmul.mubr.f32.gmra.mrb[0].mxu0 %v105
    %v339 = vpop.f32.mrb[0].mxu0
    %v340 = vadd.f32 0.0, %v339
    %v341 = vpop.f32.mrb[0].mxu0
    %342 = vmatprep.mubr.f32.mxu0 0.0
    %343 = vmatmul.mubr.f32.gmra.mrb[0].mxu0 %v108
    %v344 = vpop.f32.mrb[0].mxu0
    %v345 = vadd.f32 0.0, %v344
    %v346 = vpop.f32.mrb[0].mxu0
    %347 = vmatprep.mubr.f32.mxu0 0.0
    %348 = vmatmul.mubr.f32.gmra.mrb[0].mxu0 %v111
    %v349 = vpop.f32.mrb[0].mxu0
    %v350 = vadd.f32 0.0, %v349
    %v351 = vpop.f32.mrb[0].mxu0
    %352 = vmatprep.mubr.f32.mxu0 0.0
    %353 = vmatmul.mubr.f32.gmra.mrb[0].mxu0 %v114
    %v354 = vpop.f32.mrb[0].mxu0
    %v355 = vadd.f32 0.0, %v354
    %v356 = vpop.f32.mrb[0].mxu0
    %357 = vmatprep.mubr.f32.mxu0 0.0
    %358 = vmatmul.mubr.f32.gmra.mrb[0].mxu0 %v117
    %v359 = vpop.f32.mrb[0].mxu0
    %v360 = vadd.f32 0.0, %v359
    %v361 = vpop.f32.mrb[0].mxu0
    %362 = vmatprep.mubr.f32.mxu0 0.0
    %363 = vmatmul.mubr.f32.gmra.mrb[0].mxu0 %v120
    %v364 = vpop.f32.mrb[0].mxu0
    %v365 = vadd.f32 0.0, %v364
    %v366 = vpop.f32.mrb[0].mxu0
    %367 = vmatprep.mubr.f32.mxu0 0.0
    %368 = vmatmul.mubr.f32.gmra.mrb[0].mxu0 %v123
    %v369 = vpop.f32.mrb[0].mxu0
    %v370 = vadd.f32 0.0, %v369
    %v371 = vpop.f32.mrb[0].mxu0
    %372 = vmatprep.mubr.f32.mxu0 0.0
    %373 = vmatmul.mubr.f32.gmra.mrb[0].mxu0 %v126
    %v374 = vpop.f32.mrb[0].mxu0
    %v375 = vadd.f32 0.0, %v374
    %v376 = vpop.f32.mrb[0].mxu0
    %377 = vmatprep.mubr.f32.mxu0 0.0
    %378 = vmatmul.mubr.f32.gmra.mrb[0].mxu0 %v129
    %v379 = vpop.f32.mrb[0].mxu0
    %v380 = vadd.f32 0.0, %v379
    %v381 = vpop.f32.mrb[0].mxu0
    %382 = vmatprep.mubr.f32.mxu0 0.0
    %383 = vmatmul.mubr.f32.gmra.mrb[0].mxu0 %v132
    %v384 = vpop.f32.mrb[0].mxu0
    %v385 = vadd.f32 0.0, %v384
    %v386 = vpop.f32.mrb[0].mxu0
    %387 = vmatprep.mubr.f32.mxu0 0.0
    %388 = vmatmul.mubr.f32.gmra.mrb[0].mxu0 %v135
    %v389 = vpop.f32.mrb[0].mxu0
    %v390 = vadd.f32 0.0, %v389
    %v391 = vpop.f32.mrb[0].mxu0
    %392 = vmatprep.mubr.f32.mxu0 0.0
    %393 = vmatmul.mubr.f32.gmra.mrb[0].mxu0 %v138
    %v394 = vpop.f32.mrb[0].mxu0
    %v395 = vadd.f32 0.0, %v394
    %v396 = vpop.f32.mrb[0].mxu0
    %397 = vmatprep.mubr.f32.mxu0 0.0
    %398 = vmatmul.mubr.f32.gmra.mrb[0].mxu0 %v141
    %v399 = vpop.f32.mrb[0].mxu0
    %v400 = vadd.f32 0.0, %v399
    %v401 = vpop.f32.mrb[0].mxu0
    %402 = vmatprep.mubr.f32.mxu0 0.0
    %403 = vmatmul.mubr.f32.gmra.mrb[0].mxu0 %v144
    %v404 = vpop.f32.mrb[0].mxu0
    %v405 = vadd.f32 0.0, %v404
    %v406 = vpop.f32.mrb[0].mxu0
    %407 = vmatprep.mubr.f32.mxu0 0.0
    %408 = vmatmul.mubr.f32.gmra.mrb[0].mxu0 %v147
    %v409 = vpop.f32.mrb[0].mxu0
    %v410 = vadd.f32 0.0, %v409
    %v411 = vpop.f32.mrb[0].mxu0
    %412 = vmatprep.mubr.f32.mxu0 0.0
    %413 = vmatmul.mubr.f32.gmra.mrb[0].mxu0 %v150
    %v414 = vpop.f32.mrb[0].mxu0
    %v415 = vadd.f32 0.0, %v414
    %v416 = vpop.f32.mrb[0].mxu0
    %417 = vmatprep.mubr.f32.mxu0 0.0
    %418 = vmatmul.mubr.f32.gmra.mrb[0].mxu0 %v153
    %v419 = vpop.f32.mrb[0].mxu0
    %v420 = vadd.f32 0.0, %v419
    %v421 = vpop.f32.mrb[0].mxu0
    %422 = vmatprep.mubr.f32.mxu0 0.0
    %423 = vmatmul.mubr.f32.gmra.mrb[0].mxu0 %v156
    %v424 = vpop.f32.mrb[0].mxu0
    %v425 = vadd.f32 0.0, %v424
    %v426 = vpop.f32.mrb[0].mxu0
    %427 = vmatprep.mubr.f32.mxu0 0.0
    %428 = vmatmul.mubr.f32.gmra.mrb[0].mxu0 %v159
    %v429 = vpop.f32.mrb[0].mxu0
    %v430 = vadd.f32 0.0, %v429
    %v431 = vpop.f32.mrb[0].mxu0
    %432 = vmatprep.mubr.f32.mxu0 0.0
    %433 = vmatmul.mubr.f32.gmra.mrb[0].mxu0 %v162
    %v434 = vpop.f32.mrb[0].mxu0
    %v435 = vadd.f32 0.0, %v434
    %v436 = vpop.f32.mrb[0].mxu0
    %437 = vmatprep.mubr.f32.mxu0 0.0
    %438 = vmatmul.mubr.f32.gmra.mrb[0].mxu0 %v165
    %v439 = vpop.f32.mrb[0].mxu0
    %v440 = vadd.f32 0.0, %v439
    %v441 = vpop.f32.mrb[0].mxu0
    %442 = vmatprep.mubr.f32.mxu0 0.0
    %443 = vmatmul.mubr.f32.gmra.mrb[0].mxu0 %v168
    %v444 = vpop.f32.mrb[0].mxu0
    %v445 = vadd.f32 0.0, %v444
    %v446 = vpop.f32.mrb[0].mxu0
    %447 = vmatprep.mubr.f32.mxu0 0.0
    %448 = vmatmul.mubr.f32.gmra.mrb[0].mxu0 %v171
    %v449 = vpop.f32.mrb[0].mxu0
    %v450 = vadd.f32 0.0, %v449
    %v451 = vpop.f32.mrb[0].mxu0
    %452 = vmatprep.mubr.f32.mxu0 0.0
    %453 = vmatmul.mubr.f32.gmra.mrb[0].mxu0 %v174
    %v454 = vpop.f32.mrb[0].mxu0
    %v455 = vadd.f32 0.0, %v454
    %v456 = vpop.f32.mrb[0].mxu0
    %457 = vmatprep.mubr.f32.mxu0 0.0
    %458 = vmatmul.mubr.f32.gmra.mrb[0].mxu0 %v177
    %v459 = vpop.f32.mrb[0].mxu0
    %v460 = vadd.f32 0.0, %v459
    %v461 = vpop.f32.mrb[0].mxu0
    %462 = vmatprep.mubr.f32.mxu0 0.0
    %463 = vmatmul.mubr.f32.gmra.mrb[0].mxu0 %v180
    %v464 = vpop.f32.mrb[0].mxu0
    %v465 = vadd.f32 0.0, %v464
    %v466 = vpop.f32.mrb[0].mxu0
    %467 = vmatprep.mubr.f32.mxu0 0.0
    %468 = vmatmul.mubr.f32.gmra.mrb[0].mxu0 %v183
    %v469 = vpop.f32.mrb[0].mxu0
    %v470 = vadd.f32 0.0, %v469
    %v471 = vpop.f32.mrb[0].mxu0
    %472 = vmatprep.mubr.f32.mxu0 0.0
    %473 = vmatmul.mubr.f32.gmra.mrb[0].mxu0 %v186
    %v474 = vpop.f32.mrb[0].mxu0
    %v475 = vadd.f32 0.0, %v474
    %v476 = vpop.f32.mrb[0].mxu0
    %477 = vmatprep.mubr.f32.mxu0 0.0
    %478 = vmatmul.mubr.f32.gmra.mrb[0].mxu0 %v189
    %v479 = vpop.f32.mrb[0].mxu0
    %v480 = vadd.f32 0.0, %v479
    %v481 = vpop.f32.mrb[0].mxu0
    %482 = vmatprep.mubr.f32.mxu0 0.0
    %483 = vmatmul.mubr.f32.gmra.mrb[0].mxu0 %v192
    %v484 = vpop.f32.mrb[0].mxu0
    %v485 = vadd.f32 0.0, %v484
    %v486 = vpop.f32.mrb[0].mxu0
    %487 = vmatprep.mubr.f32.mxu0 0.0
    %488 = vmatmul.mubr.f32.gmra.mrb[0].mxu0 %v195
    %v489 = vpop.f32.mrb[0].mxu0
    %v490 = vadd.f32 0.0, %v489
    %v491 = vpop.f32.mrb[0].mxu0
    %492 = vmatprep.mubr.f32.mxu0 0.0
    %493 = vmatmul.mubr.f32.gmra.mrb[0].mxu0 %v198
    %v494 = vpop.f32.mrb[0].mxu0
    %v495 = vadd.f32 0.0, %v494
    %v496 = vpop.f32.mrb[0].mxu0
    %497 = vmatprep.mubr.f32.mxu0 0.0
    %498 = vmatmul.mubr.f32.gmra.mrb[0].mxu0 %v201
    %v499 = vpop.f32.mrb[0].mxu0
    %v500 = vadd.f32 0.0, %v499
    %v501 = vpop.f32.mrb[0].mxu0
    %502 = vmatprep.mubr.f32.mxu0 0.0
    %503 = vmatmul.mubr.f32.gmra.mrb[0].mxu0 %v204
    %v504 = vpop.f32.mrb[0].mxu0
    %v505 = vadd.f32 0.0, %v504
    %v506 = vpop.f32.mrb[0].mxu0
    %507 = vmatprep.mubr.f32.mxu0 0.0
    %508 = vmatmul.mubr.f32.gmra.mrb[0].mxu0 %v207
    %v509 = vpop.f32.mrb[0].mxu0
    %v510 = vadd.f32 0.0, %v509
    %v511 = vpop.f32.mrb[0].mxu0
    %512 = vmatprep.mubr.f32.mxu0 0.0
    %513 = vmatmul.mubr.f32.gmra.mrb[0].mxu0 %v210
    %v514 = vpop.f32.mrb[0].mxu0
    %v515 = vadd.f32 0.0, %v514
    %v516 = vpop.f32.mrb[0].mxu0
    %517 = vmatprep.mubr.f32.mxu0 0.0
    %518 = vmatmul.mubr.f32.gmra.mrb[0].mxu0 %v213
    %v519 = vpop.f32.mrb[0].mxu0
    %v520 = vadd.f32 0.0, %v519
    %v521 = vpop.f32.mrb[0].mxu0
    %522 = vmatprep.mubr.f32.mxu0 0.0
    %523 = vmatmul.mubr.f32.gmra.mrb[0].mxu0 %v216
    %v524 = vpop.f32.mrb[0].mxu0
    %v525 = vadd.f32 0.0, %v524
    %v526 = vpop.f32.mrb[0].mxu0
    %527 = vmatprep.mubr.f32.mxu0 0.0
    %528 = vmatmul.mubr.f32.gmra.mrb[0].mxu0 %v219
    %v529 = vpop.f32.mrb[0].mxu0
    %v530 = vadd.f32 0.0, %v529
    %v531 = vpop.f32.mrb[0].mxu0
    %532 = vmatprep.mubr.f32.mxu0 0.0
    %533 = vmatmul.mubr.f32.gmra.mrb[0].mxu0 %v222
    %v534 = vpop.f32.mrb[0].mxu0
    %v535 = vadd.f32 0.0, %v534
    %v536 = vpop.f32.mrb[0].mxu0
    %537 = vdwg.mxu0
    %v538 = vmax.f32 %v295, 0.0
    %v539 = vmax.f32 %v300, 0.0
    %v540 = vmax.f32 %v305, 0.0
    %v541 = vmax.f32 %v310, 0.0
    %v542 = vmax.f32 %v315, 0.0
    %v543 = vmax.f32 %v320, 0.0
    %v544 = vmax.f32 %v325, 0.0
    %v545 = vmax.f32 %v330, 0.0
    %v546 = vmax.f32 %v335, 0.0
    %v547 = vmax.f32 %v340, 0.0
    %v548 = vmax.f32 %v345, 0.0
    %v549 = vmax.f32 %v350, 0.0
    %v550 = vmax.f32 %v355, 0.0
    %v551 = vmax.f32 %v360, 0.0
    %v552 = vmax.f32 %v365, 0.0
    %v553 = vmax.f32 %v370, 0.0
    %v554 = vmax.f32 %v375, 0.0
    %v555 = vmax.f32 %v380, 0.0
    %v556 = vmax.f32 %v385, 0.0
    %v557 = vmax.f32 %v390, 0.0
    %v558 = vmax.f32 %v395, 0.0
    %v559 = vmax.f32 %v400, 0.0
    %v560 = vmax.f32 %v405, 0.0
    %v561 = vmax.f32 %v410, 0.0
    %v562 = vmax.f32 %v415, 0.0
    %v563 = vmax.f32 %v420, 0.0
    %v564 = vmax.f32 %v425, 0.0
    %v565 = vmax.f32 %v430, 0.0
    %v566 = vmax.f32 %v435, 0.0
    %v567 = vmax.f32 %v440, 0.0
    %v568 = vmax.f32 %v445, 0.0
    %v569 = vmax.f32 %v450, 0.0
    %v570 = vmax.f32 %v455, 0.0
    %v571 = vmax.f32 %v460, 0.0
    %v572 = vmax.f32 %v465, 0.0
    %v573 = vmax.f32 %v470, 0.0
    %v574 = vmax.f32 %v475, 0.0
    %v575 = vmax.f32 %v480, 0.0
    %v576 = vmax.f32 %v485, 0.0
    %v577 = vmax.f32 %v490, 0.0
    %v578 = vmax.f32 %v495, 0.0
    %v579 = vmax.f32 %v500, 0.0
    %v580 = vmax.f32 %v505, 0.0
    %v581 = vmax.f32 %v510, 0.0
    %v582 = vmax.f32 %v515, 0.0
    %v583 = vmax.f32 %v520, 0.0
    %v584 = vmax.f32 %v525, 0.0
    %v585 = vmax.f32 %v530, 0.0
    %v586 = vmax.f32 %v535, 0.0
    %v587 = vpack.c.bf16 %v539, %v538
    %v588 = vpack.c.bf16 %v541, %v540
    %v589 = vpack.c.bf16 %v543, %v542
    %v590 = vpack.c.bf16 %v545, %v544
    %v591 = vpack.c.bf16 %v547, %v546
    %v592 = vpack.c.bf16 %v549, %v548
    %v593 = vpack.c.bf16 %v551, %v550
    %v594 = vpack.c.bf16 %v553, %v552
    %v595 = vpack.c.bf16 %v555, %v554
    %v596 = vpack.c.bf16 %v557, %v556
    %v597 = vpack.c.bf16 %v559, %v558
    %v598 = vpack.c.bf16 %v561, %v560
    %v599 = vpack.c.bf16 %v563, %v562
    %v600 = vpack.c.bf16 %v565, %v564
    %v601 = vpack.c.bf16 %v567, %v566
    %v602 = vpack.c.bf16 %v569, %v568
    %v603 = vpack.c.bf16 %v571, %v570
    %v604 = vpack.c.bf16 %v573, %v572
    %v605 = vpack.c.bf16 %v575, %v574
    %v606 = vpack.c.bf16 %v577, %v576
    %v607 = vpack.c.bf16 %v579, %v578
    %v608 = vpack.c.bf16 %v581, %v580
    %v609 = vpack.c.bf16 %v583, %v582
    %v610 = vpack.c.bf16 %v585, %v584
    %v611 = vpack.c.bf16 %v586, %v586
    %v637 = vunpack.c.l.b16 %v587
    %v638 = vunpack.c.h.b16 %v587
    %v639 = vunpack.c.l.b16 %v588
    %v640 = vunpack.c.h.b16 %v588
    %v641 = vunpack.c.l.b16 %v589
    %v642 = vunpack.c.h.b16 %v589
    %v643 = vunpack.c.l.b16 %v590
    %v644 = vunpack.c.h.b16 %v590
    %v645 = vunpack.c.l.b16 %v591
    %v646 = vunpack.c.h.b16 %v591
    %v647 = vunpack.c.l.b16 %v592
    %v648 = vunpack.c.h.b16 %v592
    %v649 = vunpack.c.l.b16 %v593
    %v650 = vunpack.c.h.b16 %v593
    %v651 = vunpack.c.l.b16 %v594
    %v652 = vunpack.c.h.b16 %v594
    %v653 = vunpack.c.l.b16 %v595
    %v654 = vunpack.c.h.b16 %v595
    %v655 = vunpack.c.l.b16 %v596
    %v656 = vunpack.c.h.b16 %v596
    %v657 = vunpack.c.l.b16 %v597
    %v658 = vunpack.c.h.b16 %v597
    %v659 = vunpack.c.l.b16 %v598
    %v660 = vunpack.c.h.b16 %v598
    %v661 = vunpack.c.l.b16 %v599
    %v662 = vunpack.c.h.b16 %v599
    %v663 = vunpack.c.l.b16 %v600
    %v664 = vunpack.c.h.b16 %v600
    %v665 = vunpack.c.l.b16 %v601
    %v666 = vunpack.c.h.b16 %v601
    %v667 = vunpack.c.l.b16 %v602
    %v668 = vunpack.c.h.b16 %v602
    %v669 = vunpack.c.l.b16 %v603
    %v670 = vunpack.c.h.b16 %v603
    %v671 = vunpack.c.l.b16 %v604
    %v672 = vunpack.c.h.b16 %v604
    %v673 = vunpack.c.l.b16 %v605
    %v674 = vunpack.c.h.b16 %v605
    %v675 = vunpack.c.l.b16 %v606
    %v676 = vunpack.c.h.b16 %v606
    %v677 = vunpack.c.l.b16 %v607
    %v678 = vunpack.c.h.b16 %v607
    %v679 = vunpack.c.l.b16 %v608
    %v680 = vunpack.c.h.b16 %v608
    %v681 = vunpack.c.l.b16 %v609
    %v682 = vunpack.c.h.b16 %v609
    %v683 = vunpack.c.l.b16 %v610
    %v684 = vunpack.c.h.b16 %v610
    %v685 = vunpack.c.l.b16 %v611
    %v686 = vpack.c.b16 %v637, %v637
    %v687 = vpack.c.b16 %v638, %v638
    %v688 = vpack.c.b16 %v639, %v639
    %v689 = vpack.c.b16 %v640, %v640
    %v690 = vpack.c.b16 %v641, %v641
    %v691 = vpack.c.b16 %v642, %v642
    %v692 = vpack.c.b16 %v643, %v643
    %v693 = vpack.c.b16 %v644, %v644
    %v694 = vpack.c.b16 %v645, %v645
    %v695 = vpack.c.b16 %v646, %v646
    %v696 = vpack.c.b16 %v647, %v647
    %v697 = vpack.c.b16 %v648, %v648
    %v698 = vpack.c.b16 %v649, %v649
    %v699 = vpack.c.b16 %v650, %v650
    %v700 = vpack.c.b16 %v651, %v651
    %v701 = vpack.c.b16 %v652, %v652
    %v702 = vpack.c.b16 %v653, %v653
    %v703 = vpack.c.b16 %v654, %v654
    %v704 = vpack.c.b16 %v655, %v655
    %v705 = vpack.c.b16 %v656, %v656
    %v706 = vpack.c.b16 %v657, %v657
    %v707 = vpack.c.b16 %v658, %v658
    %v708 = vpack.c.b16 %v659, %v659
    %v709 = vpack.c.b16 %v660, %v660
    %v710 = vpack.c.b16 %v661, %v661
    %v711 = vpack.c.b16 %v662, %v662
    %v712 = vpack.c.b16 %v663, %v663
    %v713 = vpack.c.b16 %v664, %v664
    %v714 = vpack.c.b16 %v665, %v665
    %v715 = vpack.c.b16 %v666, %v666
    %v716 = vpack.c.b16 %v667, %v667
    %v717 = vpack.c.b16 %v668, %v668
    %v718 = vpack.c.b16 %v669, %v669
    %v719 = vpack.c.b16 %v670, %v670
    %v720 = vpack.c.b16 %v671, %v671
    %v721 = vpack.c.b16 %v672, %v672
    %v722 = vpack.c.b16 %v673, %v673
    %v723 = vpack.c.b16 %v674, %v674
    %v724 = vpack.c.b16 %v675, %v675
    %v725 = vpack.c.b16 %v676, %v676
    %v726 = vpack.c.b16 %v677, %v677
    %v727 = vpack.c.b16 %v678, %v678
    %v728 = vpack.c.b16 %v679, %v679
    %v729 = vpack.c.b16 %v680, %v680
    %v730 = vpack.c.b16 %v681, %v681
    %v731 = vpack.c.b16 %v682, %v682
    %v732 = vpack.c.b16 %v683, %v683
    %v733 = vpack.c.b16 %v684, %v684
    %v734 = vpack.c.b16 %v685, %v685
    %vm784 = vcmask 257024
    %785 = vst.msk [vmem:[%s2] sm:$0xf] %vm784, %v686
    %786 = vst.msk [vmem:[%s2 + $0x4] sm:$0xf] %vm784, %v687
    %787 = vst.msk [vmem:[%s2 + $0x8] sm:$0xf] %vm784, %v688
    %788 = vst.msk [vmem:[%s2 + $0xc] sm:$0xf] %vm784, %v689
    %789 = vst.msk [vmem:[%s2 + $0x10] sm:$0xf] %vm784, %v690
    %790 = vst.msk [vmem:[%s2 + $0x14] sm:$0xf] %vm784, %v691
    %791 = vst.msk [vmem:[%s2 + $0x18] sm:$0xf] %vm784, %v692
    %792 = vst.msk [vmem:[%s2 + $0x1c] sm:$0xf] %vm784, %v693
    %793 = vst.msk [vmem:[%s2 + $0x20] sm:$0xf] %vm784, %v694
    %794 = vst.msk [vmem:[%s2 + $0x24] sm:$0xf] %vm784, %v695
    %795 = vst.msk [vmem:[%s2 + $0x28] sm:$0xf] %vm784, %v696
    %796 = vst.msk [vmem:[%s2 + $0x2c] sm:$0xf] %vm784, %v697
    %797 = vst.msk [vmem:[%s2 + $0x30] sm:$0xf] %vm784, %v698
    %798 = vst.msk [vmem:[%s2 + $0x34] sm:$0xf] %vm784, %v699
    %799 = vst.msk [vmem:[%s2 + $0x38] sm:$0xf] %vm784, %v700
    %800 = vst.msk [vmem:[%s2 + $0x3c] sm:$0xf] %vm784, %v701
    %801 = vst.msk [vmem:[%s2 + $0x40] sm:$0xf] %vm784, %v702
    %802 = vst.msk [vmem:[%s2 + $0x44] sm:$0xf] %vm784, %v703
    %803 = vst.msk [vmem:[%s2 + $0x48] sm:$0xf] %vm784, %v704
    %804 = vst.msk [vmem:[%s2 + $0x4c] sm:$0xf] %vm784, %v705
    %805 = vst.msk [vmem:[%s2 + $0x50] sm:$0xf] %vm784, %v706
    %806 = vst.msk [vmem:[%s2 + $0x54] sm:$0xf] %vm784, %v707
    %807 = vst.msk [vmem:[%s2 + $0x58] sm:$0xf] %vm784, %v708
    %808 = vst.msk [vmem:[%s2 + $0x5c] sm:$0xf] %vm784, %v709
    %809 = vst.msk [vmem:[%s2 + $0x60] sm:$0xf] %vm784, %v710
    %810 = vst.msk [vmem:[%s2 + $0x64] sm:$0xf] %vm784, %v711
    %811 = vst.msk [vmem:[%s2 + $0x68] sm:$0xf] %vm784, %v712
    %812 = vst.msk [vmem:[%s2 + $0x6c] sm:$0xf] %vm784, %v713
    %813 = vst.msk [vmem:[%s2 + $0x70] sm:$0xf] %vm784, %v714
    %814 = vst.msk [vmem:[%s2 + $0x74] sm:$0xf] %vm784, %v715
    %815 = vst.msk [vmem:[%s2 + $0x78] sm:$0xf] %vm784, %v716
    %816 = vst.msk [vmem:[%s2 + $0x7c] sm:$0xf] %vm784, %v717
    %817 = vst.msk [vmem:[%s2 + $0x80] sm:$0xf] %vm784, %v718
    %818 = vst.msk [vmem:[%s2 + $0x84] sm:$0xf] %vm784, %v719
    %819 = vst.msk [vmem:[%s2 + $0x88] sm:$0xf] %vm784, %v720
    %820 = vst.msk [vmem:[%s2 + $0x8c] sm:$0xf] %vm784, %v721
    %821 = vst.msk [vmem:[%s2 + $0x90] sm:$0xf] %vm784, %v722
    %822 = vst.msk [vmem:[%s2 + $0x94] sm:$0xf] %vm784, %v723
    %823 = vst.msk [vmem:[%s2 + $0x98] sm:$0xf] %vm784, %v724
    %824 = vst.msk [vmem:[%s2 + $0x9c] sm:$0xf] %vm784, %v725
    %825 = vst.msk [vmem:[%s2 + $0xa0] sm:$0xf] %vm784, %v726
    %826 = vst.msk [vmem:[%s2 + $0xa4] sm:$0xf] %vm784, %v727
    %827 = vst.msk [vmem:[%s2 + $0xa8] sm:$0xf] %vm784, %v728
    %828 = vst.msk [vmem:[%s2 + $0xac] sm:$0xf] %vm784, %v729
    %829 = vst.msk [vmem:[%s2 + $0xb0] sm:$0xf] %vm784, %v730
    %830 = vst.msk [vmem:[%s2 + $0xb4] sm:$0xf] %vm784, %v731
    %831 = vst.msk [vmem:[%s2 + $0xb8] sm:$0xf] %vm784, %v732
    %832 = vst.msk [vmem:[%s2 + $0xbc] sm:$0xf] %vm784, %v733
    %833 = vst.msk [vmem:[%s2 + $0xc0] sm:$0xf] %vm784, %v734
    // Predicated region
    $region14: #{temp_speech_classifier.2} parent=1 // pred_check
      _
    $region15: #{temp_speech_classifier.2} parent=1 // pred_check_branch
      %835 = sbr.rel (0) target = $region17
    $region16: #{temp_speech_classifier.2} parent=1 // pred_region
      _
    $region17: #{temp_speech_classifier.2} parent=1 // pred_fallthru
      _
    // Predicated region
    $region18: #{temp_speech_classifier.2} parent=1 // pred_check
      _
    $region19: #{temp_speech_classifier.2} parent=1 // pred_check_branch
      %837 = sbr.rel (0) target = $region21
    $region20: #{temp_speech_classifier.2} parent=1 // pred_region
      _
    $region21: #{temp_speech_classifier.2} parent=1 // pred_fallthru
      _
    %838 = vsyncpa [#allocation3], 1

// kernel: temp_speech_classifier.3
$region0: #{temp_speech_classifier.3}
  #allocation0 [shape = 'u32[]', space=smem, size = 0x4, offset = 0x4, fixed_abs, tag = 'smem constant byte address 0x4 - core index']
  #allocation1 [shape = 'u32[144,128]{1,0:T(1,128)}', space=vmem, size = 0x12000, scoped, tag = 'internal scratch']
  #allocation2 [shape = 'f32[1,1]{1,0:T(1,128)S(1)}', space=vmem, size = 0x200, scoped, tag = 'scoped memory for temp_speech_classifier.3']
  %s0 = inlined_call_operand.vmem [shape: bf16[2,6272], index: 0, kind: input, shape index: {}]
  %s1 = inlined_call_operand.hbm [shape: bf16[6272,128], index: 1, kind: input, shape index: {}]
  %s2 = inlined_call_operand.hbm [shape: f32[1,128], index: 2, kind: input, shape index: {}]
  %s3 = inlined_call_operand.vmem [shape: f32[128,1], index: 3, kind: input, shape index: {}]
  %s4 = inlined_call_operand.<no memory space> [shape: f32[1,1], index: 4, kind: input, shape index: {}]
  %s5 = inlined_call_operand.vmem [shape: f32[2,1], index: 5, kind: output, shape index: {}]
  %s6 = sld [smem:[#allocation0]]
  $region38: #{temp_speech_classifier.3} parent=0
    _
  %s8 = ssub.s32 1, %s6
  %s9 = scalar_select 0, %s8, %s6
  %v10 = vstv %s4
  %11 = vst [vmem:[#allocation2] sm:$0x1] %v10
  $region1: #{temp_speech_classifier.3} parent=0
    #allocation3 [shape = 'u8[1605632]{0}', space=vmem, size = 0x188000, scoped, tag = 'input window, operand 1, single buffered']
    #allocation4 [shape = 's32[1]{0}', space=sflag, size = 0x4, scoped, tag = 'scoped memory for temp_speech_classifier.3']
    #allocation5 [shape = 'u8[512]{0}', space=vmem, size = 0x400, scoped, tag = 'input window, operand 2, single buffered']
    #allocation6 [shape = 's32[1]{0}', space=sflag, size = 0x4, scoped, tag = 'scoped memory for temp_speech_classifier.3']
    %12 = vsyncpa [#allocation4], 0
    %13 = vsyncpa [#allocation6], 0
    // Predicated region
    $region2: #{temp_speech_classifier.3} parent=1 // pred_check
      _
    $region3: #{temp_speech_classifier.3} parent=1 // pred_check_branch
      %15 = sbr.rel (0) target = $region5
    $region4: #{temp_speech_classifier.3} parent=1 // pred_region
      _
    $region5: #{temp_speech_classifier.3} parent=1 // pred_fallthru
      _
    // Predicated region
    $region6: #{temp_speech_classifier.3} parent=1 // pred_check
      _
    $region7: #{temp_speech_classifier.3} parent=1 // pred_check_branch
      %17 = sbr.rel (0) target = $region9
    $region8: #{temp_speech_classifier.3} parent=1 // pred_region
      %s19 = ssub.s32 50176, 50176
      %20 = vsyncadd [#allocation4], %s19
      %s21 = sshll.u32 [#allocation3], 4
      %s22 = int_to_ptr.vmem [resolvable:$true] %s21
      %27 = dma.hbm_to_vmem [thread:$0]  %s1, 50176, %s22, [#allocation4], 64, 64, 4
    $region9: #{temp_speech_classifier.3} parent=1 // pred_fallthru
      _
    // Predicated region
    $region10: #{temp_speech_classifier.3} parent=1 // pred_check
      _
    $region11: #{temp_speech_classifier.3} parent=1 // pred_check_branch
      %29 = sbr.rel (0) target = $region13
    $region12: #{temp_speech_classifier.3} parent=1 // pred_region
      %s31 = ssub.s32 16, 16
      %32 = vsyncadd [#allocation6], %s31
      %s34 = sshll.u32 [#allocation5], 4
      %s35 = int_to_ptr.vmem [resolvable:$true] %s34
      %37 = dma.hbm_to_vmem [thread:$0]  %s2, 16, %s35, [#allocation6]
    $region13: #{temp_speech_classifier.3} parent=1 // pred_fallthru
      _
    // Predicated region
    $region14: #{temp_speech_classifier.3} parent=1 // pred_check
      _
    $region15: #{temp_speech_classifier.3} parent=1 // pred_check_branch
      %39 = sbr.rel (0) target = $region17
    $region16: #{temp_speech_classifier.3} parent=1 // pred_region
      _
    $region17: #{temp_speech_classifier.3} parent=1 // pred_fallthru
      _
    // Predicated region
    $region18: #{temp_speech_classifier.3} parent=1 // pred_check
      _
    $region19: #{temp_speech_classifier.3} parent=1 // pred_check_branch
      %41 = sbr.rel (0) target = $region21
    $region20: #{temp_speech_classifier.3} parent=1 // pred_region
      _
    $region21: #{temp_speech_classifier.3} parent=1 // pred_fallthru
      _
    // Predicated region
    $region22: #{temp_speech_classifier.3} parent=1 // pred_check
      _
    $region23: #{temp_speech_classifier.3} parent=1 // pred_check_branch
      %43 = sbr.rel (0) target = $region25
    $region24: #{temp_speech_classifier.3} parent=1 // pred_region
      %44 = dma.done [#allocation4], 50176
    $region25: #{temp_speech_classifier.3} parent=1 // pred_fallthru
      _
    // Predicated region
    $region26: #{temp_speech_classifier.3} parent=1 // pred_check
      _
    $region27: #{temp_speech_classifier.3} parent=1 // pred_check_branch
      %46 = sbr.rel (0) target = $region29
    $region28: #{temp_speech_classifier.3} parent=1 // pred_region
      %47 = dma.done [#allocation6], 16
    $region29: #{temp_speech_classifier.3} parent=1 // pred_fallthru
      _
    %v49 = vld [vmem:[%s0] sm:$0xff]
    %v50 = vld [vmem:[%s0 + $0x8] sm:$0xff]
    %v51 = vld [vmem:[%s0 + $0x10] sm:$0xff]
    %v52 = vld [vmem:[%s0 + $0x18] sm:$0xff]
    %v53 = vld [vmem:[%s0 + $0x20] sm:$0xff]
    %v54 = vld [vmem:[%s0 + $0x28] sm:$0xff]
    %v55 = vld [vmem:[%s0 + $0x30] sm:$0x1]
    %v56 = vld [vmem:[#allocation3] sm:$0xf]
    %v57 = vld [vmem:[#allocation3 + $0x4] sm:$0xf]
    %v58 = vld [vmem:[#allocation3 + $0x8] sm:$0xf]
    %v59 = vld [vmem:[#allocation3 + $0xc] sm:$0xf]
    %v60 = vld [vmem:[#allocation3 + $0x10] sm:$0xf]
    %v61 = vld [vmem:[#allocation3 + $0x14] sm:$0xf]
    %v62 = vld [vmem:[#allocation3 + $0x18] sm:$0xf]
    %v63 = vld [vmem:[#allocation3 + $0x1c] sm:$0xf]
    %v64 = vld [vmem:[#allocation3 + $0x20] sm:$0xf]
    %v65 = vld [vmem:[#allocation3 + $0x24] sm:$0xf]
    %v66 = vld [vmem:[#allocation3 + $0x28] sm:$0xf]
    %v67 = vld [vmem:[#allocation3 + $0x2c] sm:$0xf]
    %v68 = vld [vmem:[#allocation3 + $0x30] sm:$0xf]
    %v69 = vld [vmem:[#allocation3 + $0x34] sm:$0xf]
    %v70 = vld [vmem:[#allocation3 + $0x38] sm:$0xf]
    %v71 = vld [vmem:[#allocation3 + $0x3c] sm:$0xf]
    %v72 = vld [vmem:[#allocation3 + $0x40] sm:$0xf]
    %v73 = vld [vmem:[#allocation3 + $0x44] sm:$0xf]
    %v74 = vld [vmem:[#allocation3 + $0x48] sm:$0xf]
    %v75 = vld [vmem:[#allocation3 + $0x4c] sm:$0xf]
    %v76 = vld [vmem:[#allocation3 + $0x50] sm:$0xf]
    %v77 = vld [vmem:[#allocation3 + $0x54] sm:$0xf]
    %v78 = vld [vmem:[#allocation3 + $0x58] sm:$0xf]
    %v79 = vld [vmem:[#allocation3 + $0x5c] sm:$0xf]
    %v80 = vld [vmem:[#allocation3 + $0x60] sm:$0xf]
    %v81 = vld [vmem:[#allocation3 + $0x64] sm:$0xf]
    %v82 = vld [vmem:[#allocation3 + $0x68] sm:$0xf]
    %v83 = vld [vmem:[#allocation3 + $0x6c] sm:$0xf]
    %v84 = vld [vmem:[#allocation3 + $0x70] sm:$0xf]
    %v85 = vld [vmem:[#allocation3 + $0x74] sm:$0xf]
    %v86 = vld [vmem:[#allocation3 + $0x78] sm:$0xf]
    %v87 = vld [vmem:[#allocation3 + $0x7c] sm:$0xf]
    %v88 = vld [vmem:[#allocation3 + $0x80] sm:$0xf]
    %v89 = vld [vmem:[#allocation3 + $0x84] sm:$0xf]
    %v90 = vld [vmem:[#allocation3 + $0x88] sm:$0xf]
    %v91 = vld [vmem:[#allocation3 + $0x8c] sm:$0xf]
    %v92 = vld [vmem:[#allocation3 + $0x90] sm:$0xf]
    %v93 = vld [vmem:[#allocation3 + $0x94] sm:$0xf]
    %v94 = vld [vmem:[#allocation3 + $0x98] sm:$0xf]
    %v95 = vld [vmem:[#allocation3 + $0x9c] sm:$0xf]
    %v96 = vld [vmem:[#allocation3 + $0xa0] sm:$0xf]
    %v97 = vld [vmem:[#allocation3 + $0xa4] sm:$0xf]
    %v98 = vld [vmem:[#allocation3 + $0xa8] sm:$0xf]
    %v99 = vld [vmem:[#allocation3 + $0xac] sm:$0xf]
    %v100 = vld [vmem:[#allocation3 + $0xb0] sm:$0xf]
    %v101 = vld [vmem:[#allocation3 + $0xb4] sm:$0xf]
    %v102 = vld [vmem:[#allocation3 + $0xb8] sm:$0xf]
    %v103 = vld [vmem:[#allocation3 + $0xbc] sm:$0xf]
    %v104 = vld [vmem:[#allocation3 + $0xc0] sm:$0xf]
    %v105 = vld [vmem:[#allocation3 + $0xc4] sm:$0xf]
    %v106 = vld [vmem:[#allocation3 + $0xc8] sm:$0xf]
    %v107 = vld [vmem:[#allocation3 + $0xcc] sm:$0xf]
    %v108 = vld [vmem:[#allocation3 + $0xd0] sm:$0xf]
    %v109 = vld [vmem:[#allocation3 + $0xd4] sm:$0xf]
    %v110 = vld [vmem:[#allocation3 + $0xd8] sm:$0xf]
    %v111 = vld [vmem:[#allocation3 + $0xdc] sm:$0xf]
    %v112 = vld [vmem:[#allocation3 + $0xe0] sm:$0xf]
    %v113 = vld [vmem:[#allocation3 + $0xe4] sm:$0xf]
    %v114 = vld [vmem:[#allocation3 + $0xe8] sm:$0xf]
    %v115 = vld [vmem:[#allocation3 + $0xec] sm:$0xf]
    %v116 = vld [vmem:[#allocation3 + $0xf0] sm:$0xf]
    %v117 = vld [vmem:[#allocation3 + $0xf4] sm:$0xf]
    %v118 = vld [vmem:[#allocation3 + $0xf8] sm:$0xf]
    %v119 = vld [vmem:[#allocation3 + $0xfc] sm:$0xf]
    %v120 = vld [vmem:[#allocation3 + $0x100] sm:$0xf]
    %v121 = vld [vmem:[#allocation3 + $0x104] sm:$0xf]
    %v122 = vld [vmem:[#allocation3 + $0x108] sm:$0xf]
    %v123 = vld [vmem:[#allocation3 + $0x10c] sm:$0xf]
    %v124 = vld [vmem:[#allocation3 + $0x110] sm:$0xf]
    %v125 = vld [vmem:[#allocation3 + $0x114] sm:$0xf]
    %v126 = vld [vmem:[#allocation3 + $0x118] sm:$0xf]
    %v127 = vld [vmem:[#allocation3 + $0x11c] sm:$0xf]
    %v128 = vld [vmem:[#allocation3 + $0x120] sm:$0xf]
    %v129 = vld [vmem:[#allocation3 + $0x124] sm:$0xf]
    %v130 = vld [vmem:[#allocation3 + $0x128] sm:$0xf]
    %v131 = vld [vmem:[#allocation3 + $0x12c] sm:$0xf]
    %v132 = vld [vmem:[#allocation3 + $0x130] sm:$0xf]
    %v133 = vld [vmem:[#allocation3 + $0x134] sm:$0xf]
    %v134 = vld [vmem:[#allocation3 + $0x138] sm:$0xf]
    %v135 = vld [vmem:[#allocation3 + $0x13c] sm:$0xf]
    %v136 = vld [vmem:[#allocation3 + $0x140] sm:$0xf]
    %v137 = vld [vmem:[#allocation3 + $0x144] sm:$0xf]
    %v138 = vld [vmem:[#allocation3 + $0x148] sm:$0xf]
    %v139 = vld [vmem:[#allocation3 + $0x14c] sm:$0xf]
    %v140 = vld [vmem:[#allocation3 + $0x150] sm:$0xf]
    %v141 = vld [vmem:[#allocation3 + $0x154] sm:$0xf]
    %v142 = vld [vmem:[#allocation3 + $0x158] sm:$0xf]
    %v143 = vld [vmem:[#allocation3 + $0x15c] sm:$0xf]
    %v144 = vld [vmem:[#allocation3 + $0x160] sm:$0xf]
    %v145 = vld [vmem:[#allocation3 + $0x164] sm:$0xf]
    %v146 = vld [vmem:[#allocation3 + $0x168] sm:$0xf]
    %v147 = vld [vmem:[#allocation3 + $0x16c] sm:$0xf]
    %v148 = vld [vmem:[#allocation3 + $0x170] sm:$0xf]
    %v149 = vld [vmem:[#allocation3 + $0x174] sm:$0xf]
    %v150 = vld [vmem:[#allocation3 + $0x178] sm:$0xf]
    %v151 = vld [vmem:[#allocation3 + $0x17c] sm:$0xf]
    %v152 = vld [vmem:[#allocation3 + $0x180] sm:$0xf]
    %v153 = vld [vmem:[#allocation3 + $0x184] sm:$0xf]
    %v154 = vld [vmem:[#allocation3 + $0x188] sm:$0xf]
    %v155 = vld [vmem:[#allocation3 + $0x18c] sm:$0xf]
    %v156 = vld [vmem:[#allocation3 + $0x190] sm:$0xf]
    %v157 = vld [vmem:[#allocation3 + $0x194] sm:$0xf]
    %v158 = vld [vmem:[#allocation3 + $0x198] sm:$0xf]
    %v159 = vld [vmem:[#allocation3 + $0x19c] sm:$0xf]
    %v160 = vld [vmem:[#allocation3 + $0x1a0] sm:$0xf]
    %v161 = vld [vmem:[#allocation3 + $0x1a4] sm:$0xf]
    %v162 = vld [vmem:[#allocation3 + $0x1a8] sm:$0xf]
    %v163 = vld [vmem:[#allocation3 + $0x1ac] sm:$0xf]
    %v164 = vld [vmem:[#allocation3 + $0x1b0] sm:$0xf]
    %v165 = vld [vmem:[#allocation3 + $0x1b4] sm:$0xf]
    %v166 = vld [vmem:[#allocation3 + $0x1b8] sm:$0xf]
    %v167 = vld [vmem:[#allocation3 + $0x1bc] sm:$0xf]
    %v168 = vld [vmem:[#allocation3 + $0x1c0] sm:$0xf]
    %v169 = vld [vmem:[#allocation3 + $0x1c4] sm:$0xf]
    %v170 = vld [vmem:[#allocation3 + $0x1c8] sm:$0xf]
    %v171 = vld [vmem:[#allocation3 + $0x1cc] sm:$0xf]
    %v172 = vld [vmem:[#allocation3 + $0x1d0] sm:$0xf]
    %v173 = vld [vmem:[#allocation3 + $0x1d4] sm:$0xf]
    %v174 = vld [vmem:[#allocation3 + $0x1d8] sm:$0xf]
    %v175 = vld [vmem:[#allocation3 + $0x1dc] sm:$0xf]
    %v176 = vld [vmem:[#allocation3 + $0x1e0] sm:$0xf]
    %v177 = vld [vmem:[#allocation3 + $0x1e4] sm:$0xf]
    %v178 = vld [vmem:[#allocation3 + $0x1e8] sm:$0xf]
    %v179 = vld [vmem:[#allocation3 + $0x1ec] sm:$0xf]
    %v180 = vld [vmem:[#allocation3 + $0x1f0] sm:$0xf]
    %v181 = vld [vmem:[#allocation3 + $0x1f4] sm:$0xf]
    %v182 = vld [vmem:[#allocation3 + $0x1f8] sm:$0xf]
    %v183 = vld [vmem:[#allocation3 + $0x1fc] sm:$0xf]
    %v184 = vld [vmem:[#allocation3 + $0x200] sm:$0xf]
    %v185 = vld [vmem:[#allocation3 + $0x204] sm:$0xf]
    %v186 = vld [vmem:[#allocation3 + $0x208] sm:$0xf]
    %v187 = vld [vmem:[#allocation3 + $0x20c] sm:$0xf]
    %v188 = vld [vmem:[#allocation3 + $0x210] sm:$0xf]
    %v189 = vld [vmem:[#allocation3 + $0x214] sm:$0xf]
    %v190 = vld [vmem:[#allocation3 + $0x218] sm:$0xf]
    %v191 = vld [vmem:[#allocation3 + $0x21c] sm:$0xf]
    %v192 = vld [vmem:[#allocation3 + $0x220] sm:$0xf]
    %v193 = vld [vmem:[#allocation3 + $0x224] sm:$0xf]
    %v194 = vld [vmem:[#allocation3 + $0x228] sm:$0xf]
    %v195 = vld [vmem:[#allocation3 + $0x22c] sm:$0xf]
    %v196 = vld [vmem:[#allocation3 + $0x230] sm:$0xf]
    %v197 = vld [vmem:[#allocation3 + $0x234] sm:$0xf]
    %v198 = vld [vmem:[#allocation3 + $0x238] sm:$0xf]
    %v199 = vld [vmem:[#allocation3 + $0x23c] sm:$0xf]
    %v200 = vld [vmem:[#allocation3 + $0x240] sm:$0xf]
    %v201 = vld [vmem:[#allocation3 + $0x244] sm:$0xf]
    %v202 = vld [vmem:[#allocation3 + $0x248] sm:$0xf]
    %v203 = vld [vmem:[#allocation3 + $0x24c] sm:$0xf]
    %v204 = vld [vmem:[#allocation3 + $0x250] sm:$0xf]
    %v205 = vld [vmem:[#allocation3 + $0x254] sm:$0xf]
    %v206 = vld [vmem:[#allocation3 + $0x258] sm:$0xf]
    %v207 = vld [vmem:[#allocation3 + $0x25c] sm:$0xf]
    %v208 = vld [vmem:[#allocation3 + $0x260] sm:$0xf]
    %v209 = vld [vmem:[#allocation3 + $0x264] sm:$0xf]
    %v210 = vld [vmem:[#allocation3 + $0x268] sm:$0xf]
    %v211 = vld [vmem:[#allocation3 + $0x26c] sm:$0xf]
    %v212 = vld [vmem:[#allocation3 + $0x270] sm:$0xf]
    %v213 = vld [vmem:[#allocation3 + $0x274] sm:$0xf]
    %v214 = vld [vmem:[#allocation3 + $0x278] sm:$0xf]
    %v215 = vld [vmem:[#allocation3 + $0x27c] sm:$0xf]
    %v216 = vld [vmem:[#allocation3 + $0x280] sm:$0xf]
    %v217 = vld [vmem:[#allocation3 + $0x284] sm:$0xf]
    %v218 = vld [vmem:[#allocation3 + $0x288] sm:$0xf]
    %v219 = vld [vmem:[#allocation3 + $0x28c] sm:$0xf]
    %v220 = vld [vmem:[#allocation3 + $0x290] sm:$0xf]
    %v221 = vld [vmem:[#allocation3 + $0x294] sm:$0xf]
    %v222 = vld [vmem:[#allocation3 + $0x298] sm:$0xf]
    %v223 = vld [vmem:[#allocation3 + $0x29c] sm:$0xf]
    %v224 = vld [vmem:[#allocation3 + $0x2a0] sm:$0xf]
    %v225 = vld [vmem:[#allocation3 + $0x2a4] sm:$0xf]
    %v226 = vld [vmem:[#allocation3 + $0x2a8] sm:$0xf]
    %v227 = vld [vmem:[#allocation3 + $0x2ac] sm:$0xf]
    %v228 = vld [vmem:[#allocation3 + $0x2b0] sm:$0xf]
    %v229 = vld [vmem:[#allocation3 + $0x2b4] sm:$0xf]
    %v230 = vld [vmem:[#allocation3 + $0x2b8] sm:$0xf]
    %v231 = vld [vmem:[#allocation3 + $0x2bc] sm:$0xf]
    %v232 = vld [vmem:[#allocation3 + $0x2c0] sm:$0xf]
    %v233 = vld [vmem:[#allocation3 + $0x2c4] sm:$0xf]
    %v234 = vld [vmem:[#allocation3 + $0x2c8] sm:$0xf]
    %v235 = vld [vmem:[#allocation3 + $0x2cc] sm:$0xf]
    %v236 = vld [vmem:[#allocation3 + $0x2d0] sm:$0xf]
    %v237 = vld [vmem:[#allocation3 + $0x2d4] sm:$0xf]
    %v238 = vld [vmem:[#allocation3 + $0x2d8] sm:$0xf]
    %v239 = vld [vmem:[#allocation3 + $0x2dc] sm:$0xf]
    %v240 = vld [vmem:[#allocation3 + $0x2e0] sm:$0xf]
    %v241 = vld [vmem:[#allocation3 + $0x2e4] sm:$0xf]
    %v242 = vld [vmem:[#allocation3 + $0x2e8] sm:$0xf]
    %v243 = vld [vmem:[#allocation3 + $0x2ec] sm:$0xf]
    %v244 = vld [vmem:[#allocation3 + $0x2f0] sm:$0xf]
    %v245 = vld [vmem:[#allocation3 + $0x2f4] sm:$0xf]
    %v246 = vld [vmem:[#allocation3 + $0x2f8] sm:$0xf]
    %v247 = vld [vmem:[#allocation3 + $0x2fc] sm:$0xf]
    %v248 = vld [vmem:[#allocation3 + $0x300] sm:$0xf]
    %v249 = vld [vmem:[#allocation3 + $0x304] sm:$0xf]
    %v250 = vld [vmem:[#allocation3 + $0x308] sm:$0xf]
    %v251 = vld [vmem:[#allocation3 + $0x30c] sm:$0xf]
    %v252 = vld [vmem:[#allocation3 + $0x310] sm:$0xf]
    %v253 = vld [vmem:[#allocation3 + $0x314] sm:$0xf]
    %v254 = vld [vmem:[#allocation3 + $0x318] sm:$0xf]
    %v255 = vld [vmem:[#allocation3 + $0x31c] sm:$0xf]
    %v256 = vld [vmem:[#allocation3 + $0x320] sm:$0xf]
    %v257 = vld [vmem:[#allocation3 + $0x324] sm:$0xf]
    %v258 = vld [vmem:[#allocation3 + $0x328] sm:$0xf]
    %v259 = vld [vmem:[#allocation3 + $0x32c] sm:$0xf]
    %v260 = vld [vmem:[#allocation3 + $0x330] sm:$0xf]
    %v261 = vld [vmem:[#allocation3 + $0x334] sm:$0xf]
    %v262 = vld [vmem:[#allocation3 + $0x338] sm:$0xf]
    %v263 = vld [vmem:[#allocation3 + $0x33c] sm:$0xf]
    %v264 = vld [vmem:[#allocation3 + $0x340] sm:$0xf]
    %v265 = vld [vmem:[#allocation3 + $0x344] sm:$0xf]
    %v266 = vld [vmem:[#allocation3 + $0x348] sm:$0xf]
    %v267 = vld [vmem:[#allocation3 + $0x34c] sm:$0xf]
    %v268 = vld [vmem:[#allocation3 + $0x350] sm:$0xf]
    %v269 = vld [vmem:[#allocation3 + $0x354] sm:$0xf]
    %v270 = vld [vmem:[#allocation3 + $0x358] sm:$0xf]
    %v271 = vld [vmem:[#allocation3 + $0x35c] sm:$0xf]
    %v272 = vld [vmem:[#allocation3 + $0x360] sm:$0xf]
    %v273 = vld [vmem:[#allocation3 + $0x364] sm:$0xf]
    %v274 = vld [vmem:[#allocation3 + $0x368] sm:$0xf]
    %v275 = vld [vmem:[#allocation3 + $0x36c] sm:$0xf]
    %v276 = vld [vmem:[#allocation3 + $0x370] sm:$0xf]
    %v277 = vld [vmem:[#allocation3 + $0x374] sm:$0xf]
    %v278 = vld [vmem:[#allocation3 + $0x378] sm:$0xf]
    %v279 = vld [vmem:[#allocation3 + $0x37c] sm:$0xf]
    %v280 = vld [vmem:[#allocation3 + $0x380] sm:$0xf]
    %v281 = vld [vmem:[#allocation3 + $0x384] sm:$0xf]
    %v282 = vld [vmem:[#allocation3 + $0x388] sm:$0xf]
    %v283 = vld [vmem:[#allocation3 + $0x38c] sm:$0xf]
    %v284 = vld [vmem:[#allocation3 + $0x390] sm:$0xf]
    %v285 = vld [vmem:[#allocation3 + $0x394] sm:$0xf]
    %v286 = vld [vmem:[#allocation3 + $0x398] sm:$0xf]
    %v287 = vld [vmem:[#allocation3 + $0x39c] sm:$0xf]
    %v288 = vld [vmem:[#allocation3 + $0x3a0] sm:$0xf]
    %v289 = vld [vmem:[#allocation3 + $0x3a4] sm:$0xf]
    %v290 = vld [vmem:[#allocation3 + $0x3a8] sm:$0xf]
    %v291 = vld [vmem:[#allocation3 + $0x3ac] sm:$0xf]
    %v292 = vld [vmem:[#allocation3 + $0x3b0] sm:$0xf]
    %v293 = vld [vmem:[#allocation3 + $0x3b4] sm:$0xf]
    %v294 = vld [vmem:[#allocation3 + $0x3b8] sm:$0xf]
    %v295 = vld [vmem:[#allocation3 + $0x3bc] sm:$0xf]
    %v296 = vld [vmem:[#allocation3 + $0x3c0] sm:$0xf]
    %v297 = vld [vmem:[#allocation3 + $0x3c4] sm:$0xf]
    %v298 = vld [vmem:[#allocation3 + $0x3c8] sm:$0xf]
    %v299 = vld [vmem:[#allocation3 + $0x3cc] sm:$0xf]
    %v300 = vld [vmem:[#allocation3 + $0x3d0] sm:$0xf]
    %v301 = vld [vmem:[#allocation3 + $0x3d4] sm:$0xf]
    %v302 = vld [vmem:[#allocation3 + $0x3d8] sm:$0xf]
    %v303 = vld [vmem:[#allocation3 + $0x3dc] sm:$0xf]
    %v304 = vld [vmem:[#allocation3 + $0x3e0] sm:$0xf]
    %v305 = vld [vmem:[#allocation3 + $0x3e4] sm:$0xf]
    %v306 = vld [vmem:[#allocation3 + $0x3e8] sm:$0xf]
    %v307 = vld [vmem:[#allocation3 + $0x3ec] sm:$0xf]
    %v308 = vld [vmem:[#allocation3 + $0x3f0] sm:$0xf]
    %v309 = vld [vmem:[#allocation3 + $0x3f4] sm:$0xf]
    %v310 = vld [vmem:[#allocation3 + $0x3f8] sm:$0xf]
    %v311 = vld [vmem:[#allocation3 + $0x3fc] sm:$0xf]
    %v312 = vld [vmem:[#allocation3 + $0x400] sm:$0xf]
    %v313 = vld [vmem:[#allocation3 + $0x404] sm:$0xf]
    %v314 = vld [vmem:[#allocation3 + $0x408] sm:$0xf]
    %v315 = vld [vmem:[#allocation3 + $0x40c] sm:$0xf]
    %v316 = vld [vmem:[#allocation3 + $0x410] sm:$0xf]
    %v317 = vld [vmem:[#allocation3 + $0x414] sm:$0xf]
    %v318 = vld [vmem:[#allocation3 + $0x418] sm:$0xf]
    %v319 = vld [vmem:[#allocation3 + $0x41c] sm:$0xf]
    %v320 = vld [vmem:[#allocation3 + $0x420] sm:$0xf]
    %v321 = vld [vmem:[#allocation3 + $0x424] sm:$0xf]
    %v322 = vld [vmem:[#allocation3 + $0x428] sm:$0xf]
    %v323 = vld [vmem:[#allocation3 + $0x42c] sm:$0xf]
    %v324 = vld [vmem:[#allocation3 + $0x430] sm:$0xf]
    %v325 = vld [vmem:[#allocation3 + $0x434] sm:$0xf]
    %v326 = vld [vmem:[#allocation3 + $0x438] sm:$0xf]
    %v327 = vld [vmem:[#allocation3 + $0x43c] sm:$0xf]
    %v328 = vld [vmem:[#allocation3 + $0x440] sm:$0xf]
    %v329 = vld [vmem:[#allocation3 + $0x444] sm:$0xf]
    %v330 = vld [vmem:[#allocation3 + $0x448] sm:$0xf]
    %v331 = vld [vmem:[#allocation3 + $0x44c] sm:$0xf]
    %v332 = vld [vmem:[#allocation3 + $0x450] sm:$0xf]
    %v333 = vld [vmem:[#allocation3 + $0x454] sm:$0xf]
    %v334 = vld [vmem:[#allocation3 + $0x458] sm:$0xf]
    %v335 = vld [vmem:[#allocation3 + $0x45c] sm:$0xf]
    %v336 = vld [vmem:[#allocation3 + $0x460] sm:$0xf]
    %v337 = vld [vmem:[#allocation3 + $0x464] sm:$0xf]
    %v338 = vld [vmem:[#allocation3 + $0x468] sm:$0xf]
    %v339 = vld [vmem:[#allocation3 + $0x46c] sm:$0xf]
    %v340 = vld [vmem:[#allocation3 + $0x470] sm:$0xf]
    %v341 = vld [vmem:[#allocation3 + $0x474] sm:$0xf]
    %v342 = vld [vmem:[#allocation3 + $0x478] sm:$0xf]
    %v343 = vld [vmem:[#allocation3 + $0x47c] sm:$0xf]
    %v344 = vld [vmem:[#allocation3 + $0x480] sm:$0xf]
    %v345 = vld [vmem:[#allocation3 + $0x484] sm:$0xf]
    %v346 = vld [vmem:[#allocation3 + $0x488] sm:$0xf]
    %v347 = vld [vmem:[#allocation3 + $0x48c] sm:$0xf]
    %v348 = vld [vmem:[#allocation3 + $0x490] sm:$0xf]
    %v349 = vld [vmem:[#allocation3 + $0x494] sm:$0xf]
    %v350 = vld [vmem:[#allocation3 + $0x498] sm:$0xf]
    %v351 = vld [vmem:[#allocation3 + $0x49c] sm:$0xf]
    %v352 = vld [vmem:[#allocation3 + $0x4a0] sm:$0xf]
    %v353 = vld [vmem:[#allocation3 + $0x4a4] sm:$0xf]
    %v354 = vld [vmem:[#allocation3 + $0x4a8] sm:$0xf]
    %v355 = vld [vmem:[#allocation3 + $0x4ac] sm:$0xf]
    %v356 = vld [vmem:[#allocation3 + $0x4b0] sm:$0xf]
    %v357 = vld [vmem:[#allocation3 + $0x4b4] sm:$0xf]
    %v358 = vld [vmem:[#allocation3 + $0x4b8] sm:$0xf]
    %v359 = vld [vmem:[#allocation3 + $0x4bc] sm:$0xf]
    %v360 = vld [vmem:[#allocation3 + $0x4c0] sm:$0xf]
    %v361 = vld [vmem:[#allocation3 + $0x4c4] sm:$0xf]
    %v362 = vld [vmem:[#allocation3 + $0x4c8] sm:$0xf]
    %v363 = vld [vmem:[#allocation3 + $0x4cc] sm:$0xf]
    %v364 = vld [vmem:[#allocation3 + $0x4d0] sm:$0xf]
    %v365 = vld [vmem:[#allocation3 + $0x4d4] sm:$0xf]
    %v366 = vld [vmem:[#allocation3 + $0x4d8] sm:$0xf]
    %v367 = vld [vmem:[#allocation3 + $0x4dc] sm:$0xf]
    %v368 = vld [vmem:[#allocation3 + $0x4e0] sm:$0xf]
    %v369 = vld [vmem:[#allocation3 + $0x4e4] sm:$0xf]
    %v370 = vld [vmem:[#allocation3 + $0x4e8] sm:$0xf]
    %v371 = vld [vmem:[#allocation3 + $0x4ec] sm:$0xf]
    %v372 = vld [vmem:[#allocation3 + $0x4f0] sm:$0xf]
    %v373 = vld [vmem:[#allocation3 + $0x4f4] sm:$0xf]
    %v374 = vld [vmem:[#allocation3 + $0x4f8] sm:$0xf]
    %v375 = vld [vmem:[#allocation3 + $0x4fc] sm:$0xf]
    %v376 = vld [vmem:[#allocation3 + $0x500] sm:$0xf]
    %v377 = vld [vmem:[#allocation3 + $0x504] sm:$0xf]
    %v378 = vld [vmem:[#allocation3 + $0x508] sm:$0xf]
    %v379 = vld [vmem:[#allocation3 + $0x50c] sm:$0xf]
    %v380 = vld [vmem:[#allocation3 + $0x510] sm:$0xf]
    %v381 = vld [vmem:[#allocation3 + $0x514] sm:$0xf]
    %v382 = vld [vmem:[#allocation3 + $0x518] sm:$0xf]
    %v383 = vld [vmem:[#allocation3 + $0x51c] sm:$0xf]
    %v384 = vld [vmem:[#allocation3 + $0x520] sm:$0xf]
    %v385 = vld [vmem:[#allocation3 + $0x524] sm:$0xf]
    %v386 = vld [vmem:[#allocation3 + $0x528] sm:$0xf]
    %v387 = vld [vmem:[#allocation3 + $0x52c] sm:$0xf]
    %v388 = vld [vmem:[#allocation3 + $0x530] sm:$0xf]
    %v389 = vld [vmem:[#allocation3 + $0x534] sm:$0xf]
    %v390 = vld [vmem:[#allocation3 + $0x538] sm:$0xf]
    %v391 = vld [vmem:[#allocation3 + $0x53c] sm:$0xf]
    %v392 = vld [vmem:[#allocation3 + $0x540] sm:$0xf]
    %v393 = vld [vmem:[#allocation3 + $0x544] sm:$0xf]
    %v394 = vld [vmem:[#allocation3 + $0x548] sm:$0xf]
    %v395 = vld [vmem:[#allocation3 + $0x54c] sm:$0xf]
    %v396 = vld [vmem:[#allocation3 + $0x550] sm:$0xf]
    %v397 = vld [vmem:[#allocation3 + $0x554] sm:$0xf]
    %v398 = vld [vmem:[#allocation3 + $0x558] sm:$0xf]
    %v399 = vld [vmem:[#allocation3 + $0x55c] sm:$0xf]
    %v400 = vld [vmem:[#allocation3 + $0x560] sm:$0xf]
    %v401 = vld [vmem:[#allocation3 + $0x564] sm:$0xf]
    %v402 = vld [vmem:[#allocation3 + $0x568] sm:$0xf]
    %v403 = vld [vmem:[#allocation3 + $0x56c] sm:$0xf]
    %v404 = vld [vmem:[#allocation3 + $0x570] sm:$0xf]
    %v405 = vld [vmem:[#allocation3 + $0x574] sm:$0xf]
    %v406 = vld [vmem:[#allocation3 + $0x578] sm:$0xf]
    %v407 = vld [vmem:[#allocation3 + $0x57c] sm:$0xf]
    %v408 = vld [vmem:[#allocation3 + $0x580] sm:$0xf]
    %v409 = vld [vmem:[#allocation3 + $0x584] sm:$0xf]
    %v410 = vld [vmem:[#allocation3 + $0x588] sm:$0xf]
    %v411 = vld [vmem:[#allocation3 + $0x58c] sm:$0xf]
    %v412 = vld [vmem:[#allocation3 + $0x590] sm:$0xf]
    %v413 = vld [vmem:[#allocation3 + $0x594] sm:$0xf]
    %v414 = vld [vmem:[#allocation3 + $0x598] sm:$0xf]
    %v415 = vld [vmem:[#allocation3 + $0x59c] sm:$0xf]
    %v416 = vld [vmem:[#allocation3 + $0x5a0] sm:$0xf]
    %v417 = vld [vmem:[#allocation3 + $0x5a4] sm:$0xf]
    %v418 = vld [vmem:[#allocation3 + $0x5a8] sm:$0xf]
    %v419 = vld [vmem:[#allocation3 + $0x5ac] sm:$0xf]
    %v420 = vld [vmem:[#allocation3 + $0x5b0] sm:$0xf]
    %v421 = vld [vmem:[#allocation3 + $0x5b4] sm:$0xf]
    %v422 = vld [vmem:[#allocation3 + $0x5b8] sm:$0xf]
    %v423 = vld [vmem:[#allocation3 + $0x5bc] sm:$0xf]
    %v424 = vld [vmem:[#allocation3 + $0x5c0] sm:$0xf]
    %v425 = vld [vmem:[#allocation3 + $0x5c4] sm:$0xf]
    %v426 = vld [vmem:[#allocation3 + $0x5c8] sm:$0xf]
    %v427 = vld [vmem:[#allocation3 + $0x5cc] sm:$0xf]
    %v428 = vld [vmem:[#allocation3 + $0x5d0] sm:$0xf]
    %v429 = vld [vmem:[#allocation3 + $0x5d4] sm:$0xf]
    %v430 = vld [vmem:[#allocation3 + $0x5d8] sm:$0xf]
    %v431 = vld [vmem:[#allocation3 + $0x5dc] sm:$0xf]
    %v432 = vld [vmem:[#allocation3 + $0x5e0] sm:$0xf]
    %v433 = vld [vmem:[#allocation3 + $0x5e4] sm:$0xf]
    %v434 = vld [vmem:[#allocation3 + $0x5e8] sm:$0xf]
    %v435 = vld [vmem:[#allocation3 + $0x5ec] sm:$0xf]
    %v436 = vld [vmem:[#allocation3 + $0x5f0] sm:$0xf]
    %v437 = vld [vmem:[#allocation3 + $0x5f4] sm:$0xf]
    %v438 = vld [vmem:[#allocation3 + $0x5f8] sm:$0xf]
    %v439 = vld [vmem:[#allocation3 + $0x5fc] sm:$0xf]
    %v440 = vld [vmem:[#allocation3 + $0x600] sm:$0xf]
    %v441 = vld [vmem:[#allocation3 + $0x604] sm:$0xf]
    %v442 = vld [vmem:[#allocation3 + $0x608] sm:$0xf]
    %v443 = vld [vmem:[#allocation3 + $0x60c] sm:$0xf]
    %v444 = vld [vmem:[#allocation3 + $0x610] sm:$0xf]
    %v445 = vld [vmem:[#allocation3 + $0x614] sm:$0xf]
    %v446 = vld [vmem:[#allocation3 + $0x618] sm:$0xf]
    %v447 = vld [vmem:[#allocation3 + $0x61c] sm:$0xf]
    %v448 = vld [vmem:[#allocation3 + $0x620] sm:$0xf]
    %v449 = vld [vmem:[#allocation3 + $0x624] sm:$0xf]
    %v450 = vld [vmem:[#allocation3 + $0x628] sm:$0xf]
    %v451 = vld [vmem:[#allocation3 + $0x62c] sm:$0xf]
    %v452 = vld [vmem:[#allocation3 + $0x630] sm:$0xf]
    %v453 = vld [vmem:[#allocation3 + $0x634] sm:$0xf]
    %v454 = vld [vmem:[#allocation3 + $0x638] sm:$0xf]
    %v455 = vld [vmem:[#allocation3 + $0x63c] sm:$0xf]
    %v456 = vld [vmem:[#allocation3 + $0x640] sm:$0xf]
    %v457 = vld [vmem:[#allocation3 + $0x644] sm:$0xf]
    %v458 = vld [vmem:[#allocation3 + $0x648] sm:$0xf]
    %v459 = vld [vmem:[#allocation3 + $0x64c] sm:$0xf]
    %v460 = vld [vmem:[#allocation3 + $0x650] sm:$0xf]
    %v461 = vld [vmem:[#allocation3 + $0x654] sm:$0xf]
    %v462 = vld [vmem:[#allocation3 + $0x658] sm:$0xf]
    %v463 = vld [vmem:[#allocation3 + $0x65c] sm:$0xf]
    %v464 = vld [vmem:[#allocation3 + $0x660] sm:$0xf]
    %v465 = vld [vmem:[#allocation3 + $0x664] sm:$0xf]
    %v466 = vld [vmem:[#allocation3 + $0x668] sm:$0xf]
    %v467 = vld [vmem:[#allocation3 + $0x66c] sm:$0xf]
    %v468 = vld [vmem:[#allocation3 + $0x670] sm:$0xf]
    %v469 = vld [vmem:[#allocation3 + $0x674] sm:$0xf]
    %v470 = vld [vmem:[#allocation3 + $0x678] sm:$0xf]
    %v471 = vld [vmem:[#allocation3 + $0x67c] sm:$0xf]
    %v472 = vld [vmem:[#allocation3 + $0x680] sm:$0xf]
    %v473 = vld [vmem:[#allocation3 + $0x684] sm:$0xf]
    %v474 = vld [vmem:[#allocation3 + $0x688] sm:$0xf]
    %v475 = vld [vmem:[#allocation3 + $0x68c] sm:$0xf]
    %v476 = vld [vmem:[#allocation3 + $0x690] sm:$0xf]
    %v477 = vld [vmem:[#allocation3 + $0x694] sm:$0xf]
    %v478 = vld [vmem:[#allocation3 + $0x698] sm:$0xf]
    %v479 = vld [vmem:[#allocation3 + $0x69c] sm:$0xf]
    %v480 = vld [vmem:[#allocation3 + $0x6a0] sm:$0xf]
    %v481 = vld [vmem:[#allocation3 + $0x6a4] sm:$0xf]
    %v482 = vld [vmem:[#allocation3 + $0x6a8] sm:$0xf]
    %v483 = vld [vmem:[#allocation3 + $0x6ac] sm:$0xf]
    %v484 = vld [vmem:[#allocation3 + $0x6b0] sm:$0xf]
    %v485 = vld [vmem:[#allocation3 + $0x6b4] sm:$0xf]
    %v486 = vld [vmem:[#allocation3 + $0x6b8] sm:$0xf]
    %v487 = vld [vmem:[#allocation3 + $0x6bc] sm:$0xf]
    %v488 = vld [vmem:[#allocation3 + $0x6c0] sm:$0xf]
    %v489 = vld [vmem:[#allocation3 + $0x6c4] sm:$0xf]
    %v490 = vld [vmem:[#allocation3 + $0x6c8] sm:$0xf]
    %v491 = vld [vmem:[#allocation3 + $0x6cc] sm:$0xf]
    %v492 = vld [vmem:[#allocation3 + $0x6d0] sm:$0xf]
    %v493 = vld [vmem:[#allocation3 + $0x6d4] sm:$0xf]
    %v494 = vld [vmem:[#allocation3 + $0x6d8] sm:$0xf]
    %v495 = vld [vmem:[#allocation3 + $0x6dc] sm:$0xf]
    %v496 = vld [vmem:[#allocation3 + $0x6e0] sm:$0xf]
    %v497 = vld [vmem:[#allocation3 + $0x6e4] sm:$0xf]
    %v498 = vld [vmem:[#allocation3 + $0x6e8] sm:$0xf]
    %v499 = vld [vmem:[#allocation3 + $0x6ec] sm:$0xf]
    %v500 = vld [vmem:[#allocation3 + $0x6f0] sm:$0xf]
    %v501 = vld [vmem:[#allocation3 + $0x6f4] sm:$0xf]
    %v502 = vld [vmem:[#allocation3 + $0x6f8] sm:$0xf]
    %v503 = vld [vmem:[#allocation3 + $0x6fc] sm:$0xf]
    %v504 = vld [vmem:[#allocation3 + $0x700] sm:$0xf]
    %v505 = vld [vmem:[#allocation3 + $0x704] sm:$0xf]
    %v506 = vld [vmem:[#allocation3 + $0x708] sm:$0xf]
    %v507 = vld [vmem:[#allocation3 + $0x70c] sm:$0xf]
    %v508 = vld [vmem:[#allocation3 + $0x710] sm:$0xf]
    %v509 = vld [vmem:[#allocation3 + $0x714] sm:$0xf]
    %v510 = vld [vmem:[#allocation3 + $0x718] sm:$0xf]
    %v511 = vld [vmem:[#allocation3 + $0x71c] sm:$0xf]
    %v512 = vld [vmem:[#allocation3 + $0x720] sm:$0xf]
    %v513 = vld [vmem:[#allocation3 + $0x724] sm:$0xf]
    %v514 = vld [vmem:[#allocation3 + $0x728] sm:$0xf]
    %v515 = vld [vmem:[#allocation3 + $0x72c] sm:$0xf]
    %v516 = vld [vmem:[#allocation3 + $0x730] sm:$0xf]
    %v517 = vld [vmem:[#allocation3 + $0x734] sm:$0xf]
    %v518 = vld [vmem:[#allocation3 + $0x738] sm:$0xf]
    %v519 = vld [vmem:[#allocation3 + $0x73c] sm:$0xf]
    %v520 = vld [vmem:[#allocation3 + $0x740] sm:$0xf]
    %v521 = vld [vmem:[#allocation3 + $0x744] sm:$0xf]
    %v522 = vld [vmem:[#allocation3 + $0x748] sm:$0xf]
    %v523 = vld [vmem:[#allocation3 + $0x74c] sm:$0xf]
    %v524 = vld [vmem:[#allocation3 + $0x750] sm:$0xf]
    %v525 = vld [vmem:[#allocation3 + $0x754] sm:$0xf]
    %v526 = vld [vmem:[#allocation3 + $0x758] sm:$0xf]
    %v527 = vld [vmem:[#allocation3 + $0x75c] sm:$0xf]
    %v528 = vld [vmem:[#allocation3 + $0x760] sm:$0xf]
    %v529 = vld [vmem:[#allocation3 + $0x764] sm:$0xf]
    %v530 = vld [vmem:[#allocation3 + $0x768] sm:$0xf]
    %v531 = vld [vmem:[#allocation3 + $0x76c] sm:$0xf]
    %v532 = vld [vmem:[#allocation3 + $0x770] sm:$0xf]
    %v533 = vld [vmem:[#allocation3 + $0x774] sm:$0xf]
    %v534 = vld [vmem:[#allocation3 + $0x778] sm:$0xf]
    %v535 = vld [vmem:[#allocation3 + $0x77c] sm:$0xf]
    %v536 = vld [vmem:[#allocation3 + $0x780] sm:$0xf]
    %v537 = vld [vmem:[#allocation3 + $0x784] sm:$0xf]
    %v538 = vld [vmem:[#allocation3 + $0x788] sm:$0xf]
    %v539 = vld [vmem:[#allocation3 + $0x78c] sm:$0xf]
    %v540 = vld [vmem:[#allocation3 + $0x790] sm:$0xf]
    %v541 = vld [vmem:[#allocation3 + $0x794] sm:$0xf]
    %v542 = vld [vmem:[#allocation3 + $0x798] sm:$0xf]
    %v543 = vld [vmem:[#allocation3 + $0x79c] sm:$0xf]
    %v544 = vld [vmem:[#allocation3 + $0x7a0] sm:$0xf]
    %v545 = vld [vmem:[#allocation3 + $0x7a4] sm:$0xf]
    %v546 = vld [vmem:[#allocation3 + $0x7a8] sm:$0xf]
    %v547 = vld [vmem:[#allocation3 + $0x7ac] sm:$0xf]
    %v548 = vld [vmem:[#allocation3 + $0x7b0] sm:$0xf]
    %v549 = vld [vmem:[#allocation3 + $0x7b4] sm:$0xf]
    %v550 = vld [vmem:[#allocation3 + $0x7b8] sm:$0xf]
    %v551 = vld [vmem:[#allocation3 + $0x7bc] sm:$0xf]
    %v552 = vld [vmem:[#allocation3 + $0x7c0] sm:$0xf]
    %v553 = vld [vmem:[#allocation3 + $0x7c4] sm:$0xf]
    %v554 = vld [vmem:[#allocation3 + $0x7c8] sm:$0xf]
    %v555 = vld [vmem:[#allocation3 + $0x7cc] sm:$0xf]
    %v556 = vld [vmem:[#allocation3 + $0x7d0] sm:$0xf]
    %v557 = vld [vmem:[#allocation3 + $0x7d4] sm:$0xf]
    %v558 = vld [vmem:[#allocation3 + $0x7d8] sm:$0xf]
    %v559 = vld [vmem:[#allocation3 + $0x7dc] sm:$0xf]
    %v560 = vld [vmem:[#allocation3 + $0x7e0] sm:$0xf]
    %v561 = vld [vmem:[#allocation3 + $0x7e4] sm:$0xf]
    %v562 = vld [vmem:[#allocation3 + $0x7e8] sm:$0xf]
    %v563 = vld [vmem:[#allocation3 + $0x7ec] sm:$0xf]
    %v564 = vld [vmem:[#allocation3 + $0x7f0] sm:$0xf]
    %v565 = vld [vmem:[#allocation3 + $0x7f4] sm:$0xf]
    %v566 = vld [vmem:[#allocation3 + $0x7f8] sm:$0xf]
    %v567 = vld [vmem:[#allocation3 + $0x7fc] sm:$0xf]
    %v568 = vld [vmem:[#allocation3 + $0x800] sm:$0xf]
    %v569 = vld [vmem:[#allocation3 + $0x804] sm:$0xf]
    %v570 = vld [vmem:[#allocation3 + $0x808] sm:$0xf]
    %v571 = vld [vmem:[#allocation3 + $0x80c] sm:$0xf]
    %v572 = vld [vmem:[#allocation3 + $0x810] sm:$0xf]
    %v573 = vld [vmem:[#allocation3 + $0x814] sm:$0xf]
    %v574 = vld [vmem:[#allocation3 + $0x818] sm:$0xf]
    %v575 = vld [vmem:[#allocation3 + $0x81c] sm:$0xf]
    %v576 = vld [vmem:[#allocation3 + $0x820] sm:$0xf]
    %v577 = vld [vmem:[#allocation3 + $0x824] sm:$0xf]
    %v578 = vld [vmem:[#allocation3 + $0x828] sm:$0xf]
    %v579 = vld [vmem:[#allocation3 + $0x82c] sm:$0xf]
    %v580 = vld [vmem:[#allocation3 + $0x830] sm:$0xf]
    %v581 = vld [vmem:[#allocation3 + $0x834] sm:$0xf]
    %v582 = vld [vmem:[#allocation3 + $0x838] sm:$0xf]
    %v583 = vld [vmem:[#allocation3 + $0x83c] sm:$0xf]
    %v584 = vld [vmem:[#allocation3 + $0x840] sm:$0xf]
    %v585 = vld [vmem:[#allocation3 + $0x844] sm:$0xf]
    %v586 = vld [vmem:[#allocation3 + $0x848] sm:$0xf]
    %v587 = vld [vmem:[#allocation3 + $0x84c] sm:$0xf]
    %v588 = vld [vmem:[#allocation3 + $0x850] sm:$0xf]
    %v589 = vld [vmem:[#allocation3 + $0x854] sm:$0xf]
    %v590 = vld [vmem:[#allocation3 + $0x858] sm:$0xf]
    %v591 = vld [vmem:[#allocation3 + $0x85c] sm:$0xf]
    %v592 = vld [vmem:[#allocation3 + $0x860] sm:$0xf]
    %v593 = vld [vmem:[#allocation3 + $0x864] sm:$0xf]
    %v594 = vld [vmem:[#allocation3 + $0x868] sm:$0xf]
    %v595 = vld [vmem:[#allocation3 + $0x86c] sm:$0xf]
    %v596 = vld [vmem:[#allocation3 + $0x870] sm:$0xf]
    %v597 = vld [vmem:[#allocation3 + $0x874] sm:$0xf]
    %v598 = vld [vmem:[#allocation3 + $0x878] sm:$0xf]
    %v599 = vld [vmem:[#allocation3 + $0x87c] sm:$0xf]
    %v600 = vld [vmem:[#allocation3 + $0x880] sm:$0xf]
    %v601 = vld [vmem:[#allocation3 + $0x884] sm:$0xf]
    %v602 = vld [vmem:[#allocation3 + $0x888] sm:$0xf]
    %v603 = vld [vmem:[#allocation3 + $0x88c] sm:$0xf]
    %v604 = vld [vmem:[#allocation3 + $0x890] sm:$0xf]
    %v605 = vld [vmem:[#allocation3 + $0x894] sm:$0xf]
    %v606 = vld [vmem:[#allocation3 + $0x898] sm:$0xf]
    %v607 = vld [vmem:[#allocation3 + $0x89c] sm:$0xf]
    %v608 = vld [vmem:[#allocation3 + $0x8a0] sm:$0xf]
    %v609 = vld [vmem:[#allocation3 + $0x8a4] sm:$0xf]
    %v610 = vld [vmem:[#allocation3 + $0x8a8] sm:$0xf]
    %v611 = vld [vmem:[#allocation3 + $0x8ac] sm:$0xf]
    %v612 = vld [vmem:[#allocation3 + $0x8b0] sm:$0xf]
    %v613 = vld [vmem:[#allocation3 + $0x8b4] sm:$0xf]
    %v614 = vld [vmem:[#allocation3 + $0x8b8] sm:$0xf]
    %v615 = vld [vmem:[#allocation3 + $0x8bc] sm:$0xf]
    %v616 = vld [vmem:[#allocation3 + $0x8c0] sm:$0xf]
    %v617 = vld [vmem:[#allocation3 + $0x8c4] sm:$0xf]
    %v618 = vld [vmem:[#allocation3 + $0x8c8] sm:$0xf]
    %v619 = vld [vmem:[#allocation3 + $0x8cc] sm:$0xf]
    %v620 = vld [vmem:[#allocation3 + $0x8d0] sm:$0xf]
    %v621 = vld [vmem:[#allocation3 + $0x8d4] sm:$0xf]
    %v622 = vld [vmem:[#allocation3 + $0x8d8] sm:$0xf]
    %v623 = vld [vmem:[#allocation3 + $0x8dc] sm:$0xf]
    %v624 = vld [vmem:[#allocation3 + $0x8e0] sm:$0xf]
    %v625 = vld [vmem:[#allocation3 + $0x8e4] sm:$0xf]
    %v626 = vld [vmem:[#allocation3 + $0x8e8] sm:$0xf]
    %v627 = vld [vmem:[#allocation3 + $0x8ec] sm:$0xf]
    %v628 = vld [vmem:[#allocation3 + $0x8f0] sm:$0xf]
    %v629 = vld [vmem:[#allocation3 + $0x8f4] sm:$0xf]
    %v630 = vld [vmem:[#allocation3 + $0x8f8] sm:$0xf]
    %v631 = vld [vmem:[#allocation3 + $0x8fc] sm:$0xf]
    %v632 = vld [vmem:[#allocation3 + $0x900] sm:$0xf]
    %v633 = vld [vmem:[#allocation3 + $0x904] sm:$0xf]
    %v634 = vld [vmem:[#allocation3 + $0x908] sm:$0xf]
    %v635 = vld [vmem:[#allocation3 + $0x90c] sm:$0xf]
    %v636 = vld [vmem:[#allocation3 + $0x910] sm:$0xf]
    %v637 = vld [vmem:[#allocation3 + $0x914] sm:$0xf]
    %v638 = vld [vmem:[#allocation3 + $0x918] sm:$0xf]
    %v639 = vld [vmem:[#allocation3 + $0x91c] sm:$0xf]
    %v640 = vld [vmem:[#allocation3 + $0x920] sm:$0xf]
    %v641 = vld [vmem:[#allocation3 + $0x924] sm:$0xf]
    %v642 = vld [vmem:[#allocation3 + $0x928] sm:$0xf]
    %v643 = vld [vmem:[#allocation3 + $0x92c] sm:$0xf]
    %v644 = vld [vmem:[#allocation3 + $0x930] sm:$0xf]
    %v645 = vld [vmem:[#allocation3 + $0x934] sm:$0xf]
    %v646 = vld [vmem:[#allocation3 + $0x938] sm:$0xf]
    %v647 = vld [vmem:[#allocation3 + $0x93c] sm:$0xf]
    %v648 = vld [vmem:[#allocation3 + $0x940] sm:$0xf]
    %v649 = vld [vmem:[#allocation3 + $0x944] sm:$0xf]
    %v650 = vld [vmem:[#allocation3 + $0x948] sm:$0xf]
    %v651 = vld [vmem:[#allocation3 + $0x94c] sm:$0xf]
    %v652 = vld [vmem:[#allocation3 + $0x950] sm:$0xf]
    %v653 = vld [vmem:[#allocation3 + $0x954] sm:$0xf]
    %v654 = vld [vmem:[#allocation3 + $0x958] sm:$0xf]
    %v655 = vld [vmem:[#allocation3 + $0x95c] sm:$0xf]
    %v656 = vld [vmem:[#allocation3 + $0x960] sm:$0xf]
    %v657 = vld [vmem:[#allocation3 + $0x964] sm:$0xf]
    %v658 = vld [vmem:[#allocation3 + $0x968] sm:$0xf]
    %v659 = vld [vmem:[#allocation3 + $0x96c] sm:$0xf]
    %v660 = vld [vmem:[#allocation3 + $0x970] sm:$0xf]
    %v661 = vld [vmem:[#allocation3 + $0x974] sm:$0xf]
    %v662 = vld [vmem:[#allocation3 + $0x978] sm:$0xf]
    %v663 = vld [vmem:[#allocation3 + $0x97c] sm:$0xf]
    %v664 = vld [vmem:[#allocation3 + $0x980] sm:$0xf]
    %v665 = vld [vmem:[#allocation3 + $0x984] sm:$0xf]
    %v666 = vld [vmem:[#allocation3 + $0x988] sm:$0xf]
    %v667 = vld [vmem:[#allocation3 + $0x98c] sm:$0xf]
    %v668 = vld [vmem:[#allocation3 + $0x990] sm:$0xf]
    %v669 = vld [vmem:[#allocation3 + $0x994] sm:$0xf]
    %v670 = vld [vmem:[#allocation3 + $0x998] sm:$0xf]
    %v671 = vld [vmem:[#allocation3 + $0x99c] sm:$0xf]
    %v672 = vld [vmem:[#allocation3 + $0x9a0] sm:$0xf]
    %v673 = vld [vmem:[#allocation3 + $0x9a4] sm:$0xf]
    %v674 = vld [vmem:[#allocation3 + $0x9a8] sm:$0xf]
    %v675 = vld [vmem:[#allocation3 + $0x9ac] sm:$0xf]
    %v676 = vld [vmem:[#allocation3 + $0x9b0] sm:$0xf]
    %v677 = vld [vmem:[#allocation3 + $0x9b4] sm:$0xf]
    %v678 = vld [vmem:[#allocation3 + $0x9b8] sm:$0xf]
    %v679 = vld [vmem:[#allocation3 + $0x9bc] sm:$0xf]
    %v680 = vld [vmem:[#allocation3 + $0x9c0] sm:$0xf]
    %v681 = vld [vmem:[#allocation3 + $0x9c4] sm:$0xf]
    %v682 = vld [vmem:[#allocation3 + $0x9c8] sm:$0xf]
    %v683 = vld [vmem:[#allocation3 + $0x9cc] sm:$0xf]
    %v684 = vld [vmem:[#allocation3 + $0x9d0] sm:$0xf]
    %v685 = vld [vmem:[#allocation3 + $0x9d4] sm:$0xf]
    %v686 = vld [vmem:[#allocation3 + $0x9d8] sm:$0xf]
    %v687 = vld [vmem:[#allocation3 + $0x9dc] sm:$0xf]
    %v688 = vld [vmem:[#allocation3 + $0x9e0] sm:$0xf]
    %v689 = vld [vmem:[#allocation3 + $0x9e4] sm:$0xf]
    %v690 = vld [vmem:[#allocation3 + $0x9e8] sm:$0xf]
    %v691 = vld [vmem:[#allocation3 + $0x9ec] sm:$0xf]
    %v692 = vld [vmem:[#allocation3 + $0x9f0] sm:$0xf]
    %v693 = vld [vmem:[#allocation3 + $0x9f4] sm:$0xf]
    %v694 = vld [vmem:[#allocation3 + $0x9f8] sm:$0xf]
    %v695 = vld [vmem:[#allocation3 + $0x9fc] sm:$0xf]
    %v696 = vld [vmem:[#allocation3 + $0xa00] sm:$0xf]
    %v697 = vld [vmem:[#allocation3 + $0xa04] sm:$0xf]
    %v698 = vld [vmem:[#allocation3 + $0xa08] sm:$0xf]
    %v699 = vld [vmem:[#allocation3 + $0xa0c] sm:$0xf]
    %v700 = vld [vmem:[#allocation3 + $0xa10] sm:$0xf]
    %v701 = vld [vmem:[#allocation3 + $0xa14] sm:$0xf]
    %v702 = vld [vmem:[#allocation3 + $0xa18] sm:$0xf]
    %v703 = vld [vmem:[#allocation3 + $0xa1c] sm:$0xf]
    %v704 = vld [vmem:[#allocation3 + $0xa20] sm:$0xf]
    %v705 = vld [vmem:[#allocation3 + $0xa24] sm:$0xf]
    %v706 = vld [vmem:[#allocation3 + $0xa28] sm:$0xf]
    %v707 = vld [vmem:[#allocation3 + $0xa2c] sm:$0xf]
    %v708 = vld [vmem:[#allocation3 + $0xa30] sm:$0xf]
    %v709 = vld [vmem:[#allocation3 + $0xa34] sm:$0xf]
    %v710 = vld [vmem:[#allocation3 + $0xa38] sm:$0xf]
    %v711 = vld [vmem:[#allocation3 + $0xa3c] sm:$0xf]
    %v712 = vld [vmem:[#allocation3 + $0xa40] sm:$0xf]
    %v713 = vld [vmem:[#allocation3 + $0xa44] sm:$0xf]
    %v714 = vld [vmem:[#allocation3 + $0xa48] sm:$0xf]
    %v715 = vld [vmem:[#allocation3 + $0xa4c] sm:$0xf]
    %v716 = vld [vmem:[#allocation3 + $0xa50] sm:$0xf]
    %v717 = vld [vmem:[#allocation3 + $0xa54] sm:$0xf]
    %v718 = vld [vmem:[#allocation3 + $0xa58] sm:$0xf]
    %v719 = vld [vmem:[#allocation3 + $0xa5c] sm:$0xf]
    %v720 = vld [vmem:[#allocation3 + $0xa60] sm:$0xf]
    %v721 = vld [vmem:[#allocation3 + $0xa64] sm:$0xf]
    %v722 = vld [vmem:[#allocation3 + $0xa68] sm:$0xf]
    %v723 = vld [vmem:[#allocation3 + $0xa6c] sm:$0xf]
    %v724 = vld [vmem:[#allocation3 + $0xa70] sm:$0xf]
    %v725 = vld [vmem:[#allocation3 + $0xa74] sm:$0xf]
    %v726 = vld [vmem:[#allocation3 + $0xa78] sm:$0xf]
    %v727 = vld [vmem:[#allocation3 + $0xa7c] sm:$0xf]
    %v728 = vld [vmem:[#allocation3 + $0xa80] sm:$0xf]
    %v729 = vld [vmem:[#allocation3 + $0xa84] sm:$0xf]
    %v730 = vld [vmem:[#allocation3 + $0xa88] sm:$0xf]
    %v731 = vld [vmem:[#allocation3 + $0xa8c] sm:$0xf]
    %v732 = vld [vmem:[#allocation3 + $0xa90] sm:$0xf]
    %v733 = vld [vmem:[#allocation3 + $0xa94] sm:$0xf]
    %v734 = vld [vmem:[#allocation3 + $0xa98] sm:$0xf]
    %v735 = vld [vmem:[#allocation3 + $0xa9c] sm:$0xf]
    %v736 = vld [vmem:[#allocation3 + $0xaa0] sm:$0xf]
    %v737 = vld [vmem:[#allocation3 + $0xaa4] sm:$0xf]
    %v738 = vld [vmem:[#allocation3 + $0xaa8] sm:$0xf]
    %v739 = vld [vmem:[#allocation3 + $0xaac] sm:$0xf]
    %v740 = vld [vmem:[#allocation3 + $0xab0] sm:$0xf]
    %v741 = vld [vmem:[#allocation3 + $0xab4] sm:$0xf]
    %v742 = vld [vmem:[#allocation3 + $0xab8] sm:$0xf]
    %v743 = vld [vmem:[#allocation3 + $0xabc] sm:$0xf]
    %v744 = vld [vmem:[#allocation3 + $0xac0] sm:$0xf]
    %v745 = vld [vmem:[#allocation3 + $0xac4] sm:$0xf]
    %v746 = vld [vmem:[#allocation3 + $0xac8] sm:$0xf]
    %v747 = vld [vmem:[#allocation3 + $0xacc] sm:$0xf]
    %v748 = vld [vmem:[#allocation3 + $0xad0] sm:$0xf]
    %v749 = vld [vmem:[#allocation3 + $0xad4] sm:$0xf]
    %v750 = vld [vmem:[#allocation3 + $0xad8] sm:$0xf]
    %v751 = vld [vmem:[#allocation3 + $0xadc] sm:$0xf]
    %v752 = vld [vmem:[#allocation3 + $0xae0] sm:$0xf]
    %v753 = vld [vmem:[#allocation3 + $0xae4] sm:$0xf]
    %v754 = vld [vmem:[#allocation3 + $0xae8] sm:$0xf]
    %v755 = vld [vmem:[#allocation3 + $0xaec] sm:$0xf]
    %v756 = vld [vmem:[#allocation3 + $0xaf0] sm:$0xf]
    %v757 = vld [vmem:[#allocation3 + $0xaf4] sm:$0xf]
    %v758 = vld [vmem:[#allocation3 + $0xaf8] sm:$0xf]
    %v759 = vld [vmem:[#allocation3 + $0xafc] sm:$0xf]
    %v760 = vld [vmem:[#allocation3 + $0xb00] sm:$0xf]
    %v761 = vld [vmem:[#allocation3 + $0xb04] sm:$0xf]
    %v762 = vld [vmem:[#allocation3 + $0xb08] sm:$0xf]
    %v763 = vld [vmem:[#allocation3 + $0xb0c] sm:$0xf]
    %v764 = vld [vmem:[#allocation3 + $0xb10] sm:$0xf]
    %v765 = vld [vmem:[#allocation3 + $0xb14] sm:$0xf]
    %v766 = vld [vmem:[#allocation3 + $0xb18] sm:$0xf]
    %v767 = vld [vmem:[#allocation3 + $0xb1c] sm:$0xf]
    %v768 = vld [vmem:[#allocation3 + $0xb20] sm:$0xf]
    %v769 = vld [vmem:[#allocation3 + $0xb24] sm:$0xf]
    %v770 = vld [vmem:[#allocation3 + $0xb28] sm:$0xf]
    %v771 = vld [vmem:[#allocation3 + $0xb2c] sm:$0xf]
    %v772 = vld [vmem:[#allocation3 + $0xb30] sm:$0xf]
    %v773 = vld [vmem:[#allocation3 + $0xb34] sm:$0xf]
    %v774 = vld [vmem:[#allocation3 + $0xb38] sm:$0xf]
    %v775 = vld [vmem:[#allocation3 + $0xb3c] sm:$0xf]
    %v776 = vld [vmem:[#allocation3 + $0xb40] sm:$0xf]
    %v777 = vld [vmem:[#allocation3 + $0xb44] sm:$0xf]
    %v778 = vld [vmem:[#allocation3 + $0xb48] sm:$0xf]
    %v779 = vld [vmem:[#allocation3 + $0xb4c] sm:$0xf]
    %v780 = vld [vmem:[#allocation3 + $0xb50] sm:$0xf]
    %v781 = vld [vmem:[#allocation3 + $0xb54] sm:$0xf]
    %v782 = vld [vmem:[#allocation3 + $0xb58] sm:$0xf]
    %v783 = vld [vmem:[#allocation3 + $0xb5c] sm:$0xf]
    %v784 = vld [vmem:[#allocation3 + $0xb60] sm:$0xf]
    %v785 = vld [vmem:[#allocation3 + $0xb64] sm:$0xf]
    %v786 = vld [vmem:[#allocation3 + $0xb68] sm:$0xf]
    %v787 = vld [vmem:[#allocation3 + $0xb6c] sm:$0xf]
    %v788 = vld [vmem:[#allocation3 + $0xb70] sm:$0xf]
    %v789 = vld [vmem:[#allocation3 + $0xb74] sm:$0xf]
    %v790 = vld [vmem:[#allocation3 + $0xb78] sm:$0xf]
    %v791 = vld [vmem:[#allocation3 + $0xb7c] sm:$0xf]
    %v792 = vld [vmem:[#allocation3 + $0xb80] sm:$0xf]
    %v793 = vld [vmem:[#allocation3 + $0xb84] sm:$0xf]
    %v794 = vld [vmem:[#allocation3 + $0xb88] sm:$0xf]
    %v795 = vld [vmem:[#allocation3 + $0xb8c] sm:$0xf]
    %v796 = vld [vmem:[#allocation3 + $0xb90] sm:$0xf]
    %v797 = vld [vmem:[#allocation3 + $0xb94] sm:$0xf]
    %v798 = vld [vmem:[#allocation3 + $0xb98] sm:$0xf]
    %v799 = vld [vmem:[#allocation3 + $0xb9c] sm:$0xf]
    %v800 = vld [vmem:[#allocation3 + $0xba0] sm:$0xf]
    %v801 = vld [vmem:[#allocation3 + $0xba4] sm:$0xf]
    %v802 = vld [vmem:[#allocation3 + $0xba8] sm:$0xf]
    %v803 = vld [vmem:[#allocation3 + $0xbac] sm:$0xf]
    %v804 = vld [vmem:[#allocation3 + $0xbb0] sm:$0xf]
    %v805 = vld [vmem:[#allocation3 + $0xbb4] sm:$0xf]
    %v806 = vld [vmem:[#allocation3 + $0xbb8] sm:$0xf]
    %v807 = vld [vmem:[#allocation3 + $0xbbc] sm:$0xf]
    %v808 = vld [vmem:[#allocation3 + $0xbc0] sm:$0xf]
    %v809 = vld [vmem:[#allocation3 + $0xbc4] sm:$0xf]
    %v810 = vld [vmem:[#allocation3 + $0xbc8] sm:$0xf]
    %v811 = vld [vmem:[#allocation3 + $0xbcc] sm:$0xf]
    %v812 = vld [vmem:[#allocation3 + $0xbd0] sm:$0xf]
    %v813 = vld [vmem:[#allocation3 + $0xbd4] sm:$0xf]
    %v814 = vld [vmem:[#allocation3 + $0xbd8] sm:$0xf]
    %v815 = vld [vmem:[#allocation3 + $0xbdc] sm:$0xf]
    %v816 = vld [vmem:[#allocation3 + $0xbe0] sm:$0xf]
    %v817 = vld [vmem:[#allocation3 + $0xbe4] sm:$0xf]
    %v818 = vld [vmem:[#allocation3 + $0xbe8] sm:$0xf]
    %v819 = vld [vmem:[#allocation3 + $0xbec] sm:$0xf]
    %v820 = vld [vmem:[#allocation3 + $0xbf0] sm:$0xf]
    %v821 = vld [vmem:[#allocation3 + $0xbf4] sm:$0xf]
    %v822 = vld [vmem:[#allocation3 + $0xbf8] sm:$0xf]
    %v823 = vld [vmem:[#allocation3 + $0xbfc] sm:$0xf]
    %v824 = vld [vmem:[#allocation3 + $0xc00] sm:$0xf]
    %v825 = vld [vmem:[#allocation3 + $0xc04] sm:$0xf]
    %v826 = vld [vmem:[#allocation3 + $0xc08] sm:$0xf]
    %v827 = vld [vmem:[#allocation3 + $0xc0c] sm:$0xf]
    %v828 = vld [vmem:[#allocation3 + $0xc10] sm:$0xf]
    %v829 = vld [vmem:[#allocation3 + $0xc14] sm:$0xf]
    %v830 = vld [vmem:[#allocation3 + $0xc18] sm:$0xf]
    %v831 = vld [vmem:[#allocation3 + $0xc1c] sm:$0xf]
    %v832 = vld [vmem:[#allocation3 + $0xc20] sm:$0xf]
    %v833 = vld [vmem:[#allocation3 + $0xc24] sm:$0xf]
    %v834 = vld [vmem:[#allocation3 + $0xc28] sm:$0xf]
    %v835 = vld [vmem:[#allocation3 + $0xc2c] sm:$0xf]
    %v836 = vld [vmem:[#allocation3 + $0xc30] sm:$0xf]
    %v837 = vld [vmem:[#allocation3 + $0xc34] sm:$0xf]
    %v838 = vld [vmem:[#allocation3 + $0xc38] sm:$0xf]
    %v839 = vld [vmem:[#allocation3 + $0xc3c] sm:$0xf]
    %v840 = vld [vmem:[#allocation5] sm:$0x1]
    %v842 = vlaneseq
    %v843 = vshrl.u32 %v842, 7
    %v844 = vsub.s32 0, %v843
    %v845 = vrot.slane %v840, %v844
    %v854 = vcombine.high %v49, %v49
    %v856 = vunpack.c.l.s4 1966171168
    %v857 = vunpack.c.0.s8 %v856
    %v858 = vlaneseq
    %v859 = vshrl.u32 %v858, 7
    %v860 = vsub.s32 %v857, %v859
    %v861 = vrot.slane %v49, %v860
    %v863 = vunpack.c.l.s4 1966171168
    %v864 = vunpack.c.0.s8 %v863
    %v865 = vlaneseq
    %v866 = vshrl.u32 %v865, 7
    %v867 = vsub.s32 %v864, %v866
    %v868 = vrot.slane %v854, %v867
    %v869 = vcombine.high %v861, %v861
    %v870 = vcombine.high %v868, %v868
    %v872 = vunpack.c.l.s4 1966171168
    %v873 = vunpack.c.0.s8 %v872
    %v874 = vlaneseq
    %v875 = vshrl.u32 %v874, 7
    %v876 = vsub.s32 %v873, %v875
    %v877 = vrot.slane %v861, %v876
    %v879 = vunpack.c.l.s4 1966171168
    %v880 = vunpack.c.0.s8 %v879
    %v881 = vlaneseq
    %v882 = vshrl.u32 %v881, 7
    %v883 = vsub.s32 %v880, %v882
    %v884 = vrot.slane %v868, %v883
    %v886 = vunpack.c.l.s4 1966171168
    %v887 = vunpack.c.0.s8 %v886
    %v888 = vlaneseq
    %v889 = vshrl.u32 %v888, 7
    %v890 = vsub.s32 %v887, %v889
    %v891 = vrot.slane %v869, %v890
    %v893 = vunpack.c.l.s4 1966171168
    %v894 = vunpack.c.0.s8 %v893
    %v895 = vlaneseq
    %v896 = vshrl.u32 %v895, 7
    %v897 = vsub.s32 %v894, %v896
    %v898 = vrot.slane %v870, %v897
    %v899 = vcombine.high %v877, %v877
    %v900 = vcombine.high %v884, %v884
    %v901 = vcombine.high %v891, %v891
    %v902 = vcombine.high %v898, %v898
    %v903 = vcombine.high %v50, %v50
    %v905 = vunpack.c.l.s4 1966171168
    %v906 = vunpack.c.0.s8 %v905
    %v907 = vlaneseq
    %v908 = vshrl.u32 %v907, 7
    %v909 = vsub.s32 %v906, %v908
    %v910 = vrot.slane %v50, %v909
    %v912 = vunpack.c.l.s4 1966171168
    %v913 = vunpack.c.0.s8 %v912
    %v914 = vlaneseq
    %v915 = vshrl.u32 %v914, 7
    %v916 = vsub.s32 %v913, %v915
    %v917 = vrot.slane %v903, %v916
    %v918 = vcombine.high %v910, %v910
    %v919 = vcombine.high %v917, %v917
    %v921 = vunpack.c.l.s4 1966171168
    %v922 = vunpack.c.0.s8 %v921
    %v923 = vlaneseq
    %v924 = vshrl.u32 %v923, 7
    %v925 = vsub.s32 %v922, %v924
    %v926 = vrot.slane %v910, %v925
    %v928 = vunpack.c.l.s4 1966171168
    %v929 = vunpack.c.0.s8 %v928
    %v930 = vlaneseq
    %v931 = vshrl.u32 %v930, 7
    %v932 = vsub.s32 %v929, %v931
    %v933 = vrot.slane %v917, %v932
    %v935 = vunpack.c.l.s4 1966171168
    %v936 = vunpack.c.0.s8 %v935
    %v937 = vlaneseq
    %v938 = vshrl.u32 %v937, 7
    %v939 = vsub.s32 %v936, %v938
    %v940 = vrot.slane %v918, %v939
    %v942 = vunpack.c.l.s4 1966171168
    %v943 = vunpack.c.0.s8 %v942
    %v944 = vlaneseq
    %v945 = vshrl.u32 %v944, 7
    %v946 = vsub.s32 %v943, %v945
    %v947 = vrot.slane %v919, %v946
    %v948 = vcombine.high %v926, %v926
    %v949 = vcombine.high %v933, %v933
    %v950 = vcombine.high %v940, %v940
    %v951 = vcombine.high %v947, %v947
    %v952 = vcombine.high %v51, %v51
    %v954 = vunpack.c.l.s4 1966171168
    %v955 = vunpack.c.0.s8 %v954
    %v956 = vlaneseq
    %v957 = vshrl.u32 %v956, 7
    %v958 = vsub.s32 %v955, %v957
    %v959 = vrot.slane %v51, %v958
    %v961 = vunpack.c.l.s4 1966171168
    %v962 = vunpack.c.0.s8 %v961
    %v963 = vlaneseq
    %v964 = vshrl.u32 %v963, 7
    %v965 = vsub.s32 %v962, %v964
    %v966 = vrot.slane %v952, %v965
    %v967 = vcombine.high %v959, %v959
    %v968 = vcombine.high %v966, %v966
    %v970 = vunpack.c.l.s4 1966171168
    %v971 = vunpack.c.0.s8 %v970
    %v972 = vlaneseq
    %v973 = vshrl.u32 %v972, 7
    %v974 = vsub.s32 %v971, %v973
    %v975 = vrot.slane %v959, %v974
    %v977 = vunpack.c.l.s4 1966171168
    %v978 = vunpack.c.0.s8 %v977
    %v979 = vlaneseq
    %v980 = vshrl.u32 %v979, 7
    %v981 = vsub.s32 %v978, %v980
    %v982 = vrot.slane %v966, %v981
    %v984 = vunpack.c.l.s4 1966171168
    %v985 = vunpack.c.0.s8 %v984
    %v986 = vlaneseq
    %v987 = vshrl.u32 %v986, 7
    %v988 = vsub.s32 %v985, %v987
    %v989 = vrot.slane %v967, %v988
    %v991 = vunpack.c.l.s4 1966171168
    %v992 = vunpack.c.0.s8 %v991
    %v993 = vlaneseq
    %v994 = vshrl.u32 %v993, 7
    %v995 = vsub.s32 %v992, %v994
    %v996 = vrot.slane %v968, %v995
    %v997 = vcombine.high %v975, %v975
    %v998 = vcombine.high %v982, %v982
    %v999 = vcombine.high %v989, %v989
    %v1000 = vcombine.high %v996, %v996
    %v1001 = vcombine.high %v52, %v52
    %v1003 = vunpack.c.l.s4 1966171168
    %v1004 = vunpack.c.0.s8 %v1003
    %v1005 = vlaneseq
    %v1006 = vshrl.u32 %v1005, 7
    %v1007 = vsub.s32 %v1004, %v1006
    %v1008 = vrot.slane %v52, %v1007
    %v1010 = vunpack.c.l.s4 1966171168
    %v1011 = vunpack.c.0.s8 %v1010
    %v1012 = vlaneseq
    %v1013 = vshrl.u32 %v1012, 7
    %v1014 = vsub.s32 %v1011, %v1013
    %v1015 = vrot.slane %v1001, %v1014
    %v1016 = vcombine.high %v1008, %v1008
    %v1017 = vcombine.high %v1015, %v1015
    %v1019 = vunpack.c.l.s4 1966171168
    %v1020 = vunpack.c.0.s8 %v1019
    %v1021 = vlaneseq
    %v1022 = vshrl.u32 %v1021, 7
    %v1023 = vsub.s32 %v1020, %v1022
    %v1024 = vrot.slane %v1008, %v1023
    %v1026 = vunpack.c.l.s4 1966171168
    %v1027 = vunpack.c.0.s8 %v1026
    %v1028 = vlaneseq
    %v1029 = vshrl.u32 %v1028, 7
    %v1030 = vsub.s32 %v1027, %v1029
    %v1031 = vrot.slane %v1015, %v1030
    %v1033 = vunpack.c.l.s4 1966171168
    %v1034 = vunpack.c.0.s8 %v1033
    %v1035 = vlaneseq
    %v1036 = vshrl.u32 %v1035, 7
    %v1037 = vsub.s32 %v1034, %v1036
    %v1038 = vrot.slane %v1016, %v1037
    %v1040 = vunpack.c.l.s4 1966171168
    %v1041 = vunpack.c.0.s8 %v1040
    %v1042 = vlaneseq
    %v1043 = vshrl.u32 %v1042, 7
    %v1044 = vsub.s32 %v1041, %v1043
    %v1045 = vrot.slane %v1017, %v1044
    %v1046 = vcombine.high %v1024, %v1024
    %v1047 = vcombine.high %v1031, %v1031
    %v1048 = vcombine.high %v1038, %v1038
    %v1049 = vcombine.high %v1045, %v1045
    %v1050 = vcombine.high %v53, %v53
    %v1052 = vunpack.c.l.s4 1966171168
    %v1053 = vunpack.c.0.s8 %v1052
    %v1054 = vlaneseq
    %v1055 = vshrl.u32 %v1054, 7
    %v1056 = vsub.s32 %v1053, %v1055
    %v1057 = vrot.slane %v53, %v1056
    %v1059 = vunpack.c.l.s4 1966171168
    %v1060 = vunpack.c.0.s8 %v1059
    %v1061 = vlaneseq
    %v1062 = vshrl.u32 %v1061, 7
    %v1063 = vsub.s32 %v1060, %v1062
    %v1064 = vrot.slane %v1050, %v1063
    %v1065 = vcombine.high %v1057, %v1057
    %v1066 = vcombine.high %v1064, %v1064
    %v1068 = vunpack.c.l.s4 1966171168
    %v1069 = vunpack.c.0.s8 %v1068
    %v1070 = vlaneseq
    %v1071 = vshrl.u32 %v1070, 7
    %v1072 = vsub.s32 %v1069, %v1071
    %v1073 = vrot.slane %v1057, %v1072
    %v1075 = vunpack.c.l.s4 1966171168
    %v1076 = vunpack.c.0.s8 %v1075
    %v1077 = vlaneseq
    %v1078 = vshrl.u32 %v1077, 7
    %v1079 = vsub.s32 %v1076, %v1078
    %v1080 = vrot.slane %v1064, %v1079
    %v1082 = vunpack.c.l.s4 1966171168
    %v1083 = vunpack.c.0.s8 %v1082
    %v1084 = vlaneseq
    %v1085 = vshrl.u32 %v1084, 7
    %v1086 = vsub.s32 %v1083, %v1085
    %v1087 = vrot.slane %v1065, %v1086
    %v1089 = vunpack.c.l.s4 1966171168
    %v1090 = vunpack.c.0.s8 %v1089
    %v1091 = vlaneseq
    %v1092 = vshrl.u32 %v1091, 7
    %v1093 = vsub.s32 %v1090, %v1092
    %v1094 = vrot.slane %v1066, %v1093
    %v1095 = vcombine.high %v1073, %v1073
    %v1096 = vcombine.high %v1080, %v1080
    %v1097 = vcombine.high %v1087, %v1087
    %v1098 = vcombine.high %v1094, %v1094
    %v1099 = vcombine.high %v54, %v54
    %v1101 = vunpack.c.l.s4 1966171168
    %v1102 = vunpack.c.0.s8 %v1101
    %v1103 = vlaneseq
    %v1104 = vshrl.u32 %v1103, 7
    %v1105 = vsub.s32 %v1102, %v1104
    %v1106 = vrot.slane %v54, %v1105
    %v1108 = vunpack.c.l.s4 1966171168
    %v1109 = vunpack.c.0.s8 %v1108
    %v1110 = vlaneseq
    %v1111 = vshrl.u32 %v1110, 7
    %v1112 = vsub.s32 %v1109, %v1111
    %v1113 = vrot.slane %v1099, %v1112
    %v1114 = vcombine.high %v1106, %v1106
    %v1115 = vcombine.high %v1113, %v1113
    %v1117 = vunpack.c.l.s4 1966171168
    %v1118 = vunpack.c.0.s8 %v1117
    %v1119 = vlaneseq
    %v1120 = vshrl.u32 %v1119, 7
    %v1121 = vsub.s32 %v1118, %v1120
    %v1122 = vrot.slane %v1106, %v1121
    %v1124 = vunpack.c.l.s4 1966171168
    %v1125 = vunpack.c.0.s8 %v1124
    %v1126 = vlaneseq
    %v1127 = vshrl.u32 %v1126, 7
    %v1128 = vsub.s32 %v1125, %v1127
    %v1129 = vrot.slane %v1113, %v1128
    %v1131 = vunpack.c.l.s4 1966171168
    %v1132 = vunpack.c.0.s8 %v1131
    %v1133 = vlaneseq
    %v1134 = vshrl.u32 %v1133, 7
    %v1135 = vsub.s32 %v1132, %v1134
    %v1136 = vrot.slane %v1114, %v1135
    %v1138 = vunpack.c.l.s4 1966171168
    %v1139 = vunpack.c.0.s8 %v1138
    %v1140 = vlaneseq
    %v1141 = vshrl.u32 %v1140, 7
    %v1142 = vsub.s32 %v1139, %v1141
    %v1143 = vrot.slane %v1115, %v1142
    %v1144 = vcombine.high %v1122, %v1122
    %v1145 = vcombine.high %v1129, %v1129
    %v1146 = vcombine.high %v1136, %v1136
    %v1147 = vcombine.high %v1143, %v1143
    %v1149 = vunpack.c.l.s4 1966171168
    %v1150 = vunpack.c.0.s8 %v1149
    %v1151 = vlaneseq
    %v1152 = vshrl.u32 %v1151, 7
    %v1153 = vsub.s32 %v1150, %v1152
    %v1154 = vrot.slane %v55, %v1153
    %v1156 = vunpack.c.l.s4 1966171168
    %v1157 = vunpack.c.0.s8 %v1156
    %v1158 = vlaneseq
    %v1159 = vshrl.u32 %v1158, 7
    %v1160 = vsub.s32 %v1157, %v1159
    %v1161 = vrot.slane %v1154, %v1160
    %v1995 = vunpack.c.l.b16 %v56
    %v1996 = vunpack.c.l.b16 %v57
    %v1997 = vunpack.c.l.b16 %v58
    %v1998 = vunpack.c.l.b16 %v59
    %v1999 = vunpack.c.l.b16 %v60
    %v2000 = vunpack.c.l.b16 %v61
    %v2001 = vunpack.c.l.b16 %v62
    %v2002 = vunpack.c.l.b16 %v63
    %v2003 = vunpack.c.l.b16 %v64
    %v2004 = vunpack.c.l.b16 %v65
    %v2005 = vunpack.c.l.b16 %v66
    %v2006 = vunpack.c.l.b16 %v67
    %v2007 = vunpack.c.l.b16 %v68
    %v2008 = vunpack.c.l.b16 %v69
    %v2009 = vunpack.c.l.b16 %v70
    %v2010 = vunpack.c.l.b16 %v71
    %v2011 = vunpack.c.l.b16 %v72
    %v2012 = vunpack.c.l.b16 %v73
    %v2013 = vunpack.c.l.b16 %v74
    %v2014 = vunpack.c.l.b16 %v75
    %v2015 = vunpack.c.l.b16 %v76
    %v2016 = vunpack.c.l.b16 %v77
    %v2017 = vunpack.c.l.b16 %v78
    %v2018 = vunpack.c.l.b16 %v79
    %v2019 = vunpack.c.l.b16 %v80
    %v2020 = vunpack.c.l.b16 %v81
    %v2021 = vunpack.c.l.b16 %v82
    %v2022 = vunpack.c.l.b16 %v83
    %v2023 = vunpack.c.l.b16 %v84
    %v2024 = vunpack.c.l.b16 %v85
    %v2025 = vunpack.c.l.b16 %v86
    %v2026 = vunpack.c.l.b16 %v87
    %v2027 = vunpack.c.l.b16 %v88
    %v2028 = vunpack.c.l.b16 %v89
    %v2029 = vunpack.c.l.b16 %v90
    %v2030 = vunpack.c.l.b16 %v91
    %v2031 = vunpack.c.l.b16 %v92
    %v2032 = vunpack.c.l.b16 %v93
    %v2033 = vunpack.c.l.b16 %v94
    %v2034 = vunpack.c.l.b16 %v95
    %v2035 = vunpack.c.l.b16 %v96
    %v2036 = vunpack.c.l.b16 %v97
    %v2037 = vunpack.c.l.b16 %v98
    %v2038 = vunpack.c.l.b16 %v99
    %v2039 = vunpack.c.l.b16 %v100
    %v2040 = vunpack.c.l.b16 %v101
    %v2041 = vunpack.c.l.b16 %v102
    %v2042 = vunpack.c.l.b16 %v103
    %v2043 = vunpack.c.l.b16 %v104
    %v2044 = vunpack.c.l.b16 %v105
    %v2045 = vunpack.c.l.b16 %v106
    %v2046 = vunpack.c.l.b16 %v107
    %v2047 = vunpack.c.l.b16 %v108
    %v2048 = vunpack.c.l.b16 %v109
    %v2049 = vunpack.c.l.b16 %v110
    %v2050 = vunpack.c.l.b16 %v111
    %v2051 = vunpack.c.l.b16 %v112
    %v2052 = vunpack.c.l.b16 %v113
    %v2053 = vunpack.c.l.b16 %v114
    %v2054 = vunpack.c.l.b16 %v115
    %v2055 = vunpack.c.l.b16 %v116
    %v2056 = vunpack.c.l.b16 %v117
    %v2057 = vunpack.c.l.b16 %v118
    %v2058 = vunpack.c.l.b16 %v119
    %v2059 = vunpack.c.l.b16 %v120
    %v2060 = vunpack.c.l.b16 %v121
    %v2061 = vunpack.c.l.b16 %v122
    %v2062 = vunpack.c.l.b16 %v123
    %v2063 = vunpack.c.l.b16 %v124
    %v2064 = vunpack.c.l.b16 %v125
    %v2065 = vunpack.c.l.b16 %v126
    %v2066 = vunpack.c.l.b16 %v127
    %v2067 = vunpack.c.l.b16 %v128
    %v2068 = vunpack.c.l.b16 %v129
    %v2069 = vunpack.c.l.b16 %v130
    %v2070 = vunpack.c.l.b16 %v131
    %v2071 = vunpack.c.l.b16 %v132
    %v2072 = vunpack.c.l.b16 %v133
    %v2073 = vunpack.c.l.b16 %v134
    %v2074 = vunpack.c.l.b16 %v135
    %v2075 = vunpack.c.l.b16 %v136
    %v2076 = vunpack.c.l.b16 %v137
    %v2077 = vunpack.c.l.b16 %v138
    %v2078 = vunpack.c.l.b16 %v139
    %v2079 = vunpack.c.l.b16 %v140
    %v2080 = vunpack.c.l.b16 %v141
    %v2081 = vunpack.c.l.b16 %v142
    %v2082 = vunpack.c.l.b16 %v143
    %v2083 = vunpack.c.l.b16 %v144
    %v2084 = vunpack.c.l.b16 %v145
    %v2085 = vunpack.c.l.b16 %v146
    %v2086 = vunpack.c.l.b16 %v147
    %v2087 = vunpack.c.l.b16 %v148
    %v2088 = vunpack.c.l.b16 %v149
    %v2089 = vunpack.c.l.b16 %v150
    %v2090 = vunpack.c.l.b16 %v151
    %v2091 = vunpack.c.l.b16 %v152
    %v2092 = vunpack.c.l.b16 %v153
    %v2093 = vunpack.c.l.b16 %v154
    %v2094 = vunpack.c.l.b16 %v155
    %v2095 = vunpack.c.l.b16 %v156
    %v2096 = vunpack.c.l.b16 %v157
    %v2097 = vunpack.c.l.b16 %v158
    %v2098 = vunpack.c.l.b16 %v159
    %v2099 = vunpack.c.l.b16 %v160
    %v2100 = vunpack.c.l.b16 %v161
    %v2101 = vunpack.c.l.b16 %v162
    %v2102 = vunpack.c.l.b16 %v163
    %v2103 = vunpack.c.l.b16 %v164
    %v2104 = vunpack.c.l.b16 %v165
    %v2105 = vunpack.c.l.b16 %v166
    %v2106 = vunpack.c.l.b16 %v167
    %v2107 = vunpack.c.l.b16 %v168
    %v2108 = vunpack.c.l.b16 %v169
    %v2109 = vunpack.c.l.b16 %v170
    %v2110 = vunpack.c.l.b16 %v171
    %v2111 = vunpack.c.l.b16 %v172
    %v2112 = vunpack.c.l.b16 %v173
    %v2113 = vunpack.c.l.b16 %v174
    %v2114 = vunpack.c.l.b16 %v175
    %v2115 = vunpack.c.l.b16 %v176
    %v2116 = vunpack.c.l.b16 %v177
    %v2117 = vunpack.c.l.b16 %v178
    %v2118 = vunpack.c.l.b16 %v179
    %v2119 = vunpack.c.l.b16 %v180
    %v2120 = vunpack.c.l.b16 %v181
    %v2121 = vunpack.c.l.b16 %v182
    %v2122 = vunpack.c.l.b16 %v183
    %v2123 = vunpack.c.l.b16 %v184
    %v2124 = vunpack.c.l.b16 %v185
    %v2125 = vunpack.c.l.b16 %v186
    %v2126 = vunpack.c.l.b16 %v187
    %v2127 = vunpack.c.l.b16 %v188
    %v2128 = vunpack.c.l.b16 %v189
    %v2129 = vunpack.c.l.b16 %v190
    %v2130 = vunpack.c.l.b16 %v191
    %v2131 = vunpack.c.l.b16 %v192
    %v2132 = vunpack.c.l.b16 %v193
    %v2133 = vunpack.c.l.b16 %v194
    %v2134 = vunpack.c.l.b16 %v195
    %v2135 = vunpack.c.l.b16 %v196
    %v2136 = vunpack.c.l.b16 %v197
    %v2137 = vunpack.c.l.b16 %v198
    %v2138 = vunpack.c.l.b16 %v199
    %v2139 = vunpack.c.l.b16 %v200
    %v2140 = vunpack.c.l.b16 %v201
    %v2141 = vunpack.c.l.b16 %v202
    %v2142 = vunpack.c.l.b16 %v203
    %v2143 = vunpack.c.l.b16 %v204
    %v2144 = vunpack.c.l.b16 %v205
    %v2145 = vunpack.c.l.b16 %v206
    %v2146 = vunpack.c.l.b16 %v207
    %v2147 = vunpack.c.l.b16 %v208
    %v2148 = vunpack.c.l.b16 %v209
    %v2149 = vunpack.c.l.b16 %v210
    %v2150 = vunpack.c.l.b16 %v211
    %v2151 = vunpack.c.l.b16 %v212
    %v2152 = vunpack.c.l.b16 %v213
    %v2153 = vunpack.c.l.b16 %v214
    %v2154 = vunpack.c.l.b16 %v215
    %v2155 = vunpack.c.l.b16 %v216
    %v2156 = vunpack.c.l.b16 %v217
    %v2157 = vunpack.c.l.b16 %v218
    %v2158 = vunpack.c.l.b16 %v219
    %v2159 = vunpack.c.l.b16 %v220
    %v2160 = vunpack.c.l.b16 %v221
    %v2161 = vunpack.c.l.b16 %v222
    %v2162 = vunpack.c.l.b16 %v223
    %v2163 = vunpack.c.l.b16 %v224
    %v2164 = vunpack.c.l.b16 %v225
    %v2165 = vunpack.c.l.b16 %v226
    %v2166 = vunpack.c.l.b16 %v227
    %v2167 = vunpack.c.l.b16 %v228
    %v2168 = vunpack.c.l.b16 %v229
    %v2169 = vunpack.c.l.b16 %v230
    %v2170 = vunpack.c.l.b16 %v231
    %v2171 = vunpack.c.l.b16 %v232
    %v2172 = vunpack.c.l.b16 %v233
    %v2173 = vunpack.c.l.b16 %v234
    %v2174 = vunpack.c.l.b16 %v235
    %v2175 = vunpack.c.l.b16 %v236
    %v2176 = vunpack.c.l.b16 %v237
    %v2177 = vunpack.c.l.b16 %v238
    %v2178 = vunpack.c.l.b16 %v239
    %v2179 = vunpack.c.l.b16 %v240
    %v2180 = vunpack.c.l.b16 %v241
    %v2181 = vunpack.c.l.b16 %v242
    %v2182 = vunpack.c.l.b16 %v243
    %v2183 = vunpack.c.l.b16 %v244
    %v2184 = vunpack.c.l.b16 %v245
    %v2185 = vunpack.c.l.b16 %v246
    %v2186 = vunpack.c.l.b16 %v247
    %v2187 = vunpack.c.l.b16 %v248
    %v2188 = vunpack.c.l.b16 %v249
    %v2189 = vunpack.c.l.b16 %v250
    %v2190 = vunpack.c.l.b16 %v251
    %v2191 = vunpack.c.l.b16 %v252
    %v2192 = vunpack.c.l.b16 %v253
    %v2193 = vunpack.c.l.b16 %v254
    %v2194 = vunpack.c.l.b16 %v255
    %v2195 = vunpack.c.l.b16 %v256
    %v2196 = vunpack.c.l.b16 %v257
    %v2197 = vunpack.c.l.b16 %v258
    %v2198 = vunpack.c.l.b16 %v259
    %v2199 = vunpack.c.l.b16 %v260
    %v2200 = vunpack.c.l.b16 %v261
    %v2201 = vunpack.c.l.b16 %v262
    %v2202 = vunpack.c.l.b16 %v263
    %v2203 = vunpack.c.l.b16 %v264
    %v2204 = vunpack.c.l.b16 %v265
    %v2205 = vunpack.c.l.b16 %v266
    %v2206 = vunpack.c.l.b16 %v267
    %v2207 = vunpack.c.l.b16 %v268
    %v2208 = vunpack.c.l.b16 %v269
    %v2209 = vunpack.c.l.b16 %v270
    %v2210 = vunpack.c.l.b16 %v271
    %v2211 = vunpack.c.l.b16 %v272
    %v2212 = vunpack.c.l.b16 %v273
    %v2213 = vunpack.c.l.b16 %v274
    %v2214 = vunpack.c.l.b16 %v275
    %v2215 = vunpack.c.l.b16 %v276
    %v2216 = vunpack.c.l.b16 %v277
    %v2217 = vunpack.c.l.b16 %v278
    %v2218 = vunpack.c.l.b16 %v279
    %v2219 = vunpack.c.l.b16 %v280
    %v2220 = vunpack.c.l.b16 %v281
    %v2221 = vunpack.c.l.b16 %v282
    %v2222 = vunpack.c.l.b16 %v283
    %v2223 = vunpack.c.l.b16 %v284
    %v2224 = vunpack.c.l.b16 %v285
    %v2225 = vunpack.c.l.b16 %v286
    %v2226 = vunpack.c.l.b16 %v287
    %v2227 = vunpack.c.l.b16 %v288
    %v2228 = vunpack.c.l.b16 %v289
    %v2229 = vunpack.c.l.b16 %v290
    %v2230 = vunpack.c.l.b16 %v291
    %v2231 = vunpack.c.l.b16 %v292
    %v2232 = vunpack.c.l.b16 %v293
    %v2233 = vunpack.c.l.b16 %v294
    %v2234 = vunpack.c.l.b16 %v295
    %v2235 = vunpack.c.l.b16 %v296
    %v2236 = vunpack.c.l.b16 %v297
    %v2237 = vunpack.c.l.b16 %v298
    %v2238 = vunpack.c.l.b16 %v299
    %v2239 = vunpack.c.l.b16 %v300
    %v2240 = vunpack.c.l.b16 %v301
    %v2241 = vunpack.c.l.b16 %v302
    %v2242 = vunpack.c.l.b16 %v303
    %v2243 = vunpack.c.l.b16 %v304
    %v2244 = vunpack.c.l.b16 %v305
    %v2245 = vunpack.c.l.b16 %v306
    %v2246 = vunpack.c.l.b16 %v307
    %v2247 = vunpack.c.l.b16 %v308
    %v2248 = vunpack.c.l.b16 %v309
    %v2249 = vunpack.c.l.b16 %v310
    %v2250 = vunpack.c.l.b16 %v311
    %v2251 = vunpack.c.l.b16 %v312
    %v2252 = vunpack.c.l.b16 %v313
    %v2253 = vunpack.c.l.b16 %v314
    %v2254 = vunpack.c.l.b16 %v315
    %v2255 = vunpack.c.l.b16 %v316
    %v2256 = vunpack.c.l.b16 %v317
    %v2257 = vunpack.c.l.b16 %v318
    %v2258 = vunpack.c.l.b16 %v319
    %v2259 = vunpack.c.l.b16 %v320
    %v2260 = vunpack.c.l.b16 %v321
    %v2261 = vunpack.c.l.b16 %v322
    %v2262 = vunpack.c.l.b16 %v323
    %v2263 = vunpack.c.l.b16 %v324
    %v2264 = vunpack.c.l.b16 %v325
    %v2265 = vunpack.c.l.b16 %v326
    %v2266 = vunpack.c.l.b16 %v327
    %v2267 = vunpack.c.l.b16 %v328
    %v2268 = vunpack.c.l.b16 %v329
    %v2269 = vunpack.c.l.b16 %v330
    %v2270 = vunpack.c.l.b16 %v331
    %v2271 = vunpack.c.l.b16 %v332
    %v2272 = vunpack.c.l.b16 %v333
    %v2273 = vunpack.c.l.b16 %v334
    %v2274 = vunpack.c.l.b16 %v335
    %v2275 = vunpack.c.l.b16 %v336
    %v2276 = vunpack.c.l.b16 %v337
    %v2277 = vunpack.c.l.b16 %v338
    %v2278 = vunpack.c.l.b16 %v339
    %v2279 = vunpack.c.l.b16 %v340
    %v2280 = vunpack.c.l.b16 %v341
    %v2281 = vunpack.c.l.b16 %v342
    %v2282 = vunpack.c.l.b16 %v343
    %v2283 = vunpack.c.l.b16 %v344
    %v2284 = vunpack.c.l.b16 %v345
    %v2285 = vunpack.c.l.b16 %v346
    %v2286 = vunpack.c.l.b16 %v347
    %v2287 = vunpack.c.l.b16 %v348
    %v2288 = vunpack.c.l.b16 %v349
    %v2289 = vunpack.c.l.b16 %v350
    %v2290 = vunpack.c.l.b16 %v351
    %v2291 = vunpack.c.l.b16 %v352
    %v2292 = vunpack.c.l.b16 %v353
    %v2293 = vunpack.c.l.b16 %v354
    %v2294 = vunpack.c.l.b16 %v355
    %v2295 = vunpack.c.l.b16 %v356
    %v2296 = vunpack.c.l.b16 %v357
    %v2297 = vunpack.c.l.b16 %v358
    %v2298 = vunpack.c.l.b16 %v359
    %v2299 = vunpack.c.l.b16 %v360
    %v2300 = vunpack.c.l.b16 %v361
    %v2301 = vunpack.c.l.b16 %v362
    %v2302 = vunpack.c.l.b16 %v363
    %v2303 = vunpack.c.l.b16 %v364
    %v2304 = vunpack.c.l.b16 %v365
    %v2305 = vunpack.c.l.b16 %v366
    %v2306 = vunpack.c.l.b16 %v367
    %v2307 = vunpack.c.l.b16 %v368
    %v2308 = vunpack.c.l.b16 %v369
    %v2309 = vunpack.c.l.b16 %v370
    %v2310 = vunpack.c.l.b16 %v371
    %v2311 = vunpack.c.l.b16 %v372
    %v2312 = vunpack.c.l.b16 %v373
    %v2313 = vunpack.c.l.b16 %v374
    %v2314 = vunpack.c.l.b16 %v375
    %v2315 = vunpack.c.l.b16 %v376
    %v2316 = vunpack.c.l.b16 %v377
    %v2317 = vunpack.c.l.b16 %v378
    %v2318 = vunpack.c.l.b16 %v379
    %v2319 = vunpack.c.l.b16 %v380
    %v2320 = vunpack.c.l.b16 %v381
    %v2321 = vunpack.c.l.b16 %v382
    %v2322 = vunpack.c.l.b16 %v383
    %v2323 = vunpack.c.l.b16 %v384
    %v2324 = vunpack.c.l.b16 %v385
    %v2325 = vunpack.c.l.b16 %v386
    %v2326 = vunpack.c.l.b16 %v387
    %v2327 = vunpack.c.l.b16 %v388
    %v2328 = vunpack.c.l.b16 %v389
    %v2329 = vunpack.c.l.b16 %v390
    %v2330 = vunpack.c.l.b16 %v391
    %v2331 = vunpack.c.l.b16 %v392
    %v2332 = vunpack.c.l.b16 %v393
    %v2333 = vunpack.c.l.b16 %v394
    %v2334 = vunpack.c.l.b16 %v395
    %v2335 = vunpack.c.l.b16 %v396
    %v2336 = vunpack.c.l.b16 %v397
    %v2337 = vunpack.c.l.b16 %v398
    %v2338 = vunpack.c.l.b16 %v399
    %v2339 = vunpack.c.l.b16 %v400
    %v2340 = vunpack.c.l.b16 %v401
    %v2341 = vunpack.c.l.b16 %v402
    %v2342 = vunpack.c.l.b16 %v403
    %v2343 = vunpack.c.l.b16 %v404
    %v2344 = vunpack.c.l.b16 %v405
    %v2345 = vunpack.c.l.b16 %v406
    %v2346 = vunpack.c.l.b16 %v407
    %v2347 = vunpack.c.l.b16 %v408
    %v2348 = vunpack.c.l.b16 %v409
    %v2349 = vunpack.c.l.b16 %v410
    %v2350 = vunpack.c.l.b16 %v411
    %v2351 = vunpack.c.l.b16 %v412
    %v2352 = vunpack.c.l.b16 %v413
    %v2353 = vunpack.c.l.b16 %v414
    %v2354 = vunpack.c.l.b16 %v415
    %v2355 = vunpack.c.l.b16 %v416
    %v2356 = vunpack.c.l.b16 %v417
    %v2357 = vunpack.c.l.b16 %v418
    %v2358 = vunpack.c.l.b16 %v419
    %v2359 = vunpack.c.l.b16 %v420
    %v2360 = vunpack.c.l.b16 %v421
    %v2361 = vunpack.c.l.b16 %v422
    %v2362 = vunpack.c.l.b16 %v423
    %v2363 = vunpack.c.l.b16 %v424
    %v2364 = vunpack.c.l.b16 %v425
    %v2365 = vunpack.c.l.b16 %v426
    %v2366 = vunpack.c.l.b16 %v427
    %v2367 = vunpack.c.l.b16 %v428
    %v2368 = vunpack.c.l.b16 %v429
    %v2369 = vunpack.c.l.b16 %v430
    %v2370 = vunpack.c.l.b16 %v431
    %v2371 = vunpack.c.l.b16 %v432
    %v2372 = vunpack.c.l.b16 %v433
    %v2373 = vunpack.c.l.b16 %v434
    %v2374 = vunpack.c.l.b16 %v435
    %v2375 = vunpack.c.l.b16 %v436
    %v2376 = vunpack.c.l.b16 %v437
    %v2377 = vunpack.c.l.b16 %v438
    %v2378 = vunpack.c.l.b16 %v439
    %v2379 = vunpack.c.l.b16 %v440
    %v2380 = vunpack.c.l.b16 %v441
    %v2381 = vunpack.c.l.b16 %v442
    %v2382 = vunpack.c.l.b16 %v443
    %v2383 = vunpack.c.l.b16 %v444
    %v2384 = vunpack.c.l.b16 %v445
    %v2385 = vunpack.c.l.b16 %v446
    %v2386 = vunpack.c.l.b16 %v447
    %v2387 = vunpack.c.l.b16 %v448
    %v2388 = vunpack.c.l.b16 %v449
    %v2389 = vunpack.c.l.b16 %v450
    %v2390 = vunpack.c.l.b16 %v451
    %v2391 = vunpack.c.l.b16 %v452
    %v2392 = vunpack.c.l.b16 %v453
    %v2393 = vunpack.c.l.b16 %v454
    %v2394 = vunpack.c.l.b16 %v455
    %v2395 = vunpack.c.l.b16 %v456
    %v2396 = vunpack.c.l.b16 %v457
    %v2397 = vunpack.c.l.b16 %v458
    %v2398 = vunpack.c.l.b16 %v459
    %v2399 = vunpack.c.l.b16 %v460
    %v2400 = vunpack.c.l.b16 %v461
    %v2401 = vunpack.c.l.b16 %v462
    %v2402 = vunpack.c.l.b16 %v463
    %v2403 = vunpack.c.l.b16 %v464
    %v2404 = vunpack.c.l.b16 %v465
    %v2405 = vunpack.c.l.b16 %v466
    %v2406 = vunpack.c.l.b16 %v467
    %v2407 = vunpack.c.l.b16 %v468
    %v2408 = vunpack.c.l.b16 %v469
    %v2409 = vunpack.c.l.b16 %v470
    %v2410 = vunpack.c.l.b16 %v471
    %v2411 = vunpack.c.l.b16 %v472
    %v2412 = vunpack.c.l.b16 %v473
    %v2413 = vunpack.c.l.b16 %v474
    %v2414 = vunpack.c.l.b16 %v475
    %v2415 = vunpack.c.l.b16 %v476
    %v2416 = vunpack.c.l.b16 %v477
    %v2417 = vunpack.c.l.b16 %v478
    %v2418 = vunpack.c.l.b16 %v479
    %v2419 = vunpack.c.l.b16 %v480
    %v2420 = vunpack.c.l.b16 %v481
    %v2421 = vunpack.c.l.b16 %v482
    %v2422 = vunpack.c.l.b16 %v483
    %v2423 = vunpack.c.l.b16 %v484
    %v2424 = vunpack.c.l.b16 %v485
    %v2425 = vunpack.c.l.b16 %v486
    %v2426 = vunpack.c.l.b16 %v487
    %v2427 = vunpack.c.l.b16 %v488
    %v2428 = vunpack.c.l.b16 %v489
    %v2429 = vunpack.c.l.b16 %v490
    %v2430 = vunpack.c.l.b16 %v491
    %v2431 = vunpack.c.l.b16 %v492
    %v2432 = vunpack.c.l.b16 %v493
    %v2433 = vunpack.c.l.b16 %v494
    %v2434 = vunpack.c.l.b16 %v495
    %v2435 = vunpack.c.l.b16 %v496
    %v2436 = vunpack.c.l.b16 %v497
    %v2437 = vunpack.c.l.b16 %v498
    %v2438 = vunpack.c.l.b16 %v499
    %v2439 = vunpack.c.l.b16 %v500
    %v2440 = vunpack.c.l.b16 %v501
    %v2441 = vunpack.c.l.b16 %v502
    %v2442 = vunpack.c.l.b16 %v503
    %v2443 = vunpack.c.l.b16 %v504
    %v2444 = vunpack.c.l.b16 %v505
    %v2445 = vunpack.c.l.b16 %v506
    %v2446 = vunpack.c.l.b16 %v507
    %v2447 = vunpack.c.l.b16 %v508
    %v2448 = vunpack.c.l.b16 %v509
    %v2449 = vunpack.c.l.b16 %v510
    %v2450 = vunpack.c.l.b16 %v511
    %v2451 = vunpack.c.l.b16 %v512
    %v2452 = vunpack.c.l.b16 %v513
    %v2453 = vunpack.c.l.b16 %v514
    %v2454 = vunpack.c.l.b16 %v515
    %v2455 = vunpack.c.l.b16 %v516
    %v2456 = vunpack.c.l.b16 %v517
    %v2457 = vunpack.c.l.b16 %v518
    %v2458 = vunpack.c.l.b16 %v519
    %v2459 = vunpack.c.l.b16 %v520
    %v2460 = vunpack.c.l.b16 %v521
    %v2461 = vunpack.c.l.b16 %v522
    %v2462 = vunpack.c.l.b16 %v523
    %v2463 = vunpack.c.l.b16 %v524
    %v2464 = vunpack.c.l.b16 %v525
    %v2465 = vunpack.c.l.b16 %v526
    %v2466 = vunpack.c.l.b16 %v527
    %v2467 = vunpack.c.l.b16 %v528
    %v2468 = vunpack.c.l.b16 %v529
    %v2469 = vunpack.c.l.b16 %v530
    %v2470 = vunpack.c.l.b16 %v531
    %v2471 = vunpack.c.l.b16 %v532
    %v2472 = vunpack.c.l.b16 %v533
    %v2473 = vunpack.c.l.b16 %v534
    %v2474 = vunpack.c.l.b16 %v535
    %v2475 = vunpack.c.l.b16 %v536
    %v2476 = vunpack.c.l.b16 %v537
    %v2477 = vunpack.c.l.b16 %v538
    %v2478 = vunpack.c.l.b16 %v539
    %v2479 = vunpack.c.l.b16 %v540
    %v2480 = vunpack.c.l.b16 %v541
    %v2481 = vunpack.c.l.b16 %v542
    %v2482 = vunpack.c.l.b16 %v543
    %v2483 = vunpack.c.l.b16 %v544
    %v2484 = vunpack.c.l.b16 %v545
    %v2485 = vunpack.c.l.b16 %v546
    %v2486 = vunpack.c.l.b16 %v547
    %v2487 = vunpack.c.l.b16 %v548
    %v2488 = vunpack.c.l.b16 %v549
    %v2489 = vunpack.c.l.b16 %v550
    %v2490 = vunpack.c.l.b16 %v551
    %v2491 = vunpack.c.l.b16 %v552
    %v2492 = vunpack.c.l.b16 %v553
    %v2493 = vunpack.c.l.b16 %v554
    %v2494 = vunpack.c.l.b16 %v555
    %v2495 = vunpack.c.l.b16 %v556
    %v2496 = vunpack.c.l.b16 %v557
    %v2497 = vunpack.c.l.b16 %v558
    %v2498 = vunpack.c.l.b16 %v559
    %v2499 = vunpack.c.l.b16 %v560
    %v2500 = vunpack.c.l.b16 %v561
    %v2501 = vunpack.c.l.b16 %v562
    %v2502 = vunpack.c.l.b16 %v563
    %v2503 = vunpack.c.l.b16 %v564
    %v2504 = vunpack.c.l.b16 %v565
    %v2505 = vunpack.c.l.b16 %v566
    %v2506 = vunpack.c.l.b16 %v567
    %v2507 = vunpack.c.l.b16 %v568
    %v2508 = vunpack.c.l.b16 %v569
    %v2509 = vunpack.c.l.b16 %v570
    %v2510 = vunpack.c.l.b16 %v571
    %v2511 = vunpack.c.l.b16 %v572
    %v2512 = vunpack.c.l.b16 %v573
    %v2513 = vunpack.c.l.b16 %v574
    %v2514 = vunpack.c.l.b16 %v575
    %v2515 = vunpack.c.l.b16 %v576
    %v2516 = vunpack.c.l.b16 %v577
    %v2517 = vunpack.c.l.b16 %v578
    %v2518 = vunpack.c.l.b16 %v579
    %v2519 = vunpack.c.l.b16 %v580
    %v2520 = vunpack.c.l.b16 %v581
    %v2521 = vunpack.c.l.b16 %v582
    %v2522 = vunpack.c.l.b16 %v583
    %v2523 = vunpack.c.l.b16 %v584
    %v2524 = vunpack.c.l.b16 %v585
    %v2525 = vunpack.c.l.b16 %v586
    %v2526 = vunpack.c.l.b16 %v587
    %v2527 = vunpack.c.l.b16 %v588
    %v2528 = vunpack.c.l.b16 %v589
    %v2529 = vunpack.c.l.b16 %v590
    %v2530 = vunpack.c.l.b16 %v591
    %v2531 = vunpack.c.l.b16 %v592
    %v2532 = vunpack.c.l.b16 %v593
    %v2533 = vunpack.c.l.b16 %v594
    %v2534 = vunpack.c.l.b16 %v595
    %v2535 = vunpack.c.l.b16 %v596
    %v2536 = vunpack.c.l.b16 %v597
    %v2537 = vunpack.c.l.b16 %v598
    %v2538 = vunpack.c.l.b16 %v599
    %v2539 = vunpack.c.l.b16 %v600
    %v2540 = vunpack.c.l.b16 %v601
    %v2541 = vunpack.c.l.b16 %v602
    %v2542 = vunpack.c.l.b16 %v603
    %v2543 = vunpack.c.l.b16 %v604
    %v2544 = vunpack.c.l.b16 %v605
    %v2545 = vunpack.c.l.b16 %v606
    %v2546 = vunpack.c.l.b16 %v607
    %v2547 = vunpack.c.l.b16 %v608
    %v2548 = vunpack.c.l.b16 %v609
    %v2549 = vunpack.c.l.b16 %v610
    %v2550 = vunpack.c.l.b16 %v611
    %v2551 = vunpack.c.l.b16 %v612
    %v2552 = vunpack.c.l.b16 %v613
    %v2553 = vunpack.c.l.b16 %v614
    %v2554 = vunpack.c.l.b16 %v615
    %v2555 = vunpack.c.l.b16 %v616
    %v2556 = vunpack.c.l.b16 %v617
    %v2557 = vunpack.c.l.b16 %v618
    %v2558 = vunpack.c.l.b16 %v619
    %v2559 = vunpack.c.l.b16 %v620
    %v2560 = vunpack.c.l.b16 %v621
    %v2561 = vunpack.c.l.b16 %v622
    %v2562 = vunpack.c.l.b16 %v623
    %v2563 = vunpack.c.l.b16 %v624
    %v2564 = vunpack.c.l.b16 %v625
    %v2565 = vunpack.c.l.b16 %v626
    %v2566 = vunpack.c.l.b16 %v627
    %v2567 = vunpack.c.l.b16 %v628
    %v2568 = vunpack.c.l.b16 %v629
    %v2569 = vunpack.c.l.b16 %v630
    %v2570 = vunpack.c.l.b16 %v631
    %v2571 = vunpack.c.l.b16 %v632
    %v2572 = vunpack.c.l.b16 %v633
    %v2573 = vunpack.c.l.b16 %v634
    %v2574 = vunpack.c.l.b16 %v635
    %v2575 = vunpack.c.l.b16 %v636
    %v2576 = vunpack.c.l.b16 %v637
    %v2577 = vunpack.c.l.b16 %v638
    %v2578 = vunpack.c.l.b16 %v639
    %v2579 = vunpack.c.l.b16 %v640
    %v2580 = vunpack.c.l.b16 %v641
    %v2581 = vunpack.c.l.b16 %v642
    %v2582 = vunpack.c.l.b16 %v643
    %v2583 = vunpack.c.l.b16 %v644
    %v2584 = vunpack.c.l.b16 %v645
    %v2585 = vunpack.c.l.b16 %v646
    %v2586 = vunpack.c.l.b16 %v647
    %v2587 = vunpack.c.l.b16 %v648
    %v2588 = vunpack.c.l.b16 %v649
    %v2589 = vunpack.c.l.b16 %v650
    %v2590 = vunpack.c.l.b16 %v651
    %v2591 = vunpack.c.l.b16 %v652
    %v2592 = vunpack.c.l.b16 %v653
    %v2593 = vunpack.c.l.b16 %v654
    %v2594 = vunpack.c.l.b16 %v655
    %v2595 = vunpack.c.l.b16 %v656
    %v2596 = vunpack.c.l.b16 %v657
    %v2597 = vunpack.c.l.b16 %v658
    %v2598 = vunpack.c.l.b16 %v659
    %v2599 = vunpack.c.l.b16 %v660
    %v2600 = vunpack.c.l.b16 %v661
    %v2601 = vunpack.c.l.b16 %v662
    %v2602 = vunpack.c.l.b16 %v663
    %v2603 = vunpack.c.l.b16 %v664
    %v2604 = vunpack.c.l.b16 %v665
    %v2605 = vunpack.c.l.b16 %v666
    %v2606 = vunpack.c.l.b16 %v667
    %v2607 = vunpack.c.l.b16 %v668
    %v2608 = vunpack.c.l.b16 %v669
    %v2609 = vunpack.c.l.b16 %v670
    %v2610 = vunpack.c.l.b16 %v671
    %v2611 = vunpack.c.l.b16 %v672
    %v2612 = vunpack.c.l.b16 %v673
    %v2613 = vunpack.c.l.b16 %v674
    %v2614 = vunpack.c.l.b16 %v675
    %v2615 = vunpack.c.l.b16 %v676
    %v2616 = vunpack.c.l.b16 %v677
    %v2617 = vunpack.c.l.b16 %v678
    %v2618 = vunpack.c.l.b16 %v679
    %v2619 = vunpack.c.l.b16 %v680
    %v2620 = vunpack.c.l.b16 %v681
    %v2621 = vunpack.c.l.b16 %v682
    %v2622 = vunpack.c.l.b16 %v683
    %v2623 = vunpack.c.l.b16 %v684
    %v2624 = vunpack.c.l.b16 %v685
    %v2625 = vunpack.c.l.b16 %v686
    %v2626 = vunpack.c.l.b16 %v687
    %v2627 = vunpack.c.l.b16 %v688
    %v2628 = vunpack.c.l.b16 %v689
    %v2629 = vunpack.c.l.b16 %v690
    %v2630 = vunpack.c.l.b16 %v691
    %v2631 = vunpack.c.l.b16 %v692
    %v2632 = vunpack.c.l.b16 %v693
    %v2633 = vunpack.c.l.b16 %v694
    %v2634 = vunpack.c.l.b16 %v695
    %v2635 = vunpack.c.l.b16 %v696
    %v2636 = vunpack.c.l.b16 %v697
    %v2637 = vunpack.c.l.b16 %v698
    %v2638 = vunpack.c.l.b16 %v699
    %v2639 = vunpack.c.l.b16 %v700
    %v2640 = vunpack.c.l.b16 %v701
    %v2641 = vunpack.c.l.b16 %v702
    %v2642 = vunpack.c.l.b16 %v703
    %v2643 = vunpack.c.l.b16 %v704
    %v2644 = vunpack.c.l.b16 %v705
    %v2645 = vunpack.c.l.b16 %v706
    %v2646 = vunpack.c.l.b16 %v707
    %v2647 = vunpack.c.l.b16 %v708
    %v2648 = vunpack.c.l.b16 %v709
    %v2649 = vunpack.c.l.b16 %v710
    %v2650 = vunpack.c.l.b16 %v711
    %v2651 = vunpack.c.l.b16 %v712
    %v2652 = vunpack.c.l.b16 %v713
    %v2653 = vunpack.c.l.b16 %v714
    %v2654 = vunpack.c.l.b16 %v715
    %v2655 = vunpack.c.l.b16 %v716
    %v2656 = vunpack.c.l.b16 %v717
    %v2657 = vunpack.c.l.b16 %v718
    %v2658 = vunpack.c.l.b16 %v719
    %v2659 = vunpack.c.l.b16 %v720
    %v2660 = vunpack.c.l.b16 %v721
    %v2661 = vunpack.c.l.b16 %v722
    %v2662 = vunpack.c.l.b16 %v723
    %v2663 = vunpack.c.l.b16 %v724
    %v2664 = vunpack.c.l.b16 %v725
    %v2665 = vunpack.c.l.b16 %v726
    %v2666 = vunpack.c.l.b16 %v727
    %v2667 = vunpack.c.l.b16 %v728
    %v2668 = vunpack.c.l.b16 %v729
    %v2669 = vunpack.c.l.b16 %v730
    %v2670 = vunpack.c.l.b16 %v731
    %v2671 = vunpack.c.l.b16 %v732
    %v2672 = vunpack.c.l.b16 %v733
    %v2673 = vunpack.c.l.b16 %v734
    %v2674 = vunpack.c.l.b16 %v735
    %v2675 = vunpack.c.l.b16 %v736
    %v2676 = vunpack.c.l.b16 %v737
    %v2677 = vunpack.c.l.b16 %v738
    %v2678 = vunpack.c.l.b16 %v739
    %v2679 = vunpack.c.l.b16 %v740
    %v2680 = vunpack.c.l.b16 %v741
    %v2681 = vunpack.c.l.b16 %v742
    %v2682 = vunpack.c.l.b16 %v743
    %v2683 = vunpack.c.l.b16 %v744
    %v2684 = vunpack.c.l.b16 %v745
    %v2685 = vunpack.c.l.b16 %v746
    %v2686 = vunpack.c.l.b16 %v747
    %v2687 = vunpack.c.l.b16 %v748
    %v2688 = vunpack.c.l.b16 %v749
    %v2689 = vunpack.c.l.b16 %v750
    %v2690 = vunpack.c.l.b16 %v751
    %v2691 = vunpack.c.l.b16 %v752
    %v2692 = vunpack.c.l.b16 %v753
    %v2693 = vunpack.c.l.b16 %v754
    %v2694 = vunpack.c.l.b16 %v755
    %v2695 = vunpack.c.l.b16 %v756
    %v2696 = vunpack.c.l.b16 %v757
    %v2697 = vunpack.c.l.b16 %v758
    %v2698 = vunpack.c.l.b16 %v759
    %v2699 = vunpack.c.l.b16 %v760
    %v2700 = vunpack.c.l.b16 %v761
    %v2701 = vunpack.c.l.b16 %v762
    %v2702 = vunpack.c.l.b16 %v763
    %v2703 = vunpack.c.l.b16 %v764
    %v2704 = vunpack.c.l.b16 %v765
    %v2705 = vunpack.c.l.b16 %v766
    %v2706 = vunpack.c.l.b16 %v767
    %v2707 = vunpack.c.l.b16 %v768
    %v2708 = vunpack.c.l.b16 %v769
    %v2709 = vunpack.c.l.b16 %v770
    %v2710 = vunpack.c.l.b16 %v771
    %v2711 = vunpack.c.l.b16 %v772
    %v2712 = vunpack.c.l.b16 %v773
    %v2713 = vunpack.c.l.b16 %v774
    %v2714 = vunpack.c.l.b16 %v775
    %v2715 = vunpack.c.l.b16 %v776
    %v2716 = vunpack.c.l.b16 %v777
    %v2717 = vunpack.c.l.b16 %v778
    %v2718 = vunpack.c.l.b16 %v779
    %v2719 = vunpack.c.l.b16 %v780
    %v2720 = vunpack.c.l.b16 %v781
    %v2721 = vunpack.c.l.b16 %v782
    %v2722 = vunpack.c.l.b16 %v783
    %v2723 = vunpack.c.l.b16 %v784
    %v2724 = vunpack.c.l.b16 %v785
    %v2725 = vunpack.c.l.b16 %v786
    %v2726 = vunpack.c.l.b16 %v787
    %v2727 = vunpack.c.l.b16 %v788
    %v2728 = vunpack.c.l.b16 %v789
    %v2729 = vunpack.c.l.b16 %v790
    %v2730 = vunpack.c.l.b16 %v791
    %v2731 = vunpack.c.l.b16 %v792
    %v2732 = vunpack.c.l.b16 %v793
    %v2733 = vunpack.c.l.b16 %v794
    %v2734 = vunpack.c.l.b16 %v795
    %v2735 = vunpack.c.l.b16 %v796
    %v2736 = vunpack.c.l.b16 %v797
    %v2737 = vunpack.c.l.b16 %v798
    %v2738 = vunpack.c.l.b16 %v799
    %v2739 = vunpack.c.l.b16 %v800
    %v2740 = vunpack.c.l.b16 %v801
    %v2741 = vunpack.c.l.b16 %v802
    %v2742 = vunpack.c.l.b16 %v803
    %v2743 = vunpack.c.l.b16 %v804
    %v2744 = vunpack.c.l.b16 %v805
    %v2745 = vunpack.c.l.b16 %v806
    %v2746 = vunpack.c.l.b16 %v807
    %v2747 = vunpack.c.l.b16 %v808
    %v2748 = vunpack.c.l.b16 %v809
    %v2749 = vunpack.c.l.b16 %v810
    %v2750 = vunpack.c.l.b16 %v811
    %v2751 = vunpack.c.l.b16 %v812
    %v2752 = vunpack.c.l.b16 %v813
    %v2753 = vunpack.c.l.b16 %v814
    %v2754 = vunpack.c.l.b16 %v815
    %v2755 = vunpack.c.l.b16 %v816
    %v2756 = vunpack.c.l.b16 %v817
    %v2757 = vunpack.c.l.b16 %v818
    %v2758 = vunpack.c.l.b16 %v819
    %v2759 = vunpack.c.l.b16 %v820
    %v2760 = vunpack.c.l.b16 %v821
    %v2761 = vunpack.c.l.b16 %v822
    %v2762 = vunpack.c.l.b16 %v823
    %v2763 = vunpack.c.l.b16 %v824
    %v2764 = vunpack.c.l.b16 %v825
    %v2765 = vunpack.c.l.b16 %v826
    %v2766 = vunpack.c.l.b16 %v827
    %v2767 = vunpack.c.l.b16 %v828
    %v2768 = vunpack.c.l.b16 %v829
    %v2769 = vunpack.c.l.b16 %v830
    %v2770 = vunpack.c.l.b16 %v831
    %v2771 = vunpack.c.l.b16 %v832
    %v2772 = vunpack.c.l.b16 %v833
    %v2773 = vunpack.c.l.b16 %v834
    %v2774 = vunpack.c.l.b16 %v835
    %v2775 = vunpack.c.l.b16 %v836
    %v2776 = vunpack.c.l.b16 %v837
    %v2777 = vunpack.c.l.b16 %v838
    %v2778 = vunpack.c.l.b16 %v839
    %v2779 = vpack.c.b16 %v1996, %v1995
    %v2780 = vpack.c.b16 %v1998, %v1997
    %v2781 = vpack.c.b16 %v2000, %v1999
    %v2782 = vpack.c.b16 %v2002, %v2001
    %v2783 = vpack.c.b16 %v2004, %v2003
    %v2784 = vpack.c.b16 %v2006, %v2005
    %v2785 = vpack.c.b16 %v2008, %v2007
    %v2786 = vpack.c.b16 %v2010, %v2009
    %v2787 = vpack.c.b16 %v2012, %v2011
    %v2788 = vpack.c.b16 %v2014, %v2013
    %v2789 = vpack.c.b16 %v2016, %v2015
    %v2790 = vpack.c.b16 %v2018, %v2017
    %v2791 = vpack.c.b16 %v2020, %v2019
    %v2792 = vpack.c.b16 %v2022, %v2021
    %v2793 = vpack.c.b16 %v2024, %v2023
    %v2794 = vpack.c.b16 %v2026, %v2025
    %v2795 = vpack.c.b16 %v2028, %v2027
    %v2796 = vpack.c.b16 %v2030, %v2029
    %v2797 = vpack.c.b16 %v2032, %v2031
    %v2798 = vpack.c.b16 %v2034, %v2033
    %v2799 = vpack.c.b16 %v2036, %v2035
    %v2800 = vpack.c.b16 %v2038, %v2037
    %v2801 = vpack.c.b16 %v2040, %v2039
    %v2802 = vpack.c.b16 %v2042, %v2041
    %v2803 = vpack.c.b16 %v2044, %v2043
    %v2804 = vpack.c.b16 %v2046, %v2045
    %v2805 = vpack.c.b16 %v2048, %v2047
    %v2806 = vpack.c.b16 %v2050, %v2049
    %v2807 = vpack.c.b16 %v2052, %v2051
    %v2808 = vpack.c.b16 %v2054, %v2053
    %v2809 = vpack.c.b16 %v2056, %v2055
    %v2810 = vpack.c.b16 %v2058, %v2057
    %v2811 = vpack.c.b16 %v2060, %v2059
    %v2812 = vpack.c.b16 %v2062, %v2061
    %v2813 = vpack.c.b16 %v2064, %v2063
    %v2814 = vpack.c.b16 %v2066, %v2065
    %v2815 = vpack.c.b16 %v2068, %v2067
    %v2816 = vpack.c.b16 %v2070, %v2069
    %v2817 = vpack.c.b16 %v2072, %v2071
    %v2818 = vpack.c.b16 %v2074, %v2073
    %v2819 = vpack.c.b16 %v2076, %v2075
    %v2820 = vpack.c.b16 %v2078, %v2077
    %v2821 = vpack.c.b16 %v2080, %v2079
    %v2822 = vpack.c.b16 %v2082, %v2081
    %v2823 = vpack.c.b16 %v2084, %v2083
    %v2824 = vpack.c.b16 %v2086, %v2085
    %v2825 = vpack.c.b16 %v2088, %v2087
    %v2826 = vpack.c.b16 %v2090, %v2089
    %v2827 = vpack.c.b16 %v2092, %v2091
    %v2828 = vpack.c.b16 %v2094, %v2093
    %v2829 = vpack.c.b16 %v2096, %v2095
    %v2830 = vpack.c.b16 %v2098, %v2097
    %v2831 = vpack.c.b16 %v2100, %v2099
    %v2832 = vpack.c.b16 %v2102, %v2101
    %v2833 = vpack.c.b16 %v2104, %v2103
    %v2834 = vpack.c.b16 %v2106, %v2105
    %v2835 = vpack.c.b16 %v2108, %v2107
    %v2836 = vpack.c.b16 %v2110, %v2109
    %v2837 = vpack.c.b16 %v2112, %v2111
    %v2838 = vpack.c.b16 %v2114, %v2113
    %v2839 = vpack.c.b16 %v2116, %v2115
    %v2840 = vpack.c.b16 %v2118, %v2117
    %v2841 = vpack.c.b16 %v2120, %v2119
    %v2842 = vpack.c.b16 %v2122, %v2121
    %v2843 = vpack.c.b16 %v2124, %v2123
    %v2844 = vpack.c.b16 %v2126, %v2125
    %v2845 = vpack.c.b16 %v2128, %v2127
    %v2846 = vpack.c.b16 %v2130, %v2129
    %v2847 = vpack.c.b16 %v2132, %v2131
    %v2848 = vpack.c.b16 %v2134, %v2133
    %v2849 = vpack.c.b16 %v2136, %v2135
    %v2850 = vpack.c.b16 %v2138, %v2137
    %v2851 = vpack.c.b16 %v2140, %v2139
    %v2852 = vpack.c.b16 %v2142, %v2141
    %v2853 = vpack.c.b16 %v2144, %v2143
    %v2854 = vpack.c.b16 %v2146, %v2145
    %v2855 = vpack.c.b16 %v2148, %v2147
    %v2856 = vpack.c.b16 %v2150, %v2149
    %v2857 = vpack.c.b16 %v2152, %v2151
    %v2858 = vpack.c.b16 %v2154, %v2153
    %v2859 = vpack.c.b16 %v2156, %v2155
    %v2860 = vpack.c.b16 %v2158, %v2157
    %v2861 = vpack.c.b16 %v2160, %v2159
    %v2862 = vpack.c.b16 %v2162, %v2161
    %v2863 = vpack.c.b16 %v2164, %v2163
    %v2864 = vpack.c.b16 %v2166, %v2165
    %v2865 = vpack.c.b16 %v2168, %v2167
    %v2866 = vpack.c.b16 %v2170, %v2169
    %v2867 = vpack.c.b16 %v2172, %v2171
    %v2868 = vpack.c.b16 %v2174, %v2173
    %v2869 = vpack.c.b16 %v2176, %v2175
    %v2870 = vpack.c.b16 %v2178, %v2177
    %v2871 = vpack.c.b16 %v2180, %v2179
    %v2872 = vpack.c.b16 %v2182, %v2181
    %v2873 = vpack.c.b16 %v2184, %v2183
    %v2874 = vpack.c.b16 %v2186, %v2185
    %v2875 = vpack.c.b16 %v2188, %v2187
    %v2876 = vpack.c.b16 %v2190, %v2189
    %v2877 = vpack.c.b16 %v2192, %v2191
    %v2878 = vpack.c.b16 %v2194, %v2193
    %v2879 = vpack.c.b16 %v2196, %v2195
    %v2880 = vpack.c.b16 %v2198, %v2197
    %v2881 = vpack.c.b16 %v2200, %v2199
    %v2882 = vpack.c.b16 %v2202, %v2201
    %v2883 = vpack.c.b16 %v2204, %v2203
    %v2884 = vpack.c.b16 %v2206, %v2205
    %v2885 = vpack.c.b16 %v2208, %v2207
    %v2886 = vpack.c.b16 %v2210, %v2209
    %v2887 = vpack.c.b16 %v2212, %v2211
    %v2888 = vpack.c.b16 %v2214, %v2213
    %v2889 = vpack.c.b16 %v2216, %v2215
    %v2890 = vpack.c.b16 %v2218, %v2217
    %v2891 = vpack.c.b16 %v2220, %v2219
    %v2892 = vpack.c.b16 %v2222, %v2221
    %v2893 = vpack.c.b16 %v2224, %v2223
    %v2894 = vpack.c.b16 %v2226, %v2225
    %v2895 = vpack.c.b16 %v2228, %v2227
    %v2896 = vpack.c.b16 %v2230, %v2229
    %v2897 = vpack.c.b16 %v2232, %v2231
    %v2898 = vpack.c.b16 %v2234, %v2233
    %v2899 = vpack.c.b16 %v2236, %v2235
    %v2900 = vpack.c.b16 %v2238, %v2237
    %v2901 = vpack.c.b16 %v2240, %v2239
    %v2902 = vpack.c.b16 %v2242, %v2241
    %v2903 = vpack.c.b16 %v2244, %v2243
    %v2904 = vpack.c.b16 %v2246, %v2245
    %v2905 = vpack.c.b16 %v2248, %v2247
    %v2906 = vpack.c.b16 %v2250, %v2249
    %v2907 = vpack.c.b16 %v2252, %v2251
    %v2908 = vpack.c.b16 %v2254, %v2253
    %v2909 = vpack.c.b16 %v2256, %v2255
    %v2910 = vpack.c.b16 %v2258, %v2257
    %v2911 = vpack.c.b16 %v2260, %v2259
    %v2912 = vpack.c.b16 %v2262, %v2261
    %v2913 = vpack.c.b16 %v2264, %v2263
    %v2914 = vpack.c.b16 %v2266, %v2265
    %v2915 = vpack.c.b16 %v2268, %v2267
    %v2916 = vpack.c.b16 %v2270, %v2269
    %v2917 = vpack.c.b16 %v2272, %v2271
    %v2918 = vpack.c.b16 %v2274, %v2273
    %v2919 = vpack.c.b16 %v2276, %v2275
    %v2920 = vpack.c.b16 %v2278, %v2277
    %v2921 = vpack.c.b16 %v2280, %v2279
    %v2922 = vpack.c.b16 %v2282, %v2281
    %v2923 = vpack.c.b16 %v2284, %v2283
    %v2924 = vpack.c.b16 %v2286, %v2285
    %v2925 = vpack.c.b16 %v2288, %v2287
    %v2926 = vpack.c.b16 %v2290, %v2289
    %v2927 = vpack.c.b16 %v2292, %v2291
    %v2928 = vpack.c.b16 %v2294, %v2293
    %v2929 = vpack.c.b16 %v2296, %v2295
    %v2930 = vpack.c.b16 %v2298, %v2297
    %v2931 = vpack.c.b16 %v2300, %v2299
    %v2932 = vpack.c.b16 %v2302, %v2301
    %v2933 = vpack.c.b16 %v2304, %v2303
    %v2934 = vpack.c.b16 %v2306, %v2305
    %v2935 = vpack.c.b16 %v2308, %v2307
    %v2936 = vpack.c.b16 %v2310, %v2309
    %v2937 = vpack.c.b16 %v2312, %v2311
    %v2938 = vpack.c.b16 %v2314, %v2313
    %v2939 = vpack.c.b16 %v2316, %v2315
    %v2940 = vpack.c.b16 %v2318, %v2317
    %v2941 = vpack.c.b16 %v2320, %v2319
    %v2942 = vpack.c.b16 %v2322, %v2321
    %v2943 = vpack.c.b16 %v2324, %v2323
    %v2944 = vpack.c.b16 %v2326, %v2325
    %v2945 = vpack.c.b16 %v2328, %v2327
    %v2946 = vpack.c.b16 %v2330, %v2329
    %v2947 = vpack.c.b16 %v2332, %v2331
    %v2948 = vpack.c.b16 %v2334, %v2333
    %v2949 = vpack.c.b16 %v2336, %v2335
    %v2950 = vpack.c.b16 %v2338, %v2337
    %v2951 = vpack.c.b16 %v2340, %v2339
    %v2952 = vpack.c.b16 %v2342, %v2341
    %v2953 = vpack.c.b16 %v2344, %v2343
    %v2954 = vpack.c.b16 %v2346, %v2345
    %v2955 = vpack.c.b16 %v2348, %v2347
    %v2956 = vpack.c.b16 %v2350, %v2349
    %v2957 = vpack.c.b16 %v2352, %v2351
    %v2958 = vpack.c.b16 %v2354, %v2353
    %v2959 = vpack.c.b16 %v2356, %v2355
    %v2960 = vpack.c.b16 %v2358, %v2357
    %v2961 = vpack.c.b16 %v2360, %v2359
    %v2962 = vpack.c.b16 %v2362, %v2361
    %v2963 = vpack.c.b16 %v2364, %v2363
    %v2964 = vpack.c.b16 %v2366, %v2365
    %v2965 = vpack.c.b16 %v2368, %v2367
    %v2966 = vpack.c.b16 %v2370, %v2369
    %v2967 = vpack.c.b16 %v2372, %v2371
    %v2968 = vpack.c.b16 %v2374, %v2373
    %v2969 = vpack.c.b16 %v2376, %v2375
    %v2970 = vpack.c.b16 %v2378, %v2377
    %v2971 = vpack.c.b16 %v2380, %v2379
    %v2972 = vpack.c.b16 %v2382, %v2381
    %v2973 = vpack.c.b16 %v2384, %v2383
    %v2974 = vpack.c.b16 %v2386, %v2385
    %v2975 = vpack.c.b16 %v2388, %v2387
    %v2976 = vpack.c.b16 %v2390, %v2389
    %v2977 = vpack.c.b16 %v2392, %v2391
    %v2978 = vpack.c.b16 %v2394, %v2393
    %v2979 = vpack.c.b16 %v2396, %v2395
    %v2980 = vpack.c.b16 %v2398, %v2397
    %v2981 = vpack.c.b16 %v2400, %v2399
    %v2982 = vpack.c.b16 %v2402, %v2401
    %v2983 = vpack.c.b16 %v2404, %v2403
    %v2984 = vpack.c.b16 %v2406, %v2405
    %v2985 = vpack.c.b16 %v2408, %v2407
    %v2986 = vpack.c.b16 %v2410, %v2409
    %v2987 = vpack.c.b16 %v2412, %v2411
    %v2988 = vpack.c.b16 %v2414, %v2413
    %v2989 = vpack.c.b16 %v2416, %v2415
    %v2990 = vpack.c.b16 %v2418, %v2417
    %v2991 = vpack.c.b16 %v2420, %v2419
    %v2992 = vpack.c.b16 %v2422, %v2421
    %v2993 = vpack.c.b16 %v2424, %v2423
    %v2994 = vpack.c.b16 %v2426, %v2425
    %v2995 = vpack.c.b16 %v2428, %v2427
    %v2996 = vpack.c.b16 %v2430, %v2429
    %v2997 = vpack.c.b16 %v2432, %v2431
    %v2998 = vpack.c.b16 %v2434, %v2433
    %v2999 = vpack.c.b16 %v2436, %v2435
    %v3000 = vpack.c.b16 %v2438, %v2437
    %v3001 = vpack.c.b16 %v2440, %v2439
    %v3002 = vpack.c.b16 %v2442, %v2441
    %v3003 = vpack.c.b16 %v2444, %v2443
    %v3004 = vpack.c.b16 %v2446, %v2445
    %v3005 = vpack.c.b16 %v2448, %v2447
    %v3006 = vpack.c.b16 %v2450, %v2449
    %v3007 = vpack.c.b16 %v2452, %v2451
    %v3008 = vpack.c.b16 %v2454, %v2453
    %v3009 = vpack.c.b16 %v2456, %v2455
    %v3010 = vpack.c.b16 %v2458, %v2457
    %v3011 = vpack.c.b16 %v2460, %v2459
    %v3012 = vpack.c.b16 %v2462, %v2461
    %v3013 = vpack.c.b16 %v2464, %v2463
    %v3014 = vpack.c.b16 %v2466, %v2465
    %v3015 = vpack.c.b16 %v2468, %v2467
    %v3016 = vpack.c.b16 %v2470, %v2469
    %v3017 = vpack.c.b16 %v2472, %v2471
    %v3018 = vpack.c.b16 %v2474, %v2473
    %v3019 = vpack.c.b16 %v2476, %v2475
    %v3020 = vpack.c.b16 %v2478, %v2477
    %v3021 = vpack.c.b16 %v2480, %v2479
    %v3022 = vpack.c.b16 %v2482, %v2481
    %v3023 = vpack.c.b16 %v2484, %v2483
    %v3024 = vpack.c.b16 %v2486, %v2485
    %v3025 = vpack.c.b16 %v2488, %v2487
    %v3026 = vpack.c.b16 %v2490, %v2489
    %v3027 = vpack.c.b16 %v2492, %v2491
    %v3028 = vpack.c.b16 %v2494, %v2493
    %v3029 = vpack.c.b16 %v2496, %v2495
    %v3030 = vpack.c.b16 %v2498, %v2497
    %v3031 = vpack.c.b16 %v2500, %v2499
    %v3032 = vpack.c.b16 %v2502, %v2501
    %v3033 = vpack.c.b16 %v2504, %v2503
    %v3034 = vpack.c.b16 %v2506, %v2505
    %v3035 = vpack.c.b16 %v2508, %v2507
    %v3036 = vpack.c.b16 %v2510, %v2509
    %v3037 = vpack.c.b16 %v2512, %v2511
    %v3038 = vpack.c.b16 %v2514, %v2513
    %v3039 = vpack.c.b16 %v2516, %v2515
    %v3040 = vpack.c.b16 %v2518, %v2517
    %v3041 = vpack.c.b16 %v2520, %v2519
    %v3042 = vpack.c.b16 %v2522, %v2521
    %v3043 = vpack.c.b16 %v2524, %v2523
    %v3044 = vpack.c.b16 %v2526, %v2525
    %v3045 = vpack.c.b16 %v2528, %v2527
    %v3046 = vpack.c.b16 %v2530, %v2529
    %v3047 = vpack.c.b16 %v2532, %v2531
    %v3048 = vpack.c.b16 %v2534, %v2533
    %v3049 = vpack.c.b16 %v2536, %v2535
    %v3050 = vpack.c.b16 %v2538, %v2537
    %v3051 = vpack.c.b16 %v2540, %v2539
    %v3052 = vpack.c.b16 %v2542, %v2541
    %v3053 = vpack.c.b16 %v2544, %v2543
    %v3054 = vpack.c.b16 %v2546, %v2545
    %v3055 = vpack.c.b16 %v2548, %v2547
    %v3056 = vpack.c.b16 %v2550, %v2549
    %v3057 = vpack.c.b16 %v2552, %v2551
    %v3058 = vpack.c.b16 %v2554, %v2553
    %v3059 = vpack.c.b16 %v2556, %v2555
    %v3060 = vpack.c.b16 %v2558, %v2557
    %v3061 = vpack.c.b16 %v2560, %v2559
    %v3062 = vpack.c.b16 %v2562, %v2561
    %v3063 = vpack.c.b16 %v2564, %v2563
    %v3064 = vpack.c.b16 %v2566, %v2565
    %v3065 = vpack.c.b16 %v2568, %v2567
    %v3066 = vpack.c.b16 %v2570, %v2569
    %v3067 = vpack.c.b16 %v2572, %v2571
    %v3068 = vpack.c.b16 %v2574, %v2573
    %v3069 = vpack.c.b16 %v2576, %v2575
    %v3070 = vpack.c.b16 %v2578, %v2577
    %v3071 = vpack.c.b16 %v2580, %v2579
    %v3072 = vpack.c.b16 %v2582, %v2581
    %v3073 = vpack.c.b16 %v2584, %v2583
    %v3074 = vpack.c.b16 %v2586, %v2585
    %v3075 = vpack.c.b16 %v2588, %v2587
    %v3076 = vpack.c.b16 %v2590, %v2589
    %v3077 = vpack.c.b16 %v2592, %v2591
    %v3078 = vpack.c.b16 %v2594, %v2593
    %v3079 = vpack.c.b16 %v2596, %v2595
    %v3080 = vpack.c.b16 %v2598, %v2597
    %v3081 = vpack.c.b16 %v2600, %v2599
    %v3082 = vpack.c.b16 %v2602, %v2601
    %v3083 = vpack.c.b16 %v2604, %v2603
    %v3084 = vpack.c.b16 %v2606, %v2605
    %v3085 = vpack.c.b16 %v2608, %v2607
    %v3086 = vpack.c.b16 %v2610, %v2609
    %v3087 = vpack.c.b16 %v2612, %v2611
    %v3088 = vpack.c.b16 %v2614, %v2613
    %v3089 = vpack.c.b16 %v2616, %v2615
    %v3090 = vpack.c.b16 %v2618, %v2617
    %v3091 = vpack.c.b16 %v2620, %v2619
    %v3092 = vpack.c.b16 %v2622, %v2621
    %v3093 = vpack.c.b16 %v2624, %v2623
    %v3094 = vpack.c.b16 %v2626, %v2625
    %v3095 = vpack.c.b16 %v2628, %v2627
    %v3096 = vpack.c.b16 %v2630, %v2629
    %v3097 = vpack.c.b16 %v2632, %v2631
    %v3098 = vpack.c.b16 %v2634, %v2633
    %v3099 = vpack.c.b16 %v2636, %v2635
    %v3100 = vpack.c.b16 %v2638, %v2637
    %v3101 = vpack.c.b16 %v2640, %v2639
    %v3102 = vpack.c.b16 %v2642, %v2641
    %v3103 = vpack.c.b16 %v2644, %v2643
    %v3104 = vpack.c.b16 %v2646, %v2645
    %v3105 = vpack.c.b16 %v2648, %v2647
    %v3106 = vpack.c.b16 %v2650, %v2649
    %v3107 = vpack.c.b16 %v2652, %v2651
    %v3108 = vpack.c.b16 %v2654, %v2653
    %v3109 = vpack.c.b16 %v2656, %v2655
    %v3110 = vpack.c.b16 %v2658, %v2657
    %v3111 = vpack.c.b16 %v2660, %v2659
    %v3112 = vpack.c.b16 %v2662, %v2661
    %v3113 = vpack.c.b16 %v2664, %v2663
    %v3114 = vpack.c.b16 %v2666, %v2665
    %v3115 = vpack.c.b16 %v2668, %v2667
    %v3116 = vpack.c.b16 %v2670, %v2669
    %v3117 = vpack.c.b16 %v2672, %v2671
    %v3118 = vpack.c.b16 %v2674, %v2673
    %v3119 = vpack.c.b16 %v2676, %v2675
    %v3120 = vpack.c.b16 %v2678, %v2677
    %v3121 = vpack.c.b16 %v2680, %v2679
    %v3122 = vpack.c.b16 %v2682, %v2681
    %v3123 = vpack.c.b16 %v2684, %v2683
    %v3124 = vpack.c.b16 %v2686, %v2685
    %v3125 = vpack.c.b16 %v2688, %v2687
    %v3126 = vpack.c.b16 %v2690, %v2689
    %v3127 = vpack.c.b16 %v2692, %v2691
    %v3128 = vpack.c.b16 %v2694, %v2693
    %v3129 = vpack.c.b16 %v2696, %v2695
    %v3130 = vpack.c.b16 %v2698, %v2697
    %v3131 = vpack.c.b16 %v2700, %v2699
    %v3132 = vpack.c.b16 %v2702, %v2701
    %v3133 = vpack.c.b16 %v2704, %v2703
    %v3134 = vpack.c.b16 %v2706, %v2705
    %v3135 = vpack.c.b16 %v2708, %v2707
    %v3136 = vpack.c.b16 %v2710, %v2709
    %v3137 = vpack.c.b16 %v2712, %v2711
    %v3138 = vpack.c.b16 %v2714, %v2713
    %v3139 = vpack.c.b16 %v2716, %v2715
    %v3140 = vpack.c.b16 %v2718, %v2717
    %v3141 = vpack.c.b16 %v2720, %v2719
    %v3142 = vpack.c.b16 %v2722, %v2721
    %v3143 = vpack.c.b16 %v2724, %v2723
    %v3144 = vpack.c.b16 %v2726, %v2725
    %v3145 = vpack.c.b16 %v2728, %v2727
    %v3146 = vpack.c.b16 %v2730, %v2729
    %v3147 = vpack.c.b16 %v2732, %v2731
    %v3148 = vpack.c.b16 %v2734, %v2733
    %v3149 = vpack.c.b16 %v2736, %v2735
    %v3150 = vpack.c.b16 %v2738, %v2737
    %v3151 = vpack.c.b16 %v2740, %v2739
    %v3152 = vpack.c.b16 %v2742, %v2741
    %v3153 = vpack.c.b16 %v2744, %v2743
    %v3154 = vpack.c.b16 %v2746, %v2745
    %v3155 = vpack.c.b16 %v2748, %v2747
    %v3156 = vpack.c.b16 %v2750, %v2749
    %v3157 = vpack.c.b16 %v2752, %v2751
    %v3158 = vpack.c.b16 %v2754, %v2753
    %v3159 = vpack.c.b16 %v2756, %v2755
    %v3160 = vpack.c.b16 %v2758, %v2757
    %v3161 = vpack.c.b16 %v2760, %v2759
    %v3162 = vpack.c.b16 %v2762, %v2761
    %v3163 = vpack.c.b16 %v2764, %v2763
    %v3164 = vpack.c.b16 %v2766, %v2765
    %v3165 = vpack.c.b16 %v2768, %v2767
    %v3166 = vpack.c.b16 %v2770, %v2769
    %v3167 = vpack.c.b16 %v2772, %v2771
    %v3168 = vpack.c.b16 %v2774, %v2773
    %v3169 = vpack.c.b16 %v2776, %v2775
    %v3170 = vpack.c.b16 %v2778, %v2777
    %3563 = vmatprep.subr.bf16.mxu0 0
    %3564 = vmatpush1.bf16.msra.mxu0 %v2779
    %3565 = vmatprep.subr.bf16.mxu0 0
    %3566 = vmatpush1.bf16.msra.mxu0 %v2780
    %3567 = vmatprep.subr.bf16.mxu0 0
    %3568 = vmatpush1.bf16.msra.mxu0 %v2781
    %3569 = vmatprep.subr.bf16.mxu0 0
    %3570 = vmatpush1.bf16.msra.mxu0 %v2782
    %3571 = vmatprep.subr.bf16.mxu0 0
    %3572 = vmatpush1.bf16.msra.mxu0 %v2783
    %3573 = vmatprep.subr.bf16.mxu0 0
    %3574 = vmatpush1.bf16.msra.mxu0 %v2784
    %3575 = vmatprep.subr.bf16.mxu0 0
    %3576 = vmatpush1.bf16.msra.mxu0 %v2785
    %3577 = vmatprep.subr.bf16.mxu0 0
    %3578 = vmatpush1.bf16.msra.mxu0 %v2786
    %3579 = vmatprep.subr.bf16.mxu0 0
    %3580 = vmatpush1.bf16.msra.mxu0 %v2787
    %3581 = vmatprep.subr.bf16.mxu0 0
    %3582 = vmatpush1.bf16.msra.mxu0 %v2788
    %3583 = vmatprep.subr.bf16.mxu0 0
    %3584 = vmatpush1.bf16.msra.mxu0 %v2789
    %3585 = vmatprep.subr.bf16.mxu0 0
    %3586 = vmatpush1.bf16.msra.mxu0 %v2790
    %3587 = vmatprep.subr.bf16.mxu0 0
    %3588 = vmatpush1.bf16.msra.mxu0 %v2791
    %3589 = vmatprep.subr.bf16.mxu0 0
    %3590 = vmatpush1.bf16.msra.mxu0 %v2792
    %3591 = vmatprep.subr.bf16.mxu0 0
    %3592 = vmatpush1.bf16.msra.mxu0 %v2793
    %3593 = vmatprep.subr.bf16.mxu0 0
    %3594 = vmatpush1.bf16.msra.mxu0 %v2794
    %3595 = vmatprep.mubr.bf16.mxu0 %v891
    %3596 = vmatmul.mubr.bf16.gmra.mrb[0].mxu0 %v877
    %v3597 = vpop.f32.mrb[0].mxu0
    %v3598 = vadd.f32 %v845, %v3597
    %v3599 = vpop.f32.mrb[0].mxu0
    %v3600 = vpop.f32.mrb[0].mxu0
    %v3601 = vpop.f32.mrb[0].mxu0
    %3602 = vdwg.mxu0
    %3603 = vmatprep.subr.bf16.mxu0 0
    %3604 = vmatpush1.bf16.msra.mxu0 %v2795
    %3605 = vmatprep.subr.bf16.mxu0 0
    %3606 = vmatpush1.bf16.msra.mxu0 %v2796
    %3607 = vmatprep.subr.bf16.mxu0 0
    %3608 = vmatpush1.bf16.msra.mxu0 %v2797
    %3609 = vmatprep.subr.bf16.mxu0 0
    %3610 = vmatpush1.bf16.msra.mxu0 %v2798
    %3611 = vmatprep.subr.bf16.mxu0 0
    %3612 = vmatpush1.bf16.msra.mxu0 %v2799
    %3613 = vmatprep.subr.bf16.mxu0 0
    %3614 = vmatpush1.bf16.msra.mxu0 %v2800
    %3615 = vmatprep.subr.bf16.mxu0 0
    %3616 = vmatpush1.bf16.msra.mxu0 %v2801
    %3617 = vmatprep.subr.bf16.mxu0 0
    %3618 = vmatpush1.bf16.msra.mxu0 %v2802
    %3619 = vmatprep.subr.bf16.mxu0 0
    %3620 = vmatpush1.bf16.msra.mxu0 %v2803
    %3621 = vmatprep.subr.bf16.mxu0 0
    %3622 = vmatpush1.bf16.msra.mxu0 %v2804
    %3623 = vmatprep.subr.bf16.mxu0 0
    %3624 = vmatpush1.bf16.msra.mxu0 %v2805
    %3625 = vmatprep.subr.bf16.mxu0 0
    %3626 = vmatpush1.bf16.msra.mxu0 %v2806
    %3627 = vmatprep.subr.bf16.mxu0 0
    %3628 = vmatpush1.bf16.msra.mxu0 %v2807
    %3629 = vmatprep.subr.bf16.mxu0 0
    %3630 = vmatpush1.bf16.msra.mxu0 %v2808
    %3631 = vmatprep.subr.bf16.mxu0 0
    %3632 = vmatpush1.bf16.msra.mxu0 %v2809
    %3633 = vmatprep.subr.bf16.mxu0 0
    %3634 = vmatpush1.bf16.msra.mxu0 %v2810
    %3635 = vmatprep.mubr.bf16.mxu0 %v901
    %3636 = vmatmul.mubr.bf16.gmra.mrb[0].mxu0 %v899
    %v3637 = vpop.f32.mrb[0].mxu0
    %v3638 = vadd.f32 %v3598, %v3637
    %v3639 = vpop.f32.mrb[0].mxu0
    %v3640 = vpop.f32.mrb[0].mxu0
    %v3641 = vpop.f32.mrb[0].mxu0
    %3642 = vdwg.mxu0
    %3643 = vmatprep.subr.bf16.mxu0 0
    %3644 = vmatpush1.bf16.msra.mxu0 %v2811
    %3645 = vmatprep.subr.bf16.mxu0 0
    %3646 = vmatpush1.bf16.msra.mxu0 %v2812
    %3647 = vmatprep.subr.bf16.mxu0 0
    %3648 = vmatpush1.bf16.msra.mxu0 %v2813
    %3649 = vmatprep.subr.bf16.mxu0 0
    %3650 = vmatpush1.bf16.msra.mxu0 %v2814
    %3651 = vmatprep.subr.bf16.mxu0 0
    %3652 = vmatpush1.bf16.msra.mxu0 %v2815
    %3653 = vmatprep.subr.bf16.mxu0 0
    %3654 = vmatpush1.bf16.msra.mxu0 %v2816
    %3655 = vmatprep.subr.bf16.mxu0 0
    %3656 = vmatpush1.bf16.msra.mxu0 %v2817
    %3657 = vmatprep.subr.bf16.mxu0 0
    %3658 = vmatpush1.bf16.msra.mxu0 %v2818
    %3659 = vmatprep.subr.bf16.mxu0 0
    %3660 = vmatpush1.bf16.msra.mxu0 %v2819
    %3661 = vmatprep.subr.bf16.mxu0 0
    %3662 = vmatpush1.bf16.msra.mxu0 %v2820
    %3663 = vmatprep.subr.bf16.mxu0 0
    %3664 = vmatpush1.bf16.msra.mxu0 %v2821
    %3665 = vmatprep.subr.bf16.mxu0 0
    %3666 = vmatpush1.bf16.msra.mxu0 %v2822
    %3667 = vmatprep.subr.bf16.mxu0 0
    %3668 = vmatpush1.bf16.msra.mxu0 %v2823
    %3669 = vmatprep.subr.bf16.mxu0 0
    %3670 = vmatpush1.bf16.msra.mxu0 %v2824
    %3671 = vmatprep.subr.bf16.mxu0 0
    %3672 = vmatpush1.bf16.msra.mxu0 %v2825
    %3673 = vmatprep.subr.bf16.mxu0 0
    %3674 = vmatpush1.bf16.msra.mxu0 %v2826
    %3675 = vmatprep.mubr.bf16.mxu0 %v898
    %3676 = vmatmul.mubr.bf16.gmra.mrb[0].mxu0 %v884
    %v3677 = vpop.f32.mrb[0].mxu0
    %v3678 = vadd.f32 %v3638, %v3677
    %v3679 = vpop.f32.mrb[0].mxu0
    %v3680 = vpop.f32.mrb[0].mxu0
    %v3681 = vpop.f32.mrb[0].mxu0
    %3682 = vdwg.mxu0
    %3683 = vmatprep.subr.bf16.mxu0 0
    %3684 = vmatpush1.bf16.msra.mxu0 %v2827
    %3685 = vmatprep.subr.bf16.mxu0 0
    %3686 = vmatpush1.bf16.msra.mxu0 %v2828
    %3687 = vmatprep.subr.bf16.mxu0 0
    %3688 = vmatpush1.bf16.msra.mxu0 %v2829
    %3689 = vmatprep.subr.bf16.mxu0 0
    %3690 = vmatpush1.bf16.msra.mxu0 %v2830
    %3691 = vmatprep.subr.bf16.mxu0 0
    %3692 = vmatpush1.bf16.msra.mxu0 %v2831
    %3693 = vmatprep.subr.bf16.mxu0 0
    %3694 = vmatpush1.bf16.msra.mxu0 %v2832
    %3695 = vmatprep.subr.bf16.mxu0 0
    %3696 = vmatpush1.bf16.msra.mxu0 %v2833
    %3697 = vmatprep.subr.bf16.mxu0 0
    %3698 = vmatpush1.bf16.msra.mxu0 %v2834
    %3699 = vmatprep.subr.bf16.mxu0 0
    %3700 = vmatpush1.bf16.msra.mxu0 %v2835
    %3701 = vmatprep.subr.bf16.mxu0 0
    %3702 = vmatpush1.bf16.msra.mxu0 %v2836
    %3703 = vmatprep.subr.bf16.mxu0 0
    %3704 = vmatpush1.bf16.msra.mxu0 %v2837
    %3705 = vmatprep.subr.bf16.mxu0 0
    %3706 = vmatpush1.bf16.msra.mxu0 %v2838
    %3707 = vmatprep.subr.bf16.mxu0 0
    %3708 = vmatpush1.bf16.msra.mxu0 %v2839
    %3709 = vmatprep.subr.bf16.mxu0 0
    %3710 = vmatpush1.bf16.msra.mxu0 %v2840
    %3711 = vmatprep.subr.bf16.mxu0 0
    %3712 = vmatpush1.bf16.msra.mxu0 %v2841
    %3713 = vmatprep.subr.bf16.mxu0 0
    %3714 = vmatpush1.bf16.msra.mxu0 %v2842
    %3715 = vmatprep.mubr.bf16.mxu0 %v902
    %3716 = vmatmul.mubr.bf16.gmra.mrb[0].mxu0 %v900
    %v3717 = vpop.f32.mrb[0].mxu0
    %v3718 = vadd.f32 %v3678, %v3717
    %v3719 = vpop.f32.mrb[0].mxu0
    %v3720 = vpop.f32.mrb[0].mxu0
    %v3721 = vpop.f32.mrb[0].mxu0
    %3722 = vdwg.mxu0
    %3723 = vmatprep.subr.bf16.mxu0 0
    %3724 = vmatpush1.bf16.msra.mxu0 %v2843
    %3725 = vmatprep.subr.bf16.mxu0 0
    %3726 = vmatpush1.bf16.msra.mxu0 %v2844
    %3727 = vmatprep.subr.bf16.mxu0 0
    %3728 = vmatpush1.bf16.msra.mxu0 %v2845
    %3729 = vmatprep.subr.bf16.mxu0 0
    %3730 = vmatpush1.bf16.msra.mxu0 %v2846
    %3731 = vmatprep.subr.bf16.mxu0 0
    %3732 = vmatpush1.bf16.msra.mxu0 %v2847
    %3733 = vmatprep.subr.bf16.mxu0 0
    %3734 = vmatpush1.bf16.msra.mxu0 %v2848
    %3735 = vmatprep.subr.bf16.mxu0 0
    %3736 = vmatpush1.bf16.msra.mxu0 %v2849
    %3737 = vmatprep.subr.bf16.mxu0 0
    %3738 = vmatpush1.bf16.msra.mxu0 %v2850
    %3739 = vmatprep.subr.bf16.mxu0 0
    %3740 = vmatpush1.bf16.msra.mxu0 %v2851
    %3741 = vmatprep.subr.bf16.mxu0 0
    %3742 = vmatpush1.bf16.msra.mxu0 %v2852
    %3743 = vmatprep.subr.bf16.mxu0 0
    %3744 = vmatpush1.bf16.msra.mxu0 %v2853
    %3745 = vmatprep.subr.bf16.mxu0 0
    %3746 = vmatpush1.bf16.msra.mxu0 %v2854
    %3747 = vmatprep.subr.bf16.mxu0 0
    %3748 = vmatpush1.bf16.msra.mxu0 %v2855
    %3749 = vmatprep.subr.bf16.mxu0 0
    %3750 = vmatpush1.bf16.msra.mxu0 %v2856
    %3751 = vmatprep.subr.bf16.mxu0 0
    %3752 = vmatpush1.bf16.msra.mxu0 %v2857
    %3753 = vmatprep.subr.bf16.mxu0 0
    %3754 = vmatpush1.bf16.msra.mxu0 %v2858
    %3755 = vmatprep.mubr.bf16.mxu0 %v940
    %3756 = vmatmul.mubr.bf16.gmra.mrb[0].mxu0 %v926
    %v3757 = vpop.f32.mrb[0].mxu0
    %v3758 = vadd.f32 %v3718, %v3757
    %v3759 = vpop.f32.mrb[0].mxu0
    %v3760 = vpop.f32.mrb[0].mxu0
    %v3761 = vpop.f32.mrb[0].mxu0
    %3762 = vdwg.mxu0
    %3763 = vmatprep.subr.bf16.mxu0 0
    %3764 = vmatpush1.bf16.msra.mxu0 %v2859
    %3765 = vmatprep.subr.bf16.mxu0 0
    %3766 = vmatpush1.bf16.msra.mxu0 %v2860
    %3767 = vmatprep.subr.bf16.mxu0 0
    %3768 = vmatpush1.bf16.msra.mxu0 %v2861
    %3769 = vmatprep.subr.bf16.mxu0 0
    %3770 = vmatpush1.bf16.msra.mxu0 %v2862
    %3771 = vmatprep.subr.bf16.mxu0 0
    %3772 = vmatpush1.bf16.msra.mxu0 %v2863
    %3773 = vmatprep.subr.bf16.mxu0 0
    %3774 = vmatpush1.bf16.msra.mxu0 %v2864
    %3775 = vmatprep.subr.bf16.mxu0 0
    %3776 = vmatpush1.bf16.msra.mxu0 %v2865
    %3777 = vmatprep.subr.bf16.mxu0 0
    %3778 = vmatpush1.bf16.msra.mxu0 %v2866
    %3779 = vmatprep.subr.bf16.mxu0 0
    %3780 = vmatpush1.bf16.msra.mxu0 %v2867
    %3781 = vmatprep.subr.bf16.mxu0 0
    %3782 = vmatpush1.bf16.msra.mxu0 %v2868
    %3783 = vmatprep.subr.bf16.mxu0 0
    %3784 = vmatpush1.bf16.msra.mxu0 %v2869
    %3785 = vmatprep.subr.bf16.mxu0 0
    %3786 = vmatpush1.bf16.msra.mxu0 %v2870
    %3787 = vmatprep.subr.bf16.mxu0 0
    %3788 = vmatpush1.bf16.msra.mxu0 %v2871
    %3789 = vmatprep.subr.bf16.mxu0 0
    %3790 = vmatpush1.bf16.msra.mxu0 %v2872
    %3791 = vmatprep.subr.bf16.mxu0 0
    %3792 = vmatpush1.bf16.msra.mxu0 %v2873
    %3793 = vmatprep.subr.bf16.mxu0 0
    %3794 = vmatpush1.bf16.msra.mxu0 %v2874
    %3795 = vmatprep.mubr.bf16.mxu0 %v950
    %3796 = vmatmul.mubr.bf16.gmra.mrb[0].mxu0 %v948
    %v3797 = vpop.f32.mrb[0].mxu0
    %v3798 = vadd.f32 %v3758, %v3797
    %v3799 = vpop.f32.mrb[0].mxu0
    %v3800 = vpop.f32.mrb[0].mxu0
    %v3801 = vpop.f32.mrb[0].mxu0
    %3802 = vdwg.mxu0
    %3803 = vmatprep.subr.bf16.mxu0 0
    %3804 = vmatpush1.bf16.msra.mxu0 %v2875
    %3805 = vmatprep.subr.bf16.mxu0 0
    %3806 = vmatpush1.bf16.msra.mxu0 %v2876
    %3807 = vmatprep.subr.bf16.mxu0 0
    %3808 = vmatpush1.bf16.msra.mxu0 %v2877
    %3809 = vmatprep.subr.bf16.mxu0 0
    %3810 = vmatpush1.bf16.msra.mxu0 %v2878
    %3811 = vmatprep.subr.bf16.mxu0 0
    %3812 = vmatpush1.bf16.msra.mxu0 %v2879
    %3813 = vmatprep.subr.bf16.mxu0 0
    %3814 = vmatpush1.bf16.msra.mxu0 %v2880
    %3815 = vmatprep.subr.bf16.mxu0 0
    %3816 = vmatpush1.bf16.msra.mxu0 %v2881
    %3817 = vmatprep.subr.bf16.mxu0 0
    %3818 = vmatpush1.bf16.msra.mxu0 %v2882
    %3819 = vmatprep.subr.bf16.mxu0 0
    %3820 = vmatpush1.bf16.msra.mxu0 %v2883
    %3821 = vmatprep.subr.bf16.mxu0 0
    %3822 = vmatpush1.bf16.msra.mxu0 %v2884
    %3823 = vmatprep.subr.bf16.mxu0 0
    %3824 = vmatpush1.bf16.msra.mxu0 %v2885
    %3825 = vmatprep.subr.bf16.mxu0 0
    %3826 = vmatpush1.bf16.msra.mxu0 %v2886
    %3827 = vmatprep.subr.bf16.mxu0 0
    %3828 = vmatpush1.bf16.msra.mxu0 %v2887
    %3829 = vmatprep.subr.bf16.mxu0 0
    %3830 = vmatpush1.bf16.msra.mxu0 %v2888
    %3831 = vmatprep.subr.bf16.mxu0 0
    %3832 = vmatpush1.bf16.msra.mxu0 %v2889
    %3833 = vmatprep.subr.bf16.mxu0 0
    %3834 = vmatpush1.bf16.msra.mxu0 %v2890
    %3835 = vmatprep.mubr.bf16.mxu0 %v947
    %3836 = vmatmul.mubr.bf16.gmra.mrb[0].mxu0 %v933
    %v3837 = vpop.f32.mrb[0].mxu0
    %v3838 = vadd.f32 %v3798, %v3837
    %v3839 = vpop.f32.mrb[0].mxu0
    %v3840 = vpop.f32.mrb[0].mxu0
    %v3841 = vpop.f32.mrb[0].mxu0
    %3842 = vdwg.mxu0
    %3843 = vmatprep.subr.bf16.mxu0 0
    %3844 = vmatpush1.bf16.msra.mxu0 %v2891
    %3845 = vmatprep.subr.bf16.mxu0 0
    %3846 = vmatpush1.bf16.msra.mxu0 %v2892
    %3847 = vmatprep.subr.bf16.mxu0 0
    %3848 = vmatpush1.bf16.msra.mxu0 %v2893
    %3849 = vmatprep.subr.bf16.mxu0 0
    %3850 = vmatpush1.bf16.msra.mxu0 %v2894
    %3851 = vmatprep.subr.bf16.mxu0 0
    %3852 = vmatpush1.bf16.msra.mxu0 %v2895
    %3853 = vmatprep.subr.bf16.mxu0 0
    %3854 = vmatpush1.bf16.msra.mxu0 %v2896
    %3855 = vmatprep.subr.bf16.mxu0 0
    %3856 = vmatpush1.bf16.msra.mxu0 %v2897
    %3857 = vmatprep.subr.bf16.mxu0 0
    %3858 = vmatpush1.bf16.msra.mxu0 %v2898
    %3859 = vmatprep.subr.bf16.mxu0 0
    %3860 = vmatpush1.bf16.msra.mxu0 %v2899
    %3861 = vmatprep.subr.bf16.mxu0 0
    %3862 = vmatpush1.bf16.msra.mxu0 %v2900
    %3863 = vmatprep.subr.bf16.mxu0 0
    %3864 = vmatpush1.bf16.msra.mxu0 %v2901
    %3865 = vmatprep.subr.bf16.mxu0 0
    %3866 = vmatpush1.bf16.msra.mxu0 %v2902
    %3867 = vmatprep.subr.bf16.mxu0 0
    %3868 = vmatpush1.bf16.msra.mxu0 %v2903
    %3869 = vmatprep.subr.bf16.mxu0 0
    %3870 = vmatpush1.bf16.msra.mxu0 %v2904
    %3871 = vmatprep.subr.bf16.mxu0 0
    %3872 = vmatpush1.bf16.msra.mxu0 %v2905
    %3873 = vmatprep.subr.bf16.mxu0 0
    %3874 = vmatpush1.bf16.msra.mxu0 %v2906
    %3875 = vmatprep.mubr.bf16.mxu0 %v951
    %3876 = vmatmul.mubr.bf16.gmra.mrb[0].mxu0 %v949
    %v3877 = vpop.f32.mrb[0].mxu0
    %v3878 = vadd.f32 %v3838, %v3877
    %v3879 = vpop.f32.mrb[0].mxu0
    %v3880 = vpop.f32.mrb[0].mxu0
    %v3881 = vpop.f32.mrb[0].mxu0
    %3882 = vdwg.mxu0
    %3883 = vmatprep.subr.bf16.mxu0 0
    %3884 = vmatpush1.bf16.msra.mxu0 %v2907
    %3885 = vmatprep.subr.bf16.mxu0 0
    %3886 = vmatpush1.bf16.msra.mxu0 %v2908
    %3887 = vmatprep.subr.bf16.mxu0 0
    %3888 = vmatpush1.bf16.msra.mxu0 %v2909
    %3889 = vmatprep.subr.bf16.mxu0 0
    %3890 = vmatpush1.bf16.msra.mxu0 %v2910
    %3891 = vmatprep.subr.bf16.mxu0 0
    %3892 = vmatpush1.bf16.msra.mxu0 %v2911
    %3893 = vmatprep.subr.bf16.mxu0 0
    %3894 = vmatpush1.bf16.msra.mxu0 %v2912
    %3895 = vmatprep.subr.bf16.mxu0 0
    %3896 = vmatpush1.bf16.msra.mxu0 %v2913
    %3897 = vmatprep.subr.bf16.mxu0 0
    %3898 = vmatpush1.bf16.msra.mxu0 %v2914
    %3899 = vmatprep.subr.bf16.mxu0 0
    %3900 = vmatpush1.bf16.msra.mxu0 %v2915
    %3901 = vmatprep.subr.bf16.mxu0 0
    %3902 = vmatpush1.bf16.msra.mxu0 %v2916
    %3903 = vmatprep.subr.bf16.mxu0 0
    %3904 = vmatpush1.bf16.msra.mxu0 %v2917
    %3905 = vmatprep.subr.bf16.mxu0 0
    %3906 = vmatpush1.bf16.msra.mxu0 %v2918
    %3907 = vmatprep.subr.bf16.mxu0 0
    %3908 = vmatpush1.bf16.msra.mxu0 %v2919
    %3909 = vmatprep.subr.bf16.mxu0 0
    %3910 = vmatpush1.bf16.msra.mxu0 %v2920
    %3911 = vmatprep.subr.bf16.mxu0 0
    %3912 = vmatpush1.bf16.msra.mxu0 %v2921
    %3913 = vmatprep.subr.bf16.mxu0 0
    %3914 = vmatpush1.bf16.msra.mxu0 %v2922
    %3915 = vmatprep.mubr.bf16.mxu0 %v989
    %3916 = vmatmul.mubr.bf16.gmra.mrb[0].mxu0 %v975
    %v3917 = vpop.f32.mrb[0].mxu0
    %v3918 = vadd.f32 %v3878, %v3917
    %v3919 = vpop.f32.mrb[0].mxu0
    %v3920 = vpop.f32.mrb[0].mxu0
    %v3921 = vpop.f32.mrb[0].mxu0
    %3922 = vdwg.mxu0
    %3923 = vmatprep.subr.bf16.mxu0 0
    %3924 = vmatpush1.bf16.msra.mxu0 %v2923
    %3925 = vmatprep.subr.bf16.mxu0 0
    %3926 = vmatpush1.bf16.msra.mxu0 %v2924
    %3927 = vmatprep.subr.bf16.mxu0 0
    %3928 = vmatpush1.bf16.msra.mxu0 %v2925
    %3929 = vmatprep.subr.bf16.mxu0 0
    %3930 = vmatpush1.bf16.msra.mxu0 %v2926
    %3931 = vmatprep.subr.bf16.mxu0 0
    %3932 = vmatpush1.bf16.msra.mxu0 %v2927
    %3933 = vmatprep.subr.bf16.mxu0 0
    %3934 = vmatpush1.bf16.msra.mxu0 %v2928
    %3935 = vmatprep.subr.bf16.mxu0 0
    %3936 = vmatpush1.bf16.msra.mxu0 %v2929
    %3937 = vmatprep.subr.bf16.mxu0 0
    %3938 = vmatpush1.bf16.msra.mxu0 %v2930
    %3939 = vmatprep.subr.bf16.mxu0 0
    %3940 = vmatpush1.bf16.msra.mxu0 %v2931
    %3941 = vmatprep.subr.bf16.mxu0 0
    %3942 = vmatpush1.bf16.msra.mxu0 %v2932
    %3943 = vmatprep.subr.bf16.mxu0 0
    %3944 = vmatpush1.bf16.msra.mxu0 %v2933
    %3945 = vmatprep.subr.bf16.mxu0 0
    %3946 = vmatpush1.bf16.msra.mxu0 %v2934
    %3947 = vmatprep.subr.bf16.mxu0 0
    %3948 = vmatpush1.bf16.msra.mxu0 %v2935
    %3949 = vmatprep.subr.bf16.mxu0 0
    %3950 = vmatpush1.bf16.msra.mxu0 %v2936
    %3951 = vmatprep.subr.bf16.mxu0 0
    %3952 = vmatpush1.bf16.msra.mxu0 %v2937
    %3953 = vmatprep.subr.bf16.mxu0 0
    %3954 = vmatpush1.bf16.msra.mxu0 %v2938
    %3955 = vmatprep.mubr.bf16.mxu0 %v999
    %3956 = vmatmul.mubr.bf16.gmra.mrb[0].mxu0 %v997
    %v3957 = vpop.f32.mrb[0].mxu0
    %v3958 = vadd.f32 %v3918, %v3957
    %v3959 = vpop.f32.mrb[0].mxu0
    %v3960 = vpop.f32.mrb[0].mxu0
    %v3961 = vpop.f32.mrb[0].mxu0
    %3962 = vdwg.mxu0
    %3963 = vmatprep.subr.bf16.mxu0 0
    %3964 = vmatpush1.bf16.msra.mxu0 %v2939
    %3965 = vmatprep.subr.bf16.mxu0 0
    %3966 = vmatpush1.bf16.msra.mxu0 %v2940
    %3967 = vmatprep.subr.bf16.mxu0 0
    %3968 = vmatpush1.bf16.msra.mxu0 %v2941
    %3969 = vmatprep.subr.bf16.mxu0 0
    %3970 = vmatpush1.bf16.msra.mxu0 %v2942
    %3971 = vmatprep.subr.bf16.mxu0 0
    %3972 = vmatpush1.bf16.msra.mxu0 %v2943
    %3973 = vmatprep.subr.bf16.mxu0 0
    %3974 = vmatpush1.bf16.msra.mxu0 %v2944
    %3975 = vmatprep.subr.bf16.mxu0 0
    %3976 = vmatpush1.bf16.msra.mxu0 %v2945
    %3977 = vmatprep.subr.bf16.mxu0 0
    %3978 = vmatpush1.bf16.msra.mxu0 %v2946
    %3979 = vmatprep.subr.bf16.mxu0 0
    %3980 = vmatpush1.bf16.msra.mxu0 %v2947
    %3981 = vmatprep.subr.bf16.mxu0 0
    %3982 = vmatpush1.bf16.msra.mxu0 %v2948
    %3983 = vmatprep.subr.bf16.mxu0 0
    %3984 = vmatpush1.bf16.msra.mxu0 %v2949
    %3985 = vmatprep.subr.bf16.mxu0 0
    %3986 = vmatpush1.bf16.msra.mxu0 %v2950
    %3987 = vmatprep.subr.bf16.mxu0 0
    %3988 = vmatpush1.bf16.msra.mxu0 %v2951
    %3989 = vmatprep.subr.bf16.mxu0 0
    %3990 = vmatpush1.bf16.msra.mxu0 %v2952
    %3991 = vmatprep.subr.bf16.mxu0 0
    %3992 = vmatpush1.bf16.msra.mxu0 %v2953
    %3993 = vmatprep.subr.bf16.mxu0 0
    %3994 = vmatpush1.bf16.msra.mxu0 %v2954
    %3995 = vmatprep.mubr.bf16.mxu0 %v996
    %3996 = vmatmul.mubr.bf16.gmra.mrb[0].mxu0 %v982
    %v3997 = vpop.f32.mrb[0].mxu0
    %v3998 = vadd.f32 %v3958, %v3997
    %v3999 = vpop.f32.mrb[0].mxu0
    %v4000 = vpop.f32.mrb[0].mxu0
    %v4001 = vpop.f32.mrb[0].mxu0
    %4002 = vdwg.mxu0
    %4003 = vmatprep.subr.bf16.mxu0 0
    %4004 = vmatpush1.bf16.msra.mxu0 %v2955
    %4005 = vmatprep.subr.bf16.mxu0 0
    %4006 = vmatpush1.bf16.msra.mxu0 %v2956
    %4007 = vmatprep.subr.bf16.mxu0 0
    %4008 = vmatpush1.bf16.msra.mxu0 %v2957
    %4009 = vmatprep.subr.bf16.mxu0 0
    %4010 = vmatpush1.bf16.msra.mxu0 %v2958
    %4011 = vmatprep.subr.bf16.mxu0 0
    %4012 = vmatpush1.bf16.msra.mxu0 %v2959
    %4013 = vmatprep.subr.bf16.mxu0 0
    %4014 = vmatpush1.bf16.msra.mxu0 %v2960
    %4015 = vmatprep.subr.bf16.mxu0 0
    %4016 = vmatpush1.bf16.msra.mxu0 %v2961
    %4017 = vmatprep.subr.bf16.mxu0 0
    %4018 = vmatpush1.bf16.msra.mxu0 %v2962
    %4019 = vmatprep.subr.bf16.mxu0 0
    %4020 = vmatpush1.bf16.msra.mxu0 %v2963
    %4021 = vmatprep.subr.bf16.mxu0 0
    %4022 = vmatpush1.bf16.msra.mxu0 %v2964
    %4023 = vmatprep.subr.bf16.mxu0 0
    %4024 = vmatpush1.bf16.msra.mxu0 %v2965
    %4025 = vmatprep.subr.bf16.mxu0 0
    %4026 = vmatpush1.bf16.msra.mxu0 %v2966
    %4027 = vmatprep.subr.bf16.mxu0 0
    %4028 = vmatpush1.bf16.msra.mxu0 %v2967
    %4029 = vmatprep.subr.bf16.mxu0 0
    %4030 = vmatpush1.bf16.msra.mxu0 %v2968
    %4031 = vmatprep.subr.bf16.mxu0 0
    %4032 = vmatpush1.bf16.msra.mxu0 %v2969
    %4033 = vmatprep.subr.bf16.mxu0 0
    %4034 = vmatpush1.bf16.msra.mxu0 %v2970
    %4035 = vmatprep.mubr.bf16.mxu0 %v1000
    %4036 = vmatmul.mubr.bf16.gmra.mrb[0].mxu0 %v998
    %v4037 = vpop.f32.mrb[0].mxu0
    %v4038 = vadd.f32 %v3998, %v4037
    %v4039 = vpop.f32.mrb[0].mxu0
    %v4040 = vpop.f32.mrb[0].mxu0
    %v4041 = vpop.f32.mrb[0].mxu0
    %4042 = vdwg.mxu0
    %4043 = vmatprep.subr.bf16.mxu0 0
    %4044 = vmatpush1.bf16.msra.mxu0 %v2971
    %4045 = vmatprep.subr.bf16.mxu0 0
    %4046 = vmatpush1.bf16.msra.mxu0 %v2972
    %4047 = vmatprep.subr.bf16.mxu0 0
    %4048 = vmatpush1.bf16.msra.mxu0 %v2973
    %4049 = vmatprep.subr.bf16.mxu0 0
    %4050 = vmatpush1.bf16.msra.mxu0 %v2974
    %4051 = vmatprep.subr.bf16.mxu0 0
    %4052 = vmatpush1.bf16.msra.mxu0 %v2975
    %4053 = vmatprep.subr.bf16.mxu0 0
    %4054 = vmatpush1.bf16.msra.mxu0 %v2976
    %4055 = vmatprep.subr.bf16.mxu0 0
    %4056 = vmatpush1.bf16.msra.mxu0 %v2977
    %4057 = vmatprep.subr.bf16.mxu0 0
    %4058 = vmatpush1.bf16.msra.mxu0 %v2978
    %4059 = vmatprep.subr.bf16.mxu0 0
    %4060 = vmatpush1.bf16.msra.mxu0 %v2979
    %4061 = vmatprep.subr.bf16.mxu0 0
    %4062 = vmatpush1.bf16.msra.mxu0 %v2980
    %4063 = vmatprep.subr.bf16.mxu0 0
    %4064 = vmatpush1.bf16.msra.mxu0 %v2981
    %4065 = vmatprep.subr.bf16.mxu0 0
    %4066 = vmatpush1.bf16.msra.mxu0 %v2982
    %4067 = vmatprep.subr.bf16.mxu0 0
    %4068 = vmatpush1.bf16.msra.mxu0 %v2983
    %4069 = vmatprep.subr.bf16.mxu0 0
    %4070 = vmatpush1.bf16.msra.mxu0 %v2984
    %4071 = vmatprep.subr.bf16.mxu0 0
    %4072 = vmatpush1.bf16.msra.mxu0 %v2985
    %4073 = vmatprep.subr.bf16.mxu0 0
    %4074 = vmatpush1.bf16.msra.mxu0 %v2986
    %4075 = vmatprep.mubr.bf16.mxu0 %v1038
    %4076 = vmatmul.mubr.bf16.gmra.mrb[0].mxu0 %v1024
    %v4077 = vpop.f32.mrb[0].mxu0
    %v4078 = vadd.f32 %v4038, %v4077
    %v4079 = vpop.f32.mrb[0].mxu0
    %v4080 = vpop.f32.mrb[0].mxu0
    %v4081 = vpop.f32.mrb[0].mxu0
    %4082 = vdwg.mxu0
    %4083 = vmatprep.subr.bf16.mxu0 0
    %4084 = vmatpush1.bf16.msra.mxu0 %v2987
    %4085 = vmatprep.subr.bf16.mxu0 0
    %4086 = vmatpush1.bf16.msra.mxu0 %v2988
    %4087 = vmatprep.subr.bf16.mxu0 0
    %4088 = vmatpush1.bf16.msra.mxu0 %v2989
    %4089 = vmatprep.subr.bf16.mxu0 0
    %4090 = vmatpush1.bf16.msra.mxu0 %v2990
    %4091 = vmatprep.subr.bf16.mxu0 0
    %4092 = vmatpush1.bf16.msra.mxu0 %v2991
    %4093 = vmatprep.subr.bf16.mxu0 0
    %4094 = vmatpush1.bf16.msra.mxu0 %v2992
    %4095 = vmatprep.subr.bf16.mxu0 0
    %4096 = vmatpush1.bf16.msra.mxu0 %v2993
    %4097 = vmatprep.subr.bf16.mxu0 0
    %4098 = vmatpush1.bf16.msra.mxu0 %v2994
    %4099 = vmatprep.subr.bf16.mxu0 0
    %4100 = vmatpush1.bf16.msra.mxu0 %v2995
    %4101 = vmatprep.subr.bf16.mxu0 0
    %4102 = vmatpush1.bf16.msra.mxu0 %v2996
    %4103 = vmatprep.subr.bf16.mxu0 0
    %4104 = vmatpush1.bf16.msra.mxu0 %v2997
    %4105 = vmatprep.subr.bf16.mxu0 0
    %4106 = vmatpush1.bf16.msra.mxu0 %v2998
    %4107 = vmatprep.subr.bf16.mxu0 0
    %4108 = vmatpush1.bf16.msra.mxu0 %v2999
    %4109 = vmatprep.subr.bf16.mxu0 0
    %4110 = vmatpush1.bf16.msra.mxu0 %v3000
    %4111 = vmatprep.subr.bf16.mxu0 0
    %4112 = vmatpush1.bf16.msra.mxu0 %v3001
    %4113 = vmatprep.subr.bf16.mxu0 0
    %4114 = vmatpush1.bf16.msra.mxu0 %v3002
    %4115 = vmatprep.mubr.bf16.mxu0 %v1048
    %4116 = vmatmul.mubr.bf16.gmra.mrb[0].mxu0 %v1046
    %v4117 = vpop.f32.mrb[0].mxu0
    %v4118 = vadd.f32 %v4078, %v4117
    %v4119 = vpop.f32.mrb[0].mxu0
    %v4120 = vpop.f32.mrb[0].mxu0
    %v4121 = vpop.f32.mrb[0].mxu0
    %4122 = vdwg.mxu0
    %4123 = vmatprep.subr.bf16.mxu0 0
    %4124 = vmatpush1.bf16.msra.mxu0 %v3003
    %4125 = vmatprep.subr.bf16.mxu0 0
    %4126 = vmatpush1.bf16.msra.mxu0 %v3004
    %4127 = vmatprep.subr.bf16.mxu0 0
    %4128 = vmatpush1.bf16.msra.mxu0 %v3005
    %4129 = vmatprep.subr.bf16.mxu0 0
    %4130 = vmatpush1.bf16.msra.mxu0 %v3006
    %4131 = vmatprep.subr.bf16.mxu0 0
    %4132 = vmatpush1.bf16.msra.mxu0 %v3007
    %4133 = vmatprep.subr.bf16.mxu0 0
    %4134 = vmatpush1.bf16.msra.mxu0 %v3008
    %4135 = vmatprep.subr.bf16.mxu0 0
    %4136 = vmatpush1.bf16.msra.mxu0 %v3009
    %4137 = vmatprep.subr.bf16.mxu0 0
    %4138 = vmatpush1.bf16.msra.mxu0 %v3010
    %4139 = vmatprep.subr.bf16.mxu0 0
    %4140 = vmatpush1.bf16.msra.mxu0 %v3011
    %4141 = vmatprep.subr.bf16.mxu0 0
    %4142 = vmatpush1.bf16.msra.mxu0 %v3012
    %4143 = vmatprep.subr.bf16.mxu0 0
    %4144 = vmatpush1.bf16.msra.mxu0 %v3013
    %4145 = vmatprep.subr.bf16.mxu0 0
    %4146 = vmatpush1.bf16.msra.mxu0 %v3014
    %4147 = vmatprep.subr.bf16.mxu0 0
    %4148 = vmatpush1.bf16.msra.mxu0 %v3015
    %4149 = vmatprep.subr.bf16.mxu0 0
    %4150 = vmatpush1.bf16.msra.mxu0 %v3016
    %4151 = vmatprep.subr.bf16.mxu0 0
    %4152 = vmatpush1.bf16.msra.mxu0 %v3017
    %4153 = vmatprep.subr.bf16.mxu0 0
    %4154 = vmatpush1.bf16.msra.mxu0 %v3018
    %4155 = vmatprep.mubr.bf16.mxu0 %v1045
    %4156 = vmatmul.mubr.bf16.gmra.mrb[0].mxu0 %v1031
    %v4157 = vpop.f32.mrb[0].mxu0
    %v4158 = vadd.f32 %v4118, %v4157
    %v4159 = vpop.f32.mrb[0].mxu0
    %v4160 = vpop.f32.mrb[0].mxu0
    %v4161 = vpop.f32.mrb[0].mxu0
    %4162 = vdwg.mxu0
    %4163 = vmatprep.subr.bf16.mxu0 0
    %4164 = vmatpush1.bf16.msra.mxu0 %v3019
    %4165 = vmatprep.subr.bf16.mxu0 0
    %4166 = vmatpush1.bf16.msra.mxu0 %v3020
    %4167 = vmatprep.subr.bf16.mxu0 0
    %4168 = vmatpush1.bf16.msra.mxu0 %v3021
    %4169 = vmatprep.subr.bf16.mxu0 0
    %4170 = vmatpush1.bf16.msra.mxu0 %v3022
    %4171 = vmatprep.subr.bf16.mxu0 0
    %4172 = vmatpush1.bf16.msra.mxu0 %v3023
    %4173 = vmatprep.subr.bf16.mxu0 0
    %4174 = vmatpush1.bf16.msra.mxu0 %v3024
    %4175 = vmatprep.subr.bf16.mxu0 0
    %4176 = vmatpush1.bf16.msra.mxu0 %v3025
    %4177 = vmatprep.subr.bf16.mxu0 0
    %4178 = vmatpush1.bf16.msra.mxu0 %v3026
    %4179 = vmatprep.subr.bf16.mxu0 0
    %4180 = vmatpush1.bf16.msra.mxu0 %v3027
    %4181 = vmatprep.subr.bf16.mxu0 0
    %4182 = vmatpush1.bf16.msra.mxu0 %v3028
    %4183 = vmatprep.subr.bf16.mxu0 0
    %4184 = vmatpush1.bf16.msra.mxu0 %v3029
    %4185 = vmatprep.subr.bf16.mxu0 0
    %4186 = vmatpush1.bf16.msra.mxu0 %v3030
    %4187 = vmatprep.subr.bf16.mxu0 0
    %4188 = vmatpush1.bf16.msra.mxu0 %v3031
    %4189 = vmatprep.subr.bf16.mxu0 0
    %4190 = vmatpush1.bf16.msra.mxu0 %v3032
    %4191 = vmatprep.subr.bf16.mxu0 0
    %4192 = vmatpush1.bf16.msra.mxu0 %v3033
    %4193 = vmatprep.subr.bf16.mxu0 0
    %4194 = vmatpush1.bf16.msra.mxu0 %v3034
    %4195 = vmatprep.mubr.bf16.mxu0 %v1049
    %4196 = vmatmul.mubr.bf16.gmra.mrb[0].mxu0 %v1047
    %v4197 = vpop.f32.mrb[0].mxu0
    %v4198 = vadd.f32 %v4158, %v4197
    %v4199 = vpop.f32.mrb[0].mxu0
    %v4200 = vpop.f32.mrb[0].mxu0
    %v4201 = vpop.f32.mrb[0].mxu0
    %4202 = vdwg.mxu0
    %4203 = vmatprep.subr.bf16.mxu0 0
    %4204 = vmatpush1.bf16.msra.mxu0 %v3035
    %4205 = vmatprep.subr.bf16.mxu0 0
    %4206 = vmatpush1.bf16.msra.mxu0 %v3036
    %4207 = vmatprep.subr.bf16.mxu0 0
    %4208 = vmatpush1.bf16.msra.mxu0 %v3037
    %4209 = vmatprep.subr.bf16.mxu0 0
    %4210 = vmatpush1.bf16.msra.mxu0 %v3038
    %4211 = vmatprep.subr.bf16.mxu0 0
    %4212 = vmatpush1.bf16.msra.mxu0 %v3039
    %4213 = vmatprep.subr.bf16.mxu0 0
    %4214 = vmatpush1.bf16.msra.mxu0 %v3040
    %4215 = vmatprep.subr.bf16.mxu0 0
    %4216 = vmatpush1.bf16.msra.mxu0 %v3041
    %4217 = vmatprep.subr.bf16.mxu0 0
    %4218 = vmatpush1.bf16.msra.mxu0 %v3042
    %4219 = vmatprep.subr.bf16.mxu0 0
    %4220 = vmatpush1.bf16.msra.mxu0 %v3043
    %4221 = vmatprep.subr.bf16.mxu0 0
    %4222 = vmatpush1.bf16.msra.mxu0 %v3044
    %4223 = vmatprep.subr.bf16.mxu0 0
    %4224 = vmatpush1.bf16.msra.mxu0 %v3045
    %4225 = vmatprep.subr.bf16.mxu0 0
    %4226 = vmatpush1.bf16.msra.mxu0 %v3046
    %4227 = vmatprep.subr.bf16.mxu0 0
    %4228 = vmatpush1.bf16.msra.mxu0 %v3047
    %4229 = vmatprep.subr.bf16.mxu0 0
    %4230 = vmatpush1.bf16.msra.mxu0 %v3048
    %4231 = vmatprep.subr.bf16.mxu0 0
    %4232 = vmatpush1.bf16.msra.mxu0 %v3049
    %4233 = vmatprep.subr.bf16.mxu0 0
    %4234 = vmatpush1.bf16.msra.mxu0 %v3050
    %4235 = vmatprep.mubr.bf16.mxu0 %v1087
    %4236 = vmatmul.mubr.bf16.gmra.mrb[0].mxu0 %v1073
    %v4237 = vpop.f32.mrb[0].mxu0
    %v4238 = vadd.f32 %v4198, %v4237
    %v4239 = vpop.f32.mrb[0].mxu0
    %v4240 = vpop.f32.mrb[0].mxu0
    %v4241 = vpop.f32.mrb[0].mxu0
    %4242 = vdwg.mxu0
    %4243 = vmatprep.subr.bf16.mxu0 0
    %4244 = vmatpush1.bf16.msra.mxu0 %v3051
    %4245 = vmatprep.subr.bf16.mxu0 0
    %4246 = vmatpush1.bf16.msra.mxu0 %v3052
    %4247 = vmatprep.subr.bf16.mxu0 0
    %4248 = vmatpush1.bf16.msra.mxu0 %v3053
    %4249 = vmatprep.subr.bf16.mxu0 0
    %4250 = vmatpush1.bf16.msra.mxu0 %v3054
    %4251 = vmatprep.subr.bf16.mxu0 0
    %4252 = vmatpush1.bf16.msra.mxu0 %v3055
    %4253 = vmatprep.subr.bf16.mxu0 0
    %4254 = vmatpush1.bf16.msra.mxu0 %v3056
    %4255 = vmatprep.subr.bf16.mxu0 0
    %4256 = vmatpush1.bf16.msra.mxu0 %v3057
    %4257 = vmatprep.subr.bf16.mxu0 0
    %4258 = vmatpush1.bf16.msra.mxu0 %v3058
    %4259 = vmatprep.subr.bf16.mxu0 0
    %4260 = vmatpush1.bf16.msra.mxu0 %v3059
    %4261 = vmatprep.subr.bf16.mxu0 0
    %4262 = vmatpush1.bf16.msra.mxu0 %v3060
    %4263 = vmatprep.subr.bf16.mxu0 0
    %4264 = vmatpush1.bf16.msra.mxu0 %v3061
    %4265 = vmatprep.subr.bf16.mxu0 0
    %4266 = vmatpush1.bf16.msra.mxu0 %v3062
    %4267 = vmatprep.subr.bf16.mxu0 0
    %4268 = vmatpush1.bf16.msra.mxu0 %v3063
    %4269 = vmatprep.subr.bf16.mxu0 0
    %4270 = vmatpush1.bf16.msra.mxu0 %v3064
    %4271 = vmatprep.subr.bf16.mxu0 0
    %4272 = vmatpush1.bf16.msra.mxu0 %v3065
    %4273 = vmatprep.subr.bf16.mxu0 0
    %4274 = vmatpush1.bf16.msra.mxu0 %v3066
    %4275 = vmatprep.mubr.bf16.mxu0 %v1097
    %4276 = vmatmul.mubr.bf16.gmra.mrb[0].mxu0 %v1095
    %v4277 = vpop.f32.mrb[0].mxu0
    %v4278 = vadd.f32 %v4238, %v4277
    %v4279 = vpop.f32.mrb[0].mxu0
    %v4280 = vpop.f32.mrb[0].mxu0
    %v4281 = vpop.f32.mrb[0].mxu0
    %4282 = vdwg.mxu0
    %4283 = vmatprep.subr.bf16.mxu0 0
    %4284 = vmatpush1.bf16.msra.mxu0 %v3067
    %4285 = vmatprep.subr.bf16.mxu0 0
    %4286 = vmatpush1.bf16.msra.mxu0 %v3068
    %4287 = vmatprep.subr.bf16.mxu0 0
    %4288 = vmatpush1.bf16.msra.mxu0 %v3069
    %4289 = vmatprep.subr.bf16.mxu0 0
    %4290 = vmatpush1.bf16.msra.mxu0 %v3070
    %4291 = vmatprep.subr.bf16.mxu0 0
    %4292 = vmatpush1.bf16.msra.mxu0 %v3071
    %4293 = vmatprep.subr.bf16.mxu0 0
    %4294 = vmatpush1.bf16.msra.mxu0 %v3072
    %4295 = vmatprep.subr.bf16.mxu0 0
    %4296 = vmatpush1.bf16.msra.mxu0 %v3073
    %4297 = vmatprep.subr.bf16.mxu0 0
    %4298 = vmatpush1.bf16.msra.mxu0 %v3074
    %4299 = vmatprep.subr.bf16.mxu0 0
    %4300 = vmatpush1.bf16.msra.mxu0 %v3075
    %4301 = vmatprep.subr.bf16.mxu0 0
    %4302 = vmatpush1.bf16.msra.mxu0 %v3076
    %4303 = vmatprep.subr.bf16.mxu0 0
    %4304 = vmatpush1.bf16.msra.mxu0 %v3077
    %4305 = vmatprep.subr.bf16.mxu0 0
    %4306 = vmatpush1.bf16.msra.mxu0 %v3078
    %4307 = vmatprep.subr.bf16.mxu0 0
    %4308 = vmatpush1.bf16.msra.mxu0 %v3079
    %4309 = vmatprep.subr.bf16.mxu0 0
    %4310 = vmatpush1.bf16.msra.mxu0 %v3080
    %4311 = vmatprep.subr.bf16.mxu0 0
    %4312 = vmatpush1.bf16.msra.mxu0 %v3081
    %4313 = vmatprep.subr.bf16.mxu0 0
    %4314 = vmatpush1.bf16.msra.mxu0 %v3082
    %4315 = vmatprep.mubr.bf16.mxu0 %v1094
    %4316 = vmatmul.mubr.bf16.gmra.mrb[0].mxu0 %v1080
    %v4317 = vpop.f32.mrb[0].mxu0
    %v4318 = vadd.f32 %v4278, %v4317
    %v4319 = vpop.f32.mrb[0].mxu0
    %v4320 = vpop.f32.mrb[0].mxu0
    %v4321 = vpop.f32.mrb[0].mxu0
    %4322 = vdwg.mxu0
    %4323 = vmatprep.subr.bf16.mxu0 0
    %4324 = vmatpush1.bf16.msra.mxu0 %v3083
    %4325 = vmatprep.subr.bf16.mxu0 0
    %4326 = vmatpush1.bf16.msra.mxu0 %v3084
    %4327 = vmatprep.subr.bf16.mxu0 0
    %4328 = vmatpush1.bf16.msra.mxu0 %v3085
    %4329 = vmatprep.subr.bf16.mxu0 0
    %4330 = vmatpush1.bf16.msra.mxu0 %v3086
    %4331 = vmatprep.subr.bf16.mxu0 0
    %4332 = vmatpush1.bf16.msra.mxu0 %v3087
    %4333 = vmatprep.subr.bf16.mxu0 0
    %4334 = vmatpush1.bf16.msra.mxu0 %v3088
    %4335 = vmatprep.subr.bf16.mxu0 0
    %4336 = vmatpush1.bf16.msra.mxu0 %v3089
    %4337 = vmatprep.subr.bf16.mxu0 0
    %4338 = vmatpush1.bf16.msra.mxu0 %v3090
    %4339 = vmatprep.subr.bf16.mxu0 0
    %4340 = vmatpush1.bf16.msra.mxu0 %v3091
    %4341 = vmatprep.subr.bf16.mxu0 0
    %4342 = vmatpush1.bf16.msra.mxu0 %v3092
    %4343 = vmatprep.subr.bf16.mxu0 0
    %4344 = vmatpush1.bf16.msra.mxu0 %v3093
    %4345 = vmatprep.subr.bf16.mxu0 0
    %4346 = vmatpush1.bf16.msra.mxu0 %v3094
    %4347 = vmatprep.subr.bf16.mxu0 0
    %4348 = vmatpush1.bf16.msra.mxu0 %v3095
    %4349 = vmatprep.subr.bf16.mxu0 0
    %4350 = vmatpush1.bf16.msra.mxu0 %v3096
    %4351 = vmatprep.subr.bf16.mxu0 0
    %4352 = vmatpush1.bf16.msra.mxu0 %v3097
    %4353 = vmatprep.subr.bf16.mxu0 0
    %4354 = vmatpush1.bf16.msra.mxu0 %v3098
    %4355 = vmatprep.mubr.bf16.mxu0 %v1098
    %4356 = vmatmul.mubr.bf16.gmra.mrb[0].mxu0 %v1096
    %v4357 = vpop.f32.mrb[0].mxu0
    %v4358 = vadd.f32 %v4318, %v4357
    %v4359 = vpop.f32.mrb[0].mxu0
    %v4360 = vpop.f32.mrb[0].mxu0
    %v4361 = vpop.f32.mrb[0].mxu0
    %4362 = vdwg.mxu0
    %4363 = vmatprep.subr.bf16.mxu0 0
    %4364 = vmatpush1.bf16.msra.mxu0 %v3099
    %4365 = vmatprep.subr.bf16.mxu0 0
    %4366 = vmatpush1.bf16.msra.mxu0 %v3100
    %4367 = vmatprep.subr.bf16.mxu0 0
    %4368 = vmatpush1.bf16.msra.mxu0 %v3101
    %4369 = vmatprep.subr.bf16.mxu0 0
    %4370 = vmatpush1.bf16.msra.mxu0 %v3102
    %4371 = vmatprep.subr.bf16.mxu0 0
    %4372 = vmatpush1.bf16.msra.mxu0 %v3103
    %4373 = vmatprep.subr.bf16.mxu0 0
    %4374 = vmatpush1.bf16.msra.mxu0 %v3104
    %4375 = vmatprep.subr.bf16.mxu0 0
    %4376 = vmatpush1.bf16.msra.mxu0 %v3105
    %4377 = vmatprep.subr.bf16.mxu0 0
    %4378 = vmatpush1.bf16.msra.mxu0 %v3106
    %4379 = vmatprep.subr.bf16.mxu0 0
    %4380 = vmatpush1.bf16.msra.mxu0 %v3107
    %4381 = vmatprep.subr.bf16.mxu0 0
    %4382 = vmatpush1.bf16.msra.mxu0 %v3108
    %4383 = vmatprep.subr.bf16.mxu0 0
    %4384 = vmatpush1.bf16.msra.mxu0 %v3109
    %4385 = vmatprep.subr.bf16.mxu0 0
    %4386 = vmatpush1.bf16.msra.mxu0 %v3110
    %4387 = vmatprep.subr.bf16.mxu0 0
    %4388 = vmatpush1.bf16.msra.mxu0 %v3111
    %4389 = vmatprep.subr.bf16.mxu0 0
    %4390 = vmatpush1.bf16.msra.mxu0 %v3112
    %4391 = vmatprep.subr.bf16.mxu0 0
    %4392 = vmatpush1.bf16.msra.mxu0 %v3113
    %4393 = vmatprep.subr.bf16.mxu0 0
    %4394 = vmatpush1.bf16.msra.mxu0 %v3114
    %4395 = vmatprep.mubr.bf16.mxu0 %v1136
    %4396 = vmatmul.mubr.bf16.gmra.mrb[0].mxu0 %v1122
    %v4397 = vpop.f32.mrb[0].mxu0
    %v4398 = vadd.f32 %v4358, %v4397
    %v4399 = vpop.f32.mrb[0].mxu0
    %v4400 = vpop.f32.mrb[0].mxu0
    %v4401 = vpop.f32.mrb[0].mxu0
    %4402 = vdwg.mxu0
    %4403 = vmatprep.subr.bf16.mxu0 0
    %4404 = vmatpush1.bf16.msra.mxu0 %v3115
    %4405 = vmatprep.subr.bf16.mxu0 0
    %4406 = vmatpush1.bf16.msra.mxu0 %v3116
    %4407 = vmatprep.subr.bf16.mxu0 0
    %4408 = vmatpush1.bf16.msra.mxu0 %v3117
    %4409 = vmatprep.subr.bf16.mxu0 0
    %4410 = vmatpush1.bf16.msra.mxu0 %v3118
    %4411 = vmatprep.subr.bf16.mxu0 0
    %4412 = vmatpush1.bf16.msra.mxu0 %v3119
    %4413 = vmatprep.subr.bf16.mxu0 0
    %4414 = vmatpush1.bf16.msra.mxu0 %v3120
    %4415 = vmatprep.subr.bf16.mxu0 0
    %4416 = vmatpush1.bf16.msra.mxu0 %v3121
    %4417 = vmatprep.subr.bf16.mxu0 0
    %4418 = vmatpush1.bf16.msra.mxu0 %v3122
    %4419 = vmatprep.subr.bf16.mxu0 0
    %4420 = vmatpush1.bf16.msra.mxu0 %v3123
    %4421 = vmatprep.subr.bf16.mxu0 0
    %4422 = vmatpush1.bf16.msra.mxu0 %v3124
    %4423 = vmatprep.subr.bf16.mxu0 0
    %4424 = vmatpush1.bf16.msra.mxu0 %v3125
    %4425 = vmatprep.subr.bf16.mxu0 0
    %4426 = vmatpush1.bf16.msra.mxu0 %v3126
    %4427 = vmatprep.subr.bf16.mxu0 0
    %4428 = vmatpush1.bf16.msra.mxu0 %v3127
    %4429 = vmatprep.subr.bf16.mxu0 0
    %4430 = vmatpush1.bf16.msra.mxu0 %v3128
    %4431 = vmatprep.subr.bf16.mxu0 0
    %4432 = vmatpush1.bf16.msra.mxu0 %v3129
    %4433 = vmatprep.subr.bf16.mxu0 0
    %4434 = vmatpush1.bf16.msra.mxu0 %v3130
    %4435 = vmatprep.mubr.bf16.mxu0 %v1146
    %4436 = vmatmul.mubr.bf16.gmra.mrb[0].mxu0 %v1144
    %v4437 = vpop.f32.mrb[0].mxu0
    %v4438 = vadd.f32 %v4398, %v4437
    %v4439 = vpop.f32.mrb[0].mxu0
    %v4440 = vpop.f32.mrb[0].mxu0
    %v4441 = vpop.f32.mrb[0].mxu0
    %4442 = vdwg.mxu0
    %4443 = vmatprep.subr.bf16.mxu0 0
    %4444 = vmatpush1.bf16.msra.mxu0 %v3131
    %4445 = vmatprep.subr.bf16.mxu0 0
    %4446 = vmatpush1.bf16.msra.mxu0 %v3132
    %4447 = vmatprep.subr.bf16.mxu0 0
    %4448 = vmatpush1.bf16.msra.mxu0 %v3133
    %4449 = vmatprep.subr.bf16.mxu0 0
    %4450 = vmatpush1.bf16.msra.mxu0 %v3134
    %4451 = vmatprep.subr.bf16.mxu0 0
    %4452 = vmatpush1.bf16.msra.mxu0 %v3135
    %4453 = vmatprep.subr.bf16.mxu0 0
    %4454 = vmatpush1.bf16.msra.mxu0 %v3136
    %4455 = vmatprep.subr.bf16.mxu0 0
    %4456 = vmatpush1.bf16.msra.mxu0 %v3137
    %4457 = vmatprep.subr.bf16.mxu0 0
    %4458 = vmatpush1.bf16.msra.mxu0 %v3138
    %4459 = vmatprep.subr.bf16.mxu0 0
    %4460 = vmatpush1.bf16.msra.mxu0 %v3139
    %4461 = vmatprep.subr.bf16.mxu0 0
    %4462 = vmatpush1.bf16.msra.mxu0 %v3140
    %4463 = vmatprep.subr.bf16.mxu0 0
    %4464 = vmatpush1.bf16.msra.mxu0 %v3141
    %4465 = vmatprep.subr.bf16.mxu0 0
    %4466 = vmatpush1.bf16.msra.mxu0 %v3142
    %4467 = vmatprep.subr.bf16.mxu0 0
    %4468 = vmatpush1.bf16.msra.mxu0 %v3143
    %4469 = vmatprep.subr.bf16.mxu0 0
    %4470 = vmatpush1.bf16.msra.mxu0 %v3144
    %4471 = vmatprep.subr.bf16.mxu0 0
    %4472 = vmatpush1.bf16.msra.mxu0 %v3145
    %4473 = vmatprep.subr.bf16.mxu0 0
    %4474 = vmatpush1.bf16.msra.mxu0 %v3146
    %4475 = vmatprep.mubr.bf16.mxu0 %v1143
    %4476 = vmatmul.mubr.bf16.gmra.mrb[0].mxu0 %v1129
    %v4477 = vpop.f32.mrb[0].mxu0
    %v4478 = vadd.f32 %v4438, %v4477
    %v4479 = vpop.f32.mrb[0].mxu0
    %v4480 = vpop.f32.mrb[0].mxu0
    %v4481 = vpop.f32.mrb[0].mxu0
    %4482 = vdwg.mxu0
    %4483 = vmatprep.subr.bf16.mxu0 0
    %4484 = vmatpush1.bf16.msra.mxu0 %v3147
    %4485 = vmatprep.subr.bf16.mxu0 0
    %4486 = vmatpush1.bf16.msra.mxu0 %v3148
    %4487 = vmatprep.subr.bf16.mxu0 0
    %4488 = vmatpush1.bf16.msra.mxu0 %v3149
    %4489 = vmatprep.subr.bf16.mxu0 0
    %4490 = vmatpush1.bf16.msra.mxu0 %v3150
    %4491 = vmatprep.subr.bf16.mxu0 0
    %4492 = vmatpush1.bf16.msra.mxu0 %v3151
    %4493 = vmatprep.subr.bf16.mxu0 0
    %4494 = vmatpush1.bf16.msra.mxu0 %v3152
    %4495 = vmatprep.subr.bf16.mxu0 0
    %4496 = vmatpush1.bf16.msra.mxu0 %v3153
    %4497 = vmatprep.subr.bf16.mxu0 0
    %4498 = vmatpush1.bf16.msra.mxu0 %v3154
    %4499 = vmatprep.subr.bf16.mxu0 0
    %4500 = vmatpush1.bf16.msra.mxu0 %v3155
    %4501 = vmatprep.subr.bf16.mxu0 0
    %4502 = vmatpush1.bf16.msra.mxu0 %v3156
    %4503 = vmatprep.subr.bf16.mxu0 0
    %4504 = vmatpush1.bf16.msra.mxu0 %v3157
    %4505 = vmatprep.subr.bf16.mxu0 0
    %4506 = vmatpush1.bf16.msra.mxu0 %v3158
    %4507 = vmatprep.subr.bf16.mxu0 0
    %4508 = vmatpush1.bf16.msra.mxu0 %v3159
    %4509 = vmatprep.subr.bf16.mxu0 0
    %4510 = vmatpush1.bf16.msra.mxu0 %v3160
    %4511 = vmatprep.subr.bf16.mxu0 0
    %4512 = vmatpush1.bf16.msra.mxu0 %v3161
    %4513 = vmatprep.subr.bf16.mxu0 0
    %4514 = vmatpush1.bf16.msra.mxu0 %v3162
    %4515 = vmatprep.mubr.bf16.mxu0 %v1147
    %4516 = vmatmul.mubr.bf16.gmra.mrb[0].mxu0 %v1145
    %v4517 = vpop.f32.mrb[0].mxu0
    %v4518 = vadd.f32 %v4478, %v4517
    %v4519 = vpop.f32.mrb[0].mxu0
    %v4520 = vpop.f32.mrb[0].mxu0
    %v4521 = vpop.f32.mrb[0].mxu0
    %4522 = vdwg.mxu0
    %4523 = vmatprep.subr.bf16.mxu0 0
    %4524 = vmatpush1.bf16.msra.mxu0 %v3163
    %4525 = vmatprep.subr.bf16.mxu0 0
    %4526 = vmatpush1.bf16.msra.mxu0 %v3164
    %4527 = vmatprep.subr.bf16.mxu0 0
    %4528 = vmatpush1.bf16.msra.mxu0 %v3165
    %4529 = vmatprep.subr.bf16.mxu0 0
    %4530 = vmatpush1.bf16.msra.mxu0 %v3166
    %4531 = vmatprep.subr.bf16.mxu0 0
    %4532 = vmatpush1.bf16.msra.mxu0 %v3167
    %4533 = vmatprep.subr.bf16.mxu0 0
    %4534 = vmatpush1.bf16.msra.mxu0 %v3168
    %4535 = vmatprep.subr.bf16.mxu0 0
    %4536 = vmatpush1.bf16.msra.mxu0 %v3169
    %4537 = vmatprep.subr.bf16.mxu0 0
    %4538 = vmatpush1.bf16.msra.mxu0 %v3170
    %4539 = vmatprep.subr.bf16.mxu0 0
    %4540 = vmatpush1.bf16.msra.mxu0 0
    %4541 = vmatprep.subr.bf16.mxu0 0
    %4542 = vmatpush1.bf16.msra.mxu0 0
    %4543 = vmatprep.subr.bf16.mxu0 0
    %4544 = vmatpush1.bf16.msra.mxu0 0
    %4545 = vmatprep.subr.bf16.mxu0 0
    %4546 = vmatpush1.bf16.msra.mxu0 0
    %4547 = vmatprep.subr.bf16.mxu0 0
    %4548 = vmatpush1.bf16.msra.mxu0 0
    %4549 = vmatprep.subr.bf16.mxu0 0
    %4550 = vmatpush1.bf16.msra.mxu0 0
    %4551 = vmatprep.subr.bf16.mxu0 0
    %4552 = vmatpush1.bf16.msra.mxu0 0
    %4553 = vmatprep.subr.bf16.mxu0 0
    %4554 = vmatpush1.bf16.msra.mxu0 0
    %4555 = vmatprep.mubr.bf16.mxu0 0
    %4556 = vmatmul.mubr.bf16.gmra.mrb[0].mxu0 %v1161
    %v4557 = vpop.f32.mrb[0].mxu0
    %v4558 = vadd.f32 %v4518, %v4557
    %v4559 = vpop.f32.mrb[0].mxu0
    %v4560 = vpop.f32.mrb[0].mxu0
    %v4561 = vpop.f32.mrb[0].mxu0
    %4562 = vdwg.mxu0
    %v4563 = vmax.f32 %v4558, 0.0
    %v4564 = vld [vmem:[%s3] sm:$0xff]
    %v4565 = vld [vmem:[%s3 + $0x8] sm:$0xff]
    %v4566 = vld [vmem:[%s3 + $0x10] sm:$0xff]
    %v4567 = vld [vmem:[%s3 + $0x18] sm:$0xff]
    %v4568 = vld [vmem:[%s3 + $0x20] sm:$0xff]
    %v4569 = vld [vmem:[%s3 + $0x28] sm:$0xff]
    %v4570 = vld [vmem:[%s3 + $0x30] sm:$0xff]
    %v4571 = vld [vmem:[%s3 + $0x38] sm:$0xff]
    %v4572 = vld [vmem:[%s3 + $0x40] sm:$0xff]
    %v4573 = vld [vmem:[%s3 + $0x48] sm:$0xff]
    %v4574 = vld [vmem:[%s3 + $0x50] sm:$0xff]
    %v4575 = vld [vmem:[%s3 + $0x58] sm:$0xff]
    %v4576 = vld [vmem:[%s3 + $0x60] sm:$0xff]
    %v4577 = vld [vmem:[%s3 + $0x68] sm:$0xff]
    %v4578 = vld [vmem:[%s3 + $0x70] sm:$0xff]
    %v4579 = vld [vmem:[%s3 + $0x78] sm:$0xff]
    %v4580 = vld [vmem:[#allocation2] sm:$0x1]
    %v4582 = vlaneseq
    %v4583 = vshrl.u32 %v4582, 7
    %v4584 = vsub.s32 0, %v4583
    %v4585 = vrot.slane %v4580, %v4584
    %4587 = vmatprep.subr.mxu0 0.0
    %4588 = vmatpush1.msra.mxu0 %v4564
    %4589 = vmatprep.subr.mxu0 0.0
    %4590 = vmatpush1.msra.mxu0 %v4565
    %4591 = vmatprep.subr.mxu0 0.0
    %4592 = vmatpush1.msra.mxu0 %v4566
    %4593 = vmatprep.subr.mxu0 0.0
    %4594 = vmatpush1.msra.mxu0 %v4567
    %4595 = vmatprep.subr.mxu0 0.0
    %4596 = vmatpush1.msra.mxu0 %v4568
    %4597 = vmatprep.subr.mxu0 0.0
    %4598 = vmatpush1.msra.mxu0 %v4569
    %4599 = vmatprep.subr.mxu0 0.0
    %4600 = vmatpush1.msra.mxu0 %v4570
    %4601 = vmatprep.subr.mxu0 0.0
    %4602 = vmatpush1.msra.mxu0 %v4571
    %4603 = vmatprep.subr.mxu0 0.0
    %4604 = vmatpush1.msra.mxu0 %v4572
    %4605 = vmatprep.subr.mxu0 0.0
    %4606 = vmatpush1.msra.mxu0 %v4573
    %4607 = vmatprep.subr.mxu0 0.0
    %4608 = vmatpush1.msra.mxu0 %v4574
    %4609 = vmatprep.subr.mxu0 0.0
    %4610 = vmatpush1.msra.mxu0 %v4575
    %4611 = vmatprep.subr.mxu0 0.0
    %4612 = vmatpush1.msra.mxu0 %v4576
    %4613 = vmatprep.subr.mxu0 0.0
    %4614 = vmatpush1.msra.mxu0 %v4577
    %4615 = vmatprep.subr.mxu0 0.0
    %4616 = vmatpush1.msra.mxu0 %v4578
    %4617 = vmatprep.subr.mxu0 0.0
    %4618 = vmatpush1.msra.mxu0 %v4579
    %4619 = vmatprep.subr.mxu0 0.0
    %4620 = vmatpush1.msra.mxu0 0.0
    %4621 = vmatprep.subr.mxu0 0.0
    %4622 = vmatpush1.msra.mxu0 0.0
    %4623 = vmatprep.subr.mxu0 0.0
    %4624 = vmatpush1.msra.mxu0 0.0
    %4625 = vmatprep.subr.mxu0 0.0
    %4626 = vmatpush1.msra.mxu0 0.0
    %4627 = vmatprep.subr.mxu0 0.0
    %4628 = vmatpush1.msra.mxu0 0.0
    %4629 = vmatprep.subr.mxu0 0.0
    %4630 = vmatpush1.msra.mxu0 0.0
    %4631 = vmatprep.subr.mxu0 0.0
    %4632 = vmatpush1.msra.mxu0 0.0
    %4633 = vmatprep.subr.mxu0 0.0
    %4634 = vmatpush1.msra.mxu0 0.0
    %4635 = vmatprep.subr.mxu0 0.0
    %4636 = vmatpush1.msra.mxu0 0.0
    %4637 = vmatprep.subr.mxu0 0.0
    %4638 = vmatpush1.msra.mxu0 0.0
    %4639 = vmatprep.subr.mxu0 0.0
    %4640 = vmatpush1.msra.mxu0 0.0
    %4641 = vmatprep.subr.mxu0 0.0
    %4642 = vmatpush1.msra.mxu0 0.0
    %4643 = vmatprep.subr.mxu0 0.0
    %4644 = vmatpush1.msra.mxu0 0.0
    %4645 = vmatprep.subr.mxu0 0.0
    %4646 = vmatpush1.msra.mxu0 0.0
    %4647 = vmatprep.subr.mxu0 0.0
    %4648 = vmatpush1.msra.mxu0 0.0
    %4649 = vmatprep.subr.mxu0 0.0
    %4650 = vmatpush1.msra.mxu0 0.0
    %4651 = vmatprep.mubr.f32.mxu0 0.0
    %4652 = vmatmul.mubr.f32.gmra.mrb[0].mxu0 %v4563
    %v4653 = vpop.f32.mrb[0].mxu0
    %v4654 = vadd.f32 %v4585, %v4653
    %v4655 = vpop.f32.mrb[0].mxu0
    %4656 = vdwg.mxu0
    %v4657 = vmul.f32 %v4654, 0.5
    %v4658 = vtanh.pop %v4657
    %v4659 = vadd.f32 %v4658, 1.0
    %v4660 = vmul.f32 %v4659, 0.5
    %vm4661 = vcmask 1024
    %4662 = vst.msk [vmem:[%s5] sm:$0x3] %vm4661, %v4660
    // Predicated region
    $region30: #{temp_speech_classifier.3} parent=1 // pred_check
      _
    $region31: #{temp_speech_classifier.3} parent=1 // pred_check_branch
      %4664 = sbr.rel (0) target = $region33
    $region32: #{temp_speech_classifier.3} parent=1 // pred_region
      _
    $region33: #{temp_speech_classifier.3} parent=1 // pred_fallthru
      _
    // Predicated region
    $region34: #{temp_speech_classifier.3} parent=1 // pred_check
      _
    $region35: #{temp_speech_classifier.3} parent=1 // pred_check_branch
      %4666 = sbr.rel (0) target = $region37
    $region36: #{temp_speech_classifier.3} parent=1 // pred_region
      _
    $region37: #{temp_speech_classifier.3} parent=1 // pred_fallthru
      _
    %4667 = vsyncpa [#allocation4], 1
    %4668 = vsyncpa [#allocation6], 1

</llo_original>
